<compile_context>
chip_gen: v5e
topology: v5e:2x2
jax: 0.10.0
libtpu: 0.0.40
codegen_flags: <defaults>
</compile_context>

<pallas_src>
import functools

import jax
import jax.numpy as jnp
from jax import lax
from jax.experimental import pallas as pl
from jax.experimental.pallas import tpu as pltpu

EPS = 1e-5  # nn.LayerNorm default


def _layernorm_1pass(v, gamma, beta):
    # One-pass LayerNorm: var = E[v^2] - mu^2 (half the XLU reductions of two-pass).
    mu = jnp.mean(v, axis=-1, keepdims=True)
    ms = jnp.mean(v * v, axis=-1, keepdims=True)
    var = jnp.maximum(ms - mu * mu, 0.0)
    return (v - mu) * lax.rsqrt(var + EPS) * gamma + beta


def _gelu_exact(z):
    # PyTorch nn.GELU default = exact erf-based GELU.
    return 0.5 * z * (1.0 + lax.erf(z / jnp.sqrt(2.0).astype(z.dtype)))


# --------------------------------------------------------------------------- #
# Kernel (all `layers` applications fused; weights stay resident in VMEM)
# --------------------------------------------------------------------------- #
def fnet_kernel(x_ref, cs_ref, ss_ref, cdsd_ref, g_ref, be_ref,
                w1_ref, b1_ref, w2_ref, b2_ref, o_ref, *, layers):
    Bt, S, D = x_ref.shape
    H = w1_ref.shape[1]
    M = Bt * S

    # Hoist loop-invariant operands once (JAX does not CSE broadcast_in_dim).
    gamma = g_ref[...]                                    # (1, D) f32
    beta = be_ref[...]                                    # (1, D) f32
    b1 = b1_ref[...]                                      # (1, H) f32
    b2 = b2_ref[...]                                      # (1, D) f32
    cdsd = cdsd_ref[...]                                  # (D, 2D) bf16 = [Cd | Sd]
    w1 = w1_ref[...]                                      # (D, H)  bf16
    w2 = w2_ref[...]                                      # (H, D)  bf16
    csb = jnp.broadcast_to(cs_ref[...], (Bt, S, S))       # (Bt,S,S) bf16
    ssb = jnp.broadcast_to(ss_ref[...], (Bt, S, S))       # (Bt,S,S) bf16

    def layer_body(_, x):                                 # x: (Bt, S, D) f32
        x2d = x.reshape(M, D)                             # fold batch rows into matmul M

        # ---- D-axis DFT, batch-folded, fused cos/sin:  [X@Cd | X@Sd]
        xcs = jnp.dot(x2d.astype(jnp.bfloat16), cdsd,
                      preferred_element_type=jnp.float32)             # (M, 2D) f32
        xcs = xcs.reshape(Bt, S, 2 * D)
        xc = xcs[:, :, :D].astype(jnp.bfloat16)           # lane-aligned slices (D % 128 == 0)
        xs = xcs[:, :, D:].astype(jnp.bfloat16)

        # ---- S-axis mixing as batched MXU contractions (no row concatenates):
        #      Re(FFT2(X)) = Cs @ (X Cd) - Ss @ (X Sd)
        fft_real = (jnp.einsum('bsk,bkd->bsd', csb, xc,
                               preferred_element_type=jnp.float32)
                    - jnp.einsum('bsk,bkd->bsd', ssb, xs,
                                 preferred_element_type=jnp.float32))  # (Bt,S,D) f32

        # ---- LayerNorm(fft + residual), f32
        h = _layernorm_1pass(fft_real.reshape(M, D) + x2d, gamma, beta)

        # ---- feed-forward: Linear -> GELU -> (dropout=id) -> Linear -> (dropout=id)
        z = jnp.dot(h.astype(jnp.bfloat16), w1,
                    preferred_element_type=jnp.float32) + b1           # (M, H)
        z = _gelu_exact(z)
        y = jnp.dot(z.astype(jnp.bfloat16), w2,
                    preferred_element_type=jnp.float32) + b2           # (M, D)

        # ---- LayerNorm(ff + ORIGINAL residual)   (exactly as in the torch forward)
        out = _layernorm_1pass(y + x2d, gamma, beta)
        return out.reshape(Bt, S, D)

    x_val = x_ref[...]
    if layers <= 4:                       # short stacks: static unroll (LLO visibility)
        for i in range(layers):
            x_val = layer_body(i, x_val)
        out = x_val
    else:                                 # deep stacks: bounded live ranges
        out = lax.fori_loop(0, layers, layer_body, x_val)
    o_ref[...] = out.astype(o_ref.dtype)


# --------------------------------------------------------------------------- #
# Generation-aware tuning helpers
# --------------------------------------------------------------------------- #
def _tpu_profile():
    """Return (vmem_budget_bytes, two_tensorcores)."""
    try:
        cap = int(pltpu.get_tpu_info().vmem_capacity_bytes)
    except Exception:                       # query unavailable -> conservative default
        cap = 64 << 20
    budget = max(32 << 20, int(cap * 0.85))     # leave headroom for Mosaic scratch
    two_tc = cap < (96 << 20)                   # v7x: 64 MiB/TC & 2 TCs; v5e/v6e: 128 MiB & 1 TC
    return budget, two_tc


def _block_vmem_bytes(Bt, S, D, H):
    """Rough per-grid-step VMEM footprint estimate (with headroom)."""
    bf, f4 = 2, 4
    weights = (2 * S * S + 2 * D * D + 2 * D * H) * bf + (3 * D + H) * f4   # single-buffered
    io = 2 * 2 * Bt * S * D * f4                    # double-buffered x / out blocks
    M = Bt * S
    interm = (M * 2 * D * (f4 + bf)                 # xcs f32 + xc/xs bf16
              + 2 * Bt * S * S * bf                 # broadcast Cs / Ss
              + M * (4 * D + H) * f4)               # fft / h / y / out + GELU intermediate
    return weights + io + 2 * interm                # ~2x headroom for compiler temporaries


def _pick_batch_block(B, S, D, H, budget, two_tc):
    """Largest Bt (dividing B) that fits the VMEM budget; on 2-TC chips keep >=2
    parallel grid steps, on single-TC chips take one maximal block (maximize M=Bt*S)."""
    max_bt = max(1, B // 2) if (two_tc and B >= 2) else B
    best = 1
    for bt in range(1, B + 1):
        if B % bt == 0 and bt <= max_bt and _block_vmem_bytes(bt, S, D, H) <= budget:
            best = bt
    return best


# --------------------------------------------------------------------------- #
# Wrapper
# --------------------------------------------------------------------------- #
def _fnet_pallas_call(B, S, D, H, dtype, Bt, layers, vmem_limit, single_buffer_weights):
    def inv(shape):                                  # grid-invariant operand spec
        idx = lambda b, _n=len(shape): (0,) * _n
        if single_buffer_weights:
            return pl.BlockSpec(shape, idx, pipeline_mode=pl.Buffered(1))
        return pl.BlockSpec(shape, idx)

    grid_spec = pltpu.PrefetchScalarGridSpec(
        num_scalar_prefetch=0,
        grid=(B // Bt,),
        in_specs=[
            pl.BlockSpec((Bt, S, D), lambda b: (b, 0, 0)),   # x (pipelined)
            inv((S, S)),          # Cs           bf16
            inv((S, S)),          # Ss           bf16
            inv((D, 2 * D)),      # [Cd | Sd]    bf16
            inv((1, D)),          # gamma        f32
            inv((1, D)),          # beta         f32
            inv((D, H)),          # W1 (in,out)  bf16
            inv((1, H)),          # b1           f32
            inv((H, D)),          # W2 (in,out)  bf16
            inv((1, D)),          # b2           f32
        ],
        out_specs=pl.BlockSpec((Bt, S, D), lambda b: (b, 0, 0)),
    )
    return pl.pallas_call(
        functools.partial(fnet_kernel, layers=layers),
        out_shape=jax.ShapeDtypeStruct((B, S, D), dtype),
        grid_spec=grid_spec,
        compiler_params=pltpu.CompilerParams(
            dimension_semantics=("parallel",),
            vmem_limit_bytes=vmem_limit),
    )


def fnet(x, ops, layers, *, batch_block=None):
    """FNet forward: the same FNetLayer (shared weights) applied `layers` times,
    all fused in one pallas_call.  x: (B, S, D) float32."""
    B, S, D = x.shape
    H = ops["w1"].shape[1]
    budget, two_tc = _tpu_profile()
    Bt = batch_block or _pick_batch_block(B, S, D, H, budget, two_tc)
    assert B % Bt == 0, (B, Bt)
    vmem_limit = int(min(budget, max(32 << 20, _block_vmem_bytes(Bt, S, D, H))))

    args = (x, ops["cs"], ops["ss"], ops["cdsd"], ops["gamma"], ops["beta"],
            ops["w1"], ops["b1"], ops["w2"], ops["b2"])
    try:
        return _fnet_pallas_call(B, S, D, H, x.dtype, Bt, layers,
                                 vmem_limit, True)(*args)
    except Exception:
        # pl.Buffered(1) single-buffering not accepted by this jax/Mosaic version:
        # fall back to default (double-buffered) grid-invariant weight blocks.
        return _fnet_pallas_call(B, S, D, H, x.dtype, Bt, layers,
                                 vmem_limit, False)(*args)


# --------------------------------------------------------------------------- #
# Parameter / operand construction
# --------------------------------------------------------------------------- #
def dft_cos_sin(n):
    k = jnp.arange(n, dtype=jnp.float32)
    ang = 2.0 * jnp.pi * jnp.outer(k, k) / n
    return jnp.cos(ang), jnp.sin(ang)


def make_params(key, D, H):
    """Model parameters in f32 (master copies, used by the pure-JAX reference)."""
    k1, k2 = jax.random.split(key)
    return {
        "gamma": jnp.ones((D,), jnp.float32),
        "beta": jnp.zeros((D,), jnp.float32),
        "w1": (0.02 * jax.random.normal(k1, (D, H))).astype(jnp.float32),
        "b1": jnp.zeros((H,), jnp.float32),
        "w2": (0.02 * jax.random.normal(k2, (H, D))).astype(jnp.float32),
        "b2": jnp.zeros((D,), jnp.float32),
    }


def prepare_operands(params, S, D):
    """Kernel-side operands: bf16 DFT matrices (fused on the D axis), bf16 weights,
    f32 bias/scale rows."""
    cs, ss = dft_cos_sin(S)
    cd, sd = dft_cos_sin(D)
    H = params["w1"].shape[1]
    return {
        "cs": cs.astype(jnp.bfloat16),                                    # (S, S)
        "ss": ss.astype(jnp.bfloat16),                                    # (S, S)
        "cdsd": jnp.concatenate([cd, sd], axis=1).astype(jnp.bfloat16),   # (D, 2D)
        "gamma": params["gamma"].reshape(1, D),
        "beta": params["beta"].reshape(1, D),
        "w1": params["w1"].astype(jnp.bfloat16),                          # (D, H)
        "b1": params["b1"].reshape(1, H),
        "w2": params["w2"].astype(jnp.bfloat16),                          # (H, D)
        "b2": params["b2"].reshape(1, D),
    }


# --------------------------------------------------------------------------- #
# Pure-JAX reference (f32, mirrors the torch forward in eval mode)
# --------------------------------------------------------------------------- #
def fnet_layer_ref(x, p):
    def ln(v):
        mu = jnp.mean(v, axis=-1, keepdims=True)
        var = jnp.mean((v - mu) ** 2, axis=-1, keepdims=True)
        return (v - mu) * lax.rsqrt(var + EPS) * p["gamma"] + p["beta"]
    residual = x
    f = jnp.real(jnp.fft.fft2(x, axes=(-1, -2)))
    h = ln(f + residual)
    z = _gelu_exact(h @ p["w1"] + p["b1"])
    y = z @ p["w2"] + p["b2"]
    return ln(y + residual)


def fnet_ref(x, p, layers):
    for _ in range(layers):
        x = fnet_layer_ref(x, p)
    return x


# --------------------------------------------------------------------------- #
if __name__ == "__main__":
    B, S, D, H, LAYERS = 4, 8, 128, 256, 2   # D multiple of 128 -> lane-dense stores
    key = jax.random.PRNGKey(0)
    kx, kp = jax.random.split(key)
    x = jax.random.normal(kx, (B, S, D), dtype=jnp.float32)

    params = make_params(kp, D, H)
    ops = prepare_operands(params, S, D)

    out = jax.block_until_ready(fnet(x, ops, LAYERS))

    ref = fnet_ref(x, params, LAYERS)
    assert out.shape == (B, S, D)
    max_err = float(jnp.max(jnp.abs(out - ref)))
    assert jnp.allclose(out, ref, atol=2e-2, rtol=2e-2), f"mismatch vs reference: {max_err}"
    print("KERNEL_OK")
</pallas_src>

<mosaic_0001>
module attributes {stable_mosaic.version = 11 : i64} {
  func.func @fnet_kernel(%arg0: i32, %arg1: memref<2x8x128xf32, #tpu.memory_space<vmem>>, %arg2: memref<8x8xbf16, #tpu.memory_space<vmem>>, %arg3: memref<8x8xbf16, #tpu.memory_space<vmem>>, %arg4: memref<128x256xbf16, #tpu.memory_space<vmem>>, %arg5: memref<1x128xf32, #tpu.memory_space<vmem>>, %arg6: memref<1x128xf32, #tpu.memory_space<vmem>>, %arg7: memref<128x256xbf16, #tpu.memory_space<vmem>>, %arg8: memref<1x256xf32, #tpu.memory_space<vmem>>, %arg9: memref<256x128xbf16, #tpu.memory_space<vmem>>, %arg10: memref<1x128xf32, #tpu.memory_space<vmem>>, %arg11: memref<2x8x128xf32, #tpu.memory_space<vmem>>) attributes {dimension_semantics = [#tpu.dimension_semantics<parallel>], iteration_bounds = array<i64: 2>, scalar_prefetch = 0 : i64, scratch_operands = 0 : i64, tpu.core_type = #tpu.core_type<tc>, window_params = [{transform_indices = @transform_0, window_bounds = array<i64: 2, 8, 128>}, {pipeline_mode = #tpu.pipeline_mode<synchronous>, transform_indices = @transform_1, window_bounds = array<i64: 8, 8>}, {pipeline_mode = #tpu.pipeline_mode<synchronous>, transform_indices = @transform_2, window_bounds = array<i64: 8, 8>}, {pipeline_mode = #tpu.pipeline_mode<synchronous>, transform_indices = @transform_3, window_bounds = array<i64: 128, 256>}, {pipeline_mode = #tpu.pipeline_mode<synchronous>, transform_indices = @transform_4, window_bounds = array<i64: 1, 128>}, {pipeline_mode = #tpu.pipeline_mode<synchronous>, transform_indices = @transform_5, window_bounds = array<i64: 1, 128>}, {pipeline_mode = #tpu.pipeline_mode<synchronous>, transform_indices = @transform_6, window_bounds = array<i64: 128, 256>}, {pipeline_mode = #tpu.pipeline_mode<synchronous>, transform_indices = @transform_7, window_bounds = array<i64: 1, 256>}, {pipeline_mode = #tpu.pipeline_mode<synchronous>, transform_indices = @transform_8, window_bounds = array<i64: 256, 128>}, {pipeline_mode = #tpu.pipeline_mode<synchronous>, transform_indices = @transform_9, window_bounds = array<i64: 1, 128>}, {transform_indices = @transform_10, window_bounds = array<i64: 2, 8, 128>}]} {
    %c0 = arith.constant 0 : index
    %c0_0 = arith.constant 0 : index
    %0 = vector.load %arg5[%c0, %c0_0] : memref<1x128xf32, #tpu.memory_space<vmem>>, vector<1x128xf32>
    %c0_1 = arith.constant 0 : index
    %c0_2 = arith.constant 0 : index
    %1 = vector.load %arg6[%c0_1, %c0_2] : memref<1x128xf32, #tpu.memory_space<vmem>>, vector<1x128xf32>
    %c0_3 = arith.constant 0 : index
    %c0_4 = arith.constant 0 : index
    %2 = vector.load %arg8[%c0_3, %c0_4] : memref<1x256xf32, #tpu.memory_space<vmem>>, vector<1x256xf32>
    %c0_5 = arith.constant 0 : index
    %c0_6 = arith.constant 0 : index
    %3 = vector.load %arg10[%c0_5, %c0_6] : memref<1x128xf32, #tpu.memory_space<vmem>>, vector<1x128xf32>
    %c0_7 = arith.constant 0 : index
    %c0_8 = arith.constant 0 : index
    %4 = vector.load %arg4[%c0_7, %c0_8] : memref<128x256xbf16, #tpu.memory_space<vmem>>, vector<128x256xbf16>
    %c0_9 = arith.constant 0 : index
    %c0_10 = arith.constant 0 : index
    %5 = vector.load %arg7[%c0_9, %c0_10] : memref<128x256xbf16, #tpu.memory_space<vmem>>, vector<128x256xbf16>
    %c0_11 = arith.constant 0 : index
    %c0_12 = arith.constant 0 : index
    %6 = vector.load %arg9[%c0_11, %c0_12] : memref<256x128xbf16, #tpu.memory_space<vmem>>, vector<256x128xbf16>
    %c0_13 = arith.constant 0 : index
    %c0_14 = arith.constant 0 : index
    %7 = vector.load %arg2[%c0_13, %c0_14] : memref<8x8xbf16, #tpu.memory_space<vmem>>, vector<8x8xbf16>
    %8 = vector.shape_cast %7 : vector<8x8xbf16> to vector<1x8x8xbf16>
    %9 = vector.broadcast %8 : vector<1x8x8xbf16> to vector<2x8x8xbf16>
    %c0_15 = arith.constant 0 : index
    %c0_16 = arith.constant 0 : index
    %10 = vector.load %arg3[%c0_15, %c0_16] : memref<8x8xbf16, #tpu.memory_space<vmem>>, vector<8x8xbf16>
    %11 = vector.shape_cast %10 : vector<8x8xbf16> to vector<1x8x8xbf16>
    %12 = vector.broadcast %11 : vector<1x8x8xbf16> to vector<2x8x8xbf16>
    %c0_17 = arith.constant 0 : index
    %c0_18 = arith.constant 0 : index
    %c0_19 = arith.constant 0 : index
    %13 = vector.load %arg1[%c0_17, %c0_18, %c0_19] : memref<2x8x128xf32, #tpu.memory_space<vmem>>, vector<2x8x128xf32>
    %14 = vector.shape_cast %13 : vector<2x8x128xf32> to vector<16x128xf32>
    %15 = arith.truncf %14 : vector<16x128xf32> to vector<16x128xbf16>
    %cst = arith.constant dense<0.000000e+00> : vector<16x256xf32>
    %16 = tpu.matmul %15, %4, %cst {dimension_numbers = #tpu.dot_dimension_numbers<[1], [0], [0], [1], [0, 0, 1, 1], [], []>} : vector<16x128xbf16>, vector<128x256xbf16>, vector<16x256xf32> -> vector<16x256xf32>
    %17 = vector.shape_cast %16 : vector<16x256xf32> to vector<2x8x256xf32>
    %18 = vector.extract_strided_slice %17 {offsets = [0, 0, 0], sizes = [2, 8, 128], strides = [1, 1, 1]} : vector<2x8x256xf32> to vector<2x8x128xf32>
    %19 = arith.truncf %18 : vector<2x8x128xf32> to vector<2x8x128xbf16>
    %20 = vector.extract_strided_slice %17 {offsets = [0, 0, 128], sizes = [2, 8, 128], strides = [1, 1, 1]} : vector<2x8x256xf32> to vector<2x8x128xf32>
    %21 = arith.truncf %20 : vector<2x8x128xf32> to vector<2x8x128xbf16>
    "tpu.trace_start"() <{level = 10 : i32, message = "bsk,bkd->bsd"}> : () -> ()
    %cst_20 = arith.constant dense<0.000000e+00> : vector<2x8x128xf32>
    %22 = tpu.matmul %9, %19, %cst_20 {dimension_numbers = #tpu.dot_dimension_numbers<[2], [1], [1], [2], [0, 0, 0, 1, 1, 2], [0], [0]>} : vector<2x8x8xbf16>, vector<2x8x128xbf16>, vector<2x8x128xf32> -> vector<2x8x128xf32>
    %cst_21 = arith.constant dense<0.000000e+00> : vector<2x8x128xf32>
    %23 = tpu.matmul %12, %21, %cst_21 {dimension_numbers = #tpu.dot_dimension_numbers<[2], [1], [1], [2], [0, 0, 0, 1, 1, 2], [0], [0]>} : vector<2x8x8xbf16>, vector<2x8x128xbf16>, vector<2x8x128xf32> -> vector<2x8x128xf32>
    "tpu.trace_stop"() : () -> ()
    %24 = arith.subf %22, %23 : vector<2x8x128xf32>
    %25 = vector.shape_cast %24 : vector<2x8x128xf32> to vector<16x128xf32>
    %26 = arith.addf %25, %14 : vector<16x128xf32>
    %cst_22 = arith.constant dense<0.000000e+00> : vector<16xf32>
    %27 = vector.multi_reduction <add>, %26, %cst_22 [1] : vector<16x128xf32> to vector<16xf32>
    %28 = vector.shape_cast %27 : vector<16xf32> to vector<16x1xf32>
    %cst_23 = arith.constant 1.280000e+02 : f32
    %29 = vector.broadcast %cst_23 : f32 to vector<16x1xf32>
    %30 = arith.divf %28, %29 : vector<16x1xf32>
    %31 = arith.mulf %26, %26 : vector<16x128xf32>
    %cst_24 = arith.constant dense<0.000000e+00> : vector<16xf32>
    %32 = vector.multi_reduction <add>, %31, %cst_24 [1] : vector<16x128xf32> to vector<16xf32>
    %33 = vector.shape_cast %32 : vector<16xf32> to vector<16x1xf32>
    %cst_25 = arith.constant 1.280000e+02 : f32
    %34 = vector.broadcast %cst_25 : f32 to vector<16x1xf32>
    %35 = arith.divf %33, %34 : vector<16x1xf32>
    %36 = arith.mulf %30, %30 : vector<16x1xf32>
    %37 = arith.subf %35, %36 : vector<16x1xf32>
    %cst_26 = arith.constant 0.000000e+00 : f32
    %38 = vector.broadcast %cst_26 : f32 to vector<16x1xf32>
    %39 = arith.maximumf %37, %38 : vector<16x1xf32>
    %40 = vector.broadcast %30 : vector<16x1xf32> to vector<16x128xf32>
    %41 = arith.subf %26, %40 : vector<16x128xf32>
    %cst_27 = arith.constant 9.99999974E-6 : f32
    %42 = vector.broadcast %cst_27 : f32 to vector<16x1xf32>
    %43 = arith.addf %39, %42 : vector<16x1xf32>
    %44 = math.rsqrt %43 : vector<16x1xf32>
    %45 = vector.broadcast %44 : vector<16x1xf32> to vector<16x128xf32>
    %46 = arith.mulf %41, %45 : vector<16x128xf32>
    %47 = vector.broadcast %0 : vector<1x128xf32> to vector<16x128xf32>
    %48 = arith.mulf %46, %47 : vector<16x128xf32>
    %49 = vector.broadcast %1 : vector<1x128xf32> to vector<16x128xf32>
    %50 = arith.addf %48, %49 : vector<16x128xf32>
    %51 = arith.truncf %50 : vector<16x128xf32> to vector<16x128xbf16>
    %cst_28 = arith.constant dense<0.000000e+00> : vector<16x256xf32>
    %52 = tpu.matmul %51, %5, %cst_28 {dimension_numbers = #tpu.dot_dimension_numbers<[1], [0], [0], [1], [0, 0, 1, 1], [], []>} : vector<16x128xbf16>, vector<128x256xbf16>, vector<16x256xf32> -> vector<16x256xf32>
    %53 = vector.broadcast %2 : vector<1x256xf32> to vector<16x256xf32>
    %54 = arith.addf %52, %53 : vector<16x256xf32>
    %cst_29 = arith.constant 5.000000e-01 : f32
    %55 = vector.broadcast %cst_29 : f32 to vector<16x256xf32>
    %56 = arith.mulf %55, %54 : vector<16x256xf32>
    %cst_30 = arith.constant 2.000000e+00 : f32
    %57 = math.sqrt %cst_30 : f32
    %58 = vector.broadcast %57 : f32 to vector<16x256xf32>
    %59 = arith.divf %54, %58 : vector<16x256xf32>
    %60 = math.erf %59 : vector<16x256xf32>
    %cst_31 = arith.constant 1.000000e+00 : f32
    %61 = vector.broadcast %cst_31 : f32 to vector<16x256xf32>
    %62 = arith.addf %61, %60 : vector<16x256xf32>
    %63 = arith.mulf %56, %62 : vector<16x256xf32>
    %64 = arith.truncf %63 : vector<16x256xf32> to vector<16x256xbf16>
    %cst_32 = arith.constant dense<0.000000e+00> : vector<16x128xf32>
    %65 = tpu.matmul %64, %6, %cst_32 {dimension_numbers = #tpu.dot_dimension_numbers<[1], [0], [0], [1], [0, 0, 1, 1], [], []>} : vector<16x256xbf16>, vector<256x128xbf16>, vector<16x128xf32> -> vector<16x128xf32>
    %66 = vector.broadcast %3 : vector<1x128xf32> to vector<16x128xf32>
    %67 = arith.addf %65, %66 : vector<16x128xf32>
    %68 = arith.addf %67, %14 : vector<16x128xf32>
    %cst_33 = arith.constant dense<0.000000e+00> : vector<16xf32>
    %69 = vector.multi_reduction <add>, %68, %cst_33 [1] : vector<16x128xf32> to vector<16xf32>
    %70 = vector.shape_cast %69 : vector<16xf32> to vector<16x1xf32>
    %cst_34 = arith.constant 1.280000e+02 : f32
    %71 = vector.broadcast %cst_34 : f32 to vector<16x1xf32>
    %72 = arith.divf %70, %71 : vector<16x1xf32>
    %73 = arith.mulf %68, %68 : vector<16x128xf32>
    %cst_35 = arith.constant dense<0.000000e+00> : vector<16xf32>
    %74 = vector.multi_reduction <add>, %73, %cst_35 [1] : vector<16x128xf32> to vector<16xf32>
    %75 = vector.shape_cast %74 : vector<16xf32> to vector<16x1xf32>
    %cst_36 = arith.constant 1.280000e+02 : f32
    %76 = vector.broadcast %cst_36 : f32 to vector<16x1xf32>
    %77 = arith.divf %75, %76 : vector<16x1xf32>
    %78 = arith.mulf %72, %72 : vector<16x1xf32>
    %79 = arith.subf %77, %78 : vector<16x1xf32>
    %cst_37 = arith.constant 0.000000e+00 : f32
    %80 = vector.broadcast %cst_37 : f32 to vector<16x1xf32>
    %81 = arith.maximumf %79, %80 : vector<16x1xf32>
    %82 = vector.broadcast %72 : vector<16x1xf32> to vector<16x128xf32>
    %83 = arith.subf %68, %82 : vector<16x128xf32>
    %cst_38 = arith.constant 9.99999974E-6 : f32
    %84 = vector.broadcast %cst_38 : f32 to vector<16x1xf32>
    %85 = arith.addf %81, %84 : vector<16x1xf32>
    %86 = math.rsqrt %85 : vector<16x1xf32>
    %87 = vector.broadcast %86 : vector<16x1xf32> to vector<16x128xf32>
    %88 = arith.mulf %83, %87 : vector<16x128xf32>
    %89 = vector.broadcast %0 : vector<1x128xf32> to vector<16x128xf32>
    %90 = arith.mulf %88, %89 : vector<16x128xf32>
    %91 = vector.broadcast %1 : vector<1x128xf32> to vector<16x128xf32>
    %92 = arith.addf %90, %91 : vector<16x128xf32>
    %93 = vector.shape_cast %92 : vector<16x128xf32> to vector<2x8x128xf32>
    %94 = vector.shape_cast %93 : vector<2x8x128xf32> to vector<16x128xf32>
    %95 = arith.truncf %94 : vector<16x128xf32> to vector<16x128xbf16>
    %cst_39 = arith.constant dense<0.000000e+00> : vector<16x256xf32>
    %96 = tpu.matmul %95, %4, %cst_39 {dimension_numbers = #tpu.dot_dimension_numbers<[1], [0], [0], [1], [0, 0, 1, 1], [], []>} : vector<16x128xbf16>, vector<128x256xbf16>, vector<16x256xf32> -> vector<16x256xf32>
    %97 = vector.shape_cast %96 : vector<16x256xf32> to vector<2x8x256xf32>
    %98 = vector.extract_strided_slice %97 {offsets = [0, 0, 0], sizes = [2, 8, 128], strides = [1, 1, 1]} : vector<2x8x256xf32> to vector<2x8x128xf32>
    %99 = arith.truncf %98 : vector<2x8x128xf32> to vector<2x8x128xbf16>
    %100 = vector.extract_strided_slice %97 {offsets = [0, 0, 128], sizes = [2, 8, 128], strides = [1, 1, 1]} : vector<2x8x256xf32> to vector<2x8x128xf32>
    %101 = arith.truncf %100 : vector<2x8x128xf32> to vector<2x8x128xbf16>
    "tpu.trace_start"() <{level = 10 : i32, message = "bsk,bkd->bsd"}> : () -> ()
    %cst_40 = arith.constant dense<0.000000e+00> : vector<2x8x128xf32>
    %102 = tpu.matmul %9, %99, %cst_40 {dimension_numbers = #tpu.dot_dimension_numbers<[2], [1], [1], [2], [0, 0, 0, 1, 1, 2], [0], [0]>} : vector<2x8x8xbf16>, vector<2x8x128xbf16>, vector<2x8x128xf32> -> vector<2x8x128xf32>
    %cst_41 = arith.constant dense<0.000000e+00> : vector<2x8x128xf32>
    %103 = tpu.matmul %12, %101, %cst_41 {dimension_numbers = #tpu.dot_dimension_numbers<[2], [1], [1], [2], [0, 0, 0, 1, 1, 2], [0], [0]>} : vector<2x8x8xbf16>, vector<2x8x128xbf16>, vector<2x8x128xf32> -> vector<2x8x128xf32>
    "tpu.trace_stop"() : () -> ()
    %104 = arith.subf %102, %103 : vector<2x8x128xf32>
    %105 = vector.shape_cast %104 : vector<2x8x128xf32> to vector<16x128xf32>
    %106 = arith.addf %105, %94 : vector<16x128xf32>
    %cst_42 = arith.constant dense<0.000000e+00> : vector<16xf32>
    %107 = vector.multi_reduction <add>, %106, %cst_42 [1] : vector<16x128xf32> to vector<16xf32>
    %108 = vector.shape_cast %107 : vector<16xf32> to vector<16x1xf32>
    %cst_43 = arith.constant 1.280000e+02 : f32
    %109 = vector.broadcast %cst_43 : f32 to vector<16x1xf32>
    %110 = arith.divf %108, %109 : vector<16x1xf32>
    %111 = arith.mulf %106, %106 : vector<16x128xf32>
    %cst_44 = arith.constant dense<0.000000e+00> : vector<16xf32>
    %112 = vector.multi_reduction <add>, %111, %cst_44 [1] : vector<16x128xf32> to vector<16xf32>
    %113 = vector.shape_cast %112 : vector<16xf32> to vector<16x1xf32>
    %cst_45 = arith.constant 1.280000e+02 : f32
    %114 = vector.broadcast %cst_45 : f32 to vector<16x1xf32>
    %115 = arith.divf %113, %114 : vector<16x1xf32>
    %116 = arith.mulf %110, %110 : vector<16x1xf32>
    %117 = arith.subf %115, %116 : vector<16x1xf32>
    %cst_46 = arith.constant 0.000000e+00 : f32
    %118 = vector.broadcast %cst_46 : f32 to vector<16x1xf32>
    %119 = arith.maximumf %117, %118 : vector<16x1xf32>
    %120 = vector.broadcast %110 : vector<16x1xf32> to vector<16x128xf32>
    %121 = arith.subf %106, %120 : vector<16x128xf32>
    %cst_47 = arith.constant 9.99999974E-6 : f32
    %122 = vector.broadcast %cst_47 : f32 to vector<16x1xf32>
    %123 = arith.addf %119, %122 : vector<16x1xf32>
    %124 = math.rsqrt %123 : vector<16x1xf32>
    %125 = vector.broadcast %124 : vector<16x1xf32> to vector<16x128xf32>
    %126 = arith.mulf %121, %125 : vector<16x128xf32>
    %127 = vector.broadcast %0 : vector<1x128xf32> to vector<16x128xf32>
    %128 = arith.mulf %126, %127 : vector<16x128xf32>
    %129 = vector.broadcast %1 : vector<1x128xf32> to vector<16x128xf32>
    %130 = arith.addf %128, %129 : vector<16x128xf32>
    %131 = arith.truncf %130 : vector<16x128xf32> to vector<16x128xbf16>
    %cst_48 = arith.constant dense<0.000000e+00> : vector<16x256xf32>
    %132 = tpu.matmul %131, %5, %cst_48 {dimension_numbers = #tpu.dot_dimension_numbers<[1], [0], [0], [1], [0, 0, 1, 1], [], []>} : vector<16x128xbf16>, vector<128x256xbf16>, vector<16x256xf32> -> vector<16x256xf32>
    %133 = vector.broadcast %2 : vector<1x256xf32> to vector<16x256xf32>
    %134 = arith.addf %132, %133 : vector<16x256xf32>
    %cst_49 = arith.constant 5.000000e-01 : f32
    %135 = vector.broadcast %cst_49 : f32 to vector<16x256xf32>
    %136 = arith.mulf %135, %134 : vector<16x256xf32>
    %cst_50 = arith.constant 2.000000e+00 : f32
    %137 = math.sqrt %cst_50 : f32
    %138 = vector.broadcast %137 : f32 to vector<16x256xf32>
    %139 = arith.divf %134, %138 : vector<16x256xf32>
    %140 = math.erf %139 : vector<16x256xf32>
    %cst_51 = arith.constant 1.000000e+00 : f32
    %141 = vector.broadcast %cst_51 : f32 to vector<16x256xf32>
    %142 = arith.addf %141, %140 : vector<16x256xf32>
    %143 = arith.mulf %136, %142 : vector<16x256xf32>
    %144 = arith.truncf %143 : vector<16x256xf32> to vector<16x256xbf16>
    %cst_52 = arith.constant dense<0.000000e+00> : vector<16x128xf32>
    %145 = tpu.matmul %144, %6, %cst_52 {dimension_numbers = #tpu.dot_dimension_numbers<[1], [0], [0], [1], [0, 0, 1, 1], [], []>} : vector<16x256xbf16>, vector<256x128xbf16>, vector<16x128xf32> -> vector<16x128xf32>
    %146 = vector.broadcast %3 : vector<1x128xf32> to vector<16x128xf32>
    %147 = arith.addf %145, %146 : vector<16x128xf32>
    %148 = arith.addf %147, %94 : vector<16x128xf32>
    %cst_53 = arith.constant dense<0.000000e+00> : vector<16xf32>
    %149 = vector.multi_reduction <add>, %148, %cst_53 [1] : vector<16x128xf32> to vector<16xf32>
    %150 = vector.shape_cast %149 : vector<16xf32> to vector<16x1xf32>
    %cst_54 = arith.constant 1.280000e+02 : f32
    %151 = vector.broadcast %cst_54 : f32 to vector<16x1xf32>
    %152 = arith.divf %150, %151 : vector<16x1xf32>
    %153 = arith.mulf %148, %148 : vector<16x128xf32>
    %cst_55 = arith.constant dense<0.000000e+00> : vector<16xf32>
    %154 = vector.multi_reduction <add>, %153, %cst_55 [1] : vector<16x128xf32> to vector<16xf32>
    %155 = vector.shape_cast %154 : vector<16xf32> to vector<16x1xf32>
    %cst_56 = arith.constant 1.280000e+02 : f32
    %156 = vector.broadcast %cst_56 : f32 to vector<16x1xf32>
    %157 = arith.divf %155, %156 : vector<16x1xf32>
    %158 = arith.mulf %152, %152 : vector<16x1xf32>
    %159 = arith.subf %157, %158 : vector<16x1xf32>
    %cst_57 = arith.constant 0.000000e+00 : f32
    %160 = vector.broadcast %cst_57 : f32 to vector<16x1xf32>
    %161 = arith.maximumf %159, %160 : vector<16x1xf32>
    %162 = vector.broadcast %152 : vector<16x1xf32> to vector<16x128xf32>
    %163 = arith.subf %148, %162 : vector<16x128xf32>
    %cst_58 = arith.constant 9.99999974E-6 : f32
    %164 = vector.broadcast %cst_58 : f32 to vector<16x1xf32>
    %165 = arith.addf %161, %164 : vector<16x1xf32>
    %166 = math.rsqrt %165 : vector<16x1xf32>
    %167 = vector.broadcast %166 : vector<16x1xf32> to vector<16x128xf32>
    %168 = arith.mulf %163, %167 : vector<16x128xf32>
    %169 = vector.broadcast %0 : vector<1x128xf32> to vector<16x128xf32>
    %170 = arith.mulf %168, %169 : vector<16x128xf32>
    %171 = vector.broadcast %1 : vector<1x128xf32> to vector<16x128xf32>
    %172 = arith.addf %170, %171 : vector<16x128xf32>
    %173 = vector.shape_cast %172 : vector<16x128xf32> to vector<2x8x128xf32>
    %c0_59 = arith.constant 0 : index
    %c0_60 = arith.constant 0 : index
    %c0_61 = arith.constant 0 : index
    %174 = vector.load %arg11[%c0_59, %c0_60, %c0_61] : memref<2x8x128xf32, #tpu.memory_space<vmem>>, vector<2x8x128xf32>
    tpu.vector_store %arg11[%c0_59, %c0_60, %c0_61], %173 {strides = array<i32>} : memref<2x8x128xf32, #tpu.memory_space<vmem>>, vector<2x8x128xf32>,
    return
  }
  func.func @transform_0(%arg0: i32) -> (i32, i32, i32) {
    %c0_i32 = arith.constant 0 : i32
    %c0_i32_0 = arith.constant 0 : i32
    %c0_i32_1 = arith.constant 0 : i32
    return %arg0, %c0_i32, %c0_i32_0 : i32, i32, i32
  }
  func.func @transform_1(%arg0: i32) -> (i32, i32) {
    %c0_i32 = arith.constant 0 : i32
    %c0_i32_0 = arith.constant 0 : i32
    %c0_i32_1 = arith.constant 0 : i32
    return %c0_i32, %c0_i32_0 : i32, i32
  }
  func.func @transform_2(%arg0: i32) -> (i32, i32) {
    %c0_i32 = arith.constant 0 : i32
    %c0_i32_0 = arith.constant 0 : i32
    %c0_i32_1 = arith.constant 0 : i32
    return %c0_i32, %c0_i32_0 : i32, i32
  }
  func.func @transform_3(%arg0: i32) -> (i32, i32) {
    %c0_i32 = arith.constant 0 : i32
    %c0_i32_0 = arith.constant 0 : i32
    %c0_i32_1 = arith.constant 0 : i32
    return %c0_i32, %c0_i32_0 : i32, i32
  }
  func.func @transform_4(%arg0: i32) -> (i32, i32) {
    %c0_i32 = arith.constant 0 : i32
    %c0_i32_0 = arith.constant 0 : i32
    %c0_i32_1 = arith.constant 0 : i32
    return %c0_i32, %c0_i32_0 : i32, i32
  }
  func.func @transform_5(%arg0: i32) -> (i32, i32) {
    %c0_i32 = arith.constant 0 : i32
    %c0_i32_0 = arith.constant 0 : i32
    %c0_i32_1 = arith.constant 0 : i32
    return %c0_i32, %c0_i32_0 : i32, i32
  }
  func.func @transform_6(%arg0: i32) -> (i32, i32) {
    %c0_i32 = arith.constant 0 : i32
    %c0_i32_0 = arith.constant 0 : i32
    %c0_i32_1 = arith.constant 0 : i32
    return %c0_i32, %c0_i32_0 : i32, i32
  }
  func.func @transform_7(%arg0: i32) -> (i32, i32) {
    %c0_i32 = arith.constant 0 : i32
    %c0_i32_0 = arith.constant 0 : i32
    %c0_i32_1 = arith.constant 0 : i32
    return %c0_i32, %c0_i32_0 : i32, i32
  }
  func.func @transform_8(%arg0: i32) -> (i32, i32) {
    %c0_i32 = arith.constant 0 : i32
    %c0_i32_0 = arith.constant 0 : i32
    %c0_i32_1 = arith.constant 0 : i32
    return %c0_i32, %c0_i32_0 : i32, i32
  }
  func.func @transform_9(%arg0: i32) -> (i32, i32) {
    %c0_i32 = arith.constant 0 : i32
    %c0_i32_0 = arith.constant 0 : i32
    %c0_i32_1 = arith.constant 0 : i32
    return %c0_i32, %c0_i32_0 : i32, i32
  }
  func.func @transform_10(%arg0: i32) -> (i32, i32, i32) {
    %c0_i32 = arith.constant 0 : i32
    %c0_i32_0 = arith.constant 0 : i32
    %c0_i32_1 = arith.constant 0 : i32
    return %arg0, %c0_i32, %c0_i32_0 : i32, i32, i32
  }
}

module attributes {stable_mosaic.version = 11 : i64} {
  func.func @fnet_kernel(%arg0: i32, %arg1: memref<2x8x128xf32, #tpu.memory_space<vmem>>, %arg2: memref<8x8xbf16, #tpu.memory_space<vmem>>, %arg3: memref<8x8xbf16, #tpu.memory_space<vmem>>, %arg4: memref<128x256xbf16, #tpu.memory_space<vmem>>, %arg5: memref<1x128xf32, #tpu.memory_space<vmem>>, %arg6: memref<1x128xf32, #tpu.memory_space<vmem>>, %arg7: memref<128x256xbf16, #tpu.memory_space<vmem>>, %arg8: memref<1x256xf32, #tpu.memory_space<vmem>>, %arg9: memref<256x128xbf16, #tpu.memory_space<vmem>>, %arg10: memref<1x128xf32, #tpu.memory_space<vmem>>, %arg11: memref<2x8x128xf32, #tpu.memory_space<vmem>>) attributes {dimension_semantics = [#tpu.dimension_semantics<parallel>], iteration_bounds = array<i64: 2>, scalar_prefetch = 0 : i64, scratch_operands = 0 : i64, tpu.core_type = #tpu.core_type<tc>, window_params = [{transform_indices = @transform_0, window_bounds = array<i64: 2, 8, 128>}, {pipeline_mode = #tpu.pipeline_mode<synchronous>, transform_indices = @transform_1, window_bounds = array<i64: 8, 8>}, {pipeline_mode = #tpu.pipeline_mode<synchronous>, transform_indices = @transform_2, window_bounds = array<i64: 8, 8>}, {pipeline_mode = #tpu.pipeline_mode<synchronous>, transform_indices = @transform_3, window_bounds = array<i64: 128, 256>}, {pipeline_mode = #tpu.pipeline_mode<synchronous>, transform_indices = @transform_4, window_bounds = array<i64: 1, 128>}, {pipeline_mode = #tpu.pipeline_mode<synchronous>, transform_indices = @transform_5, window_bounds = array<i64: 1, 128>}, {pipeline_mode = #tpu.pipeline_mode<synchronous>, transform_indices = @transform_6, window_bounds = array<i64: 128, 256>}, {pipeline_mode = #tpu.pipeline_mode<synchronous>, transform_indices = @transform_7, window_bounds = array<i64: 1, 256>}, {pipeline_mode = #tpu.pipeline_mode<synchronous>, transform_indices = @transform_8, window_bounds = array<i64: 256, 128>}, {pipeline_mode = #tpu.pipeline_mode<synchronous>, transform_indices = @transform_9, window_bounds = array<i64: 1, 128>}, {transform_indices = @transform_10, window_bounds = array<i64: 2, 8, 128>}]} {
    %c0 = arith.constant 0 : index
    %c0_0 = arith.constant 0 : index
    %0 = vector.load %arg5[%c0, %c0_0] : memref<1x128xf32, #tpu.memory_space<vmem>>, vector<1x128xf32>
    %c0_1 = arith.constant 0 : index
    %c0_2 = arith.constant 0 : index
    %1 = vector.load %arg6[%c0_1, %c0_2] : memref<1x128xf32, #tpu.memory_space<vmem>>, vector<1x128xf32>
    %c0_3 = arith.constant 0 : index
    %c0_4 = arith.constant 0 : index
    %2 = vector.load %arg8[%c0_3, %c0_4] : memref<1x256xf32, #tpu.memory_space<vmem>>, vector<1x256xf32>
    %c0_5 = arith.constant 0 : index
    %c0_6 = arith.constant 0 : index
    %3 = vector.load %arg10[%c0_5, %c0_6] : memref<1x128xf32, #tpu.memory_space<vmem>>, vector<1x128xf32>
    %c0_7 = arith.constant 0 : index
    %c0_8 = arith.constant 0 : index
    %4 = vector.load %arg4[%c0_7, %c0_8] : memref<128x256xbf16, #tpu.memory_space<vmem>>, vector<128x256xbf16>
    %c0_9 = arith.constant 0 : index
    %c0_10 = arith.constant 0 : index
    %5 = vector.load %arg7[%c0_9, %c0_10] : memref<128x256xbf16, #tpu.memory_space<vmem>>, vector<128x256xbf16>
    %c0_11 = arith.constant 0 : index
    %c0_12 = arith.constant 0 : index
    %6 = vector.load %arg9[%c0_11, %c0_12] : memref<256x128xbf16, #tpu.memory_space<vmem>>, vector<256x128xbf16>
    %c0_13 = arith.constant 0 : index
    %c0_14 = arith.constant 0 : index
    %7 = vector.load %arg2[%c0_13, %c0_14] : memref<8x8xbf16, #tpu.memory_space<vmem>>, vector<8x8xbf16>
    %8 = vector.shape_cast %7 : vector<8x8xbf16> to vector<1x8x8xbf16>
    %9 = vector.broadcast %8 : vector<1x8x8xbf16> to vector<2x8x8xbf16>
    %c0_15 = arith.constant 0 : index
    %c0_16 = arith.constant 0 : index
    %10 = vector.load %arg3[%c0_15, %c0_16] : memref<8x8xbf16, #tpu.memory_space<vmem>>, vector<8x8xbf16>
    %11 = vector.shape_cast %10 : vector<8x8xbf16> to vector<1x8x8xbf16>
    %12 = vector.broadcast %11 : vector<1x8x8xbf16> to vector<2x8x8xbf16>
    %c0_17 = arith.constant 0 : index
    %c0_18 = arith.constant 0 : index
    %c0_19 = arith.constant 0 : index
    %13 = vector.load %arg1[%c0_17, %c0_18, %c0_19] : memref<2x8x128xf32, #tpu.memory_space<vmem>>, vector<2x8x128xf32>
    %14 = vector.shape_cast %13 : vector<2x8x128xf32> to vector<16x128xf32>
    %15 = arith.truncf %14 : vector<16x128xf32> to vector<16x128xbf16>
    %cst = arith.constant dense<0.000000e+00> : vector<16x256xf32>
    %16 = tpu.matmul %15, %4, %cst {dimension_numbers = #tpu.dot_dimension_numbers<[1], [0], [0], [1], [0, 0, 1, 1], [], []>} : vector<16x128xbf16>, vector<128x256xbf16>, vector<16x256xf32> -> vector<16x256xf32>
    %17 = vector.shape_cast %16 : vector<16x256xf32> to vector<2x8x256xf32>
    %18 = vector.extract_strided_slice %17 {offsets = [0, 0, 0], sizes = [2, 8, 128], strides = [1, 1, 1]} : vector<2x8x256xf32> to vector<2x8x128xf32>
    %19 = arith.truncf %18 : vector<2x8x128xf32> to vector<2x8x128xbf16>
    %20 = vector.extract_strided_slice %17 {offsets = [0, 0, 128], sizes = [2, 8, 128], strides = [1, 1, 1]} : vector<2x8x256xf32> to vector<2x8x128xf32>
    %21 = arith.truncf %20 : vector<2x8x128xf32> to vector<2x8x128xbf16>
    "tpu.trace_start"() <{level = 10 : i32, message = "bsk,bkd->bsd"}> : () -> ()
    %cst_20 = arith.constant dense<0.000000e+00> : vector<2x8x128xf32>
    %22 = tpu.matmul %9, %19, %cst_20 {dimension_numbers = #tpu.dot_dimension_numbers<[2], [1], [1], [2], [0, 0, 0, 1, 1, 2], [0], [0]>} : vector<2x8x8xbf16>, vector<2x8x128xbf16>, vector<2x8x128xf32> -> vector<2x8x128xf32>
    %cst_21 = arith.constant dense<0.000000e+00> : vector<2x8x128xf32>
    %23 = tpu.matmul %12, %21, %cst_21 {dimension_numbers = #tpu.dot_dimension_numbers<[2], [1], [1], [2], [0, 0, 0, 1, 1, 2], [0], [0]>} : vector<2x8x8xbf16>, vector<2x8x128xbf16>, vector<2x8x128xf32> -> vector<2x8x128xf32>
    "tpu.trace_stop"() : () -> ()
    %24 = arith.subf %22, %23 : vector<2x8x128xf32>
    %25 = vector.shape_cast %24 : vector<2x8x128xf32> to vector<16x128xf32>
    %26 = arith.addf %25, %14 : vector<16x128xf32>
    %cst_22 = arith.constant dense<0.000000e+00> : vector<16xf32>
    %27 = vector.multi_reduction <add>, %26, %cst_22 [1] : vector<16x128xf32> to vector<16xf32>
    %28 = vector.shape_cast %27 : vector<16xf32> to vector<16x1xf32>
    %cst_23 = arith.constant 1.280000e+02 : f32
    %29 = vector.broadcast %cst_23 : f32 to vector<16x1xf32>
    %30 = arith.divf %28, %29 : vector<16x1xf32>
    %31 = arith.mulf %26, %26 : vector<16x128xf32>
    %cst_24 = arith.constant dense<0.000000e+00> : vector<16xf32>
    %32 = vector.multi_reduction <add>, %31, %cst_24 [1] : vector<16x128xf32> to vector<16xf32>
    %33 = vector.shape_cast %32 : vector<16xf32> to vector<16x1xf32>
    %cst_25 = arith.constant 1.280000e+02 : f32
    %34 = vector.broadcast %cst_25 : f32 to vector<16x1xf32>
    %35 = arith.divf %33, %34 : vector<16x1xf32>
    %36 = arith.mulf %30, %30 : vector<16x1xf32>
    %37 = arith.subf %35, %36 : vector<16x1xf32>
    %cst_26 = arith.constant 0.000000e+00 : f32
    %38 = vector.broadcast %cst_26 : f32 to vector<16x1xf32>
    %39 = arith.maximumf %37, %38 : vector<16x1xf32>
    %40 = vector.broadcast %30 : vector<16x1xf32> to vector<16x128xf32>
    %41 = arith.subf %26, %40 : vector<16x128xf32>
    %cst_27 = arith.constant 9.99999974E-6 : f32
    %42 = vector.broadcast %cst_27 : f32 to vector<16x1xf32>
    %43 = arith.addf %39, %42 : vector<16x1xf32>
    %44 = math.rsqrt %43 : vector<16x1xf32>
    %45 = vector.broadcast %44 : vector<16x1xf32> to vector<16x128xf32>
    %46 = arith.mulf %41, %45 : vector<16x128xf32>
    %47 = vector.broadcast %0 : vector<1x128xf32> to vector<16x128xf32>
    %48 = arith.mulf %46, %47 : vector<16x128xf32>
    %49 = vector.broadcast %1 : vector<1x128xf32> to vector<16x128xf32>
    %50 = arith.addf %48, %49 : vector<16x128xf32>
    %51 = arith.truncf %50 : vector<16x128xf32> to vector<16x128xbf16>
    %cst_28 = arith.constant dense<0.000000e+00> : vector<16x256xf32>
    %52 = tpu.matmul %51, %5, %cst_28 {dimension_numbers = #tpu.dot_dimension_numbers<[1], [0], [0], [1], [0, 0, 1, 1], [], []>} : vector<16x128xbf16>, vector<128x256xbf16>, vector<16x256xf32> -> vector<16x256xf32>
    %53 = vector.broadcast %2 : vector<1x256xf32> to vector<16x256xf32>
    %54 = arith.addf %52, %53 : vector<16x256xf32>
    %cst_29 = arith.constant 5.000000e-01 : f32
    %55 = vector.broadcast %cst_29 : f32 to vector<16x256xf32>
    %56 = arith.mulf %55, %54 : vector<16x256xf32>
    %cst_30 = arith.constant 2.000000e+00 : f32
    %57 = math.sqrt %cst_30 : f32
    %58 = vector.broadcast %57 : f32 to vector<16x256xf32>
    %59 = arith.divf %54, %58 : vector<16x256xf32>
    %60 = math.erf %59 : vector<16x256xf32>
    %cst_31 = arith.constant 1.000000e+00 : f32
    %61 = vector.broadcast %cst_31 : f32 to vector<16x256xf32>
    %62 = arith.addf %61, %60 : vector<16x256xf32>
    %63 = arith.mulf %56, %62 : vector<16x256xf32>
    %64 = arith.truncf %63 : vector<16x256xf32> to vector<16x256xbf16>
    %cst_32 = arith.constant dense<0.000000e+00> : vector<16x128xf32>
    %65 = tpu.matmul %64, %6, %cst_32 {dimension_numbers = #tpu.dot_dimension_numbers<[1], [0], [0], [1], [0, 0, 1, 1], [], []>} : vector<16x256xbf16>, vector<256x128xbf16>, vector<16x128xf32> -> vector<16x128xf32>
    %66 = vector.broadcast %3 : vector<1x128xf32> to vector<16x128xf32>
    %67 = arith.addf %65, %66 : vector<16x128xf32>
    %68 = arith.addf %67, %14 : vector<16x128xf32>
    %cst_33 = arith.constant dense<0.000000e+00> : vector<16xf32>
    %69 = vector.multi_reduction <add>, %68, %cst_33 [1] : vector<16x128xf32> to vector<16xf32>
    %70 = vector.shape_cast %69 : vector<16xf32> to vector<16x1xf32>
    %cst_34 = arith.constant 1.280000e+02 : f32
    %71 = vector.broadcast %cst_34 : f32 to vector<16x1xf32>
    %72 = arith.divf %70, %71 : vector<16x1xf32>
    %73 = arith.mulf %68, %68 : vector<16x128xf32>
    %cst_35 = arith.constant dense<0.000000e+00> : vector<16xf32>
    %74 = vector.multi_reduction <add>, %73, %cst_35 [1] : vector<16x128xf32> to vector<16xf32>
    %75 = vector.shape_cast %74 : vector<16xf32> to vector<16x1xf32>
    %cst_36 = arith.constant 1.280000e+02 : f32
    %76 = vector.broadcast %cst_36 : f32 to vector<16x1xf32>
    %77 = arith.divf %75, %76 : vector<16x1xf32>
    %78 = arith.mulf %72, %72 : vector<16x1xf32>
    %79 = arith.subf %77, %78 : vector<16x1xf32>
    %cst_37 = arith.constant 0.000000e+00 : f32
    %80 = vector.broadcast %cst_37 : f32 to vector<16x1xf32>
    %81 = arith.maximumf %79, %80 : vector<16x1xf32>
    %82 = vector.broadcast %72 : vector<16x1xf32> to vector<16x128xf32>
    %83 = arith.subf %68, %82 : vector<16x128xf32>
    %cst_38 = arith.constant 9.99999974E-6 : f32
    %84 = vector.broadcast %cst_38 : f32 to vector<16x1xf32>
    %85 = arith.addf %81, %84 : vector<16x1xf32>
    %86 = math.rsqrt %85 : vector<16x1xf32>
    %87 = vector.broadcast %86 : vector<16x1xf32> to vector<16x128xf32>
    %88 = arith.mulf %83, %87 : vector<16x128xf32>
    %89 = vector.broadcast %0 : vector<1x128xf32> to vector<16x128xf32>
    %90 = arith.mulf %88, %89 : vector<16x128xf32>
    %91 = vector.broadcast %1 : vector<1x128xf32> to vector<16x128xf32>
    %92 = arith.addf %90, %91 : vector<16x128xf32>
    %93 = vector.shape_cast %92 : vector<16x128xf32> to vector<2x8x128xf32>
    %94 = vector.shape_cast %93 : vector<2x8x128xf32> to vector<16x128xf32>
    %95 = arith.truncf %94 : vector<16x128xf32> to vector<16x128xbf16>
    %cst_39 = arith.constant dense<0.000000e+00> : vector<16x256xf32>
    %96 = tpu.matmul %95, %4, %cst_39 {dimension_numbers = #tpu.dot_dimension_numbers<[1], [0], [0], [1], [0, 0, 1, 1], [], []>} : vector<16x128xbf16>, vector<128x256xbf16>, vector<16x256xf32> -> vector<16x256xf32>
    %97 = vector.shape_cast %96 : vector<16x256xf32> to vector<2x8x256xf32>
    %98 = vector.extract_strided_slice %97 {offsets = [0, 0, 0], sizes = [2, 8, 128], strides = [1, 1, 1]} : vector<2x8x256xf32> to vector<2x8x128xf32>
    %99 = arith.truncf %98 : vector<2x8x128xf32> to vector<2x8x128xbf16>
    %100 = vector.extract_strided_slice %97 {offsets = [0, 0, 128], sizes = [2, 8, 128], strides = [1, 1, 1]} : vector<2x8x256xf32> to vector<2x8x128xf32>
    %101 = arith.truncf %100 : vector<2x8x128xf32> to vector<2x8x128xbf16>
    "tpu.trace_start"() <{level = 10 : i32, message = "bsk,bkd->bsd"}> : () -> ()
    %cst_40 = arith.constant dense<0.000000e+00> : vector<2x8x128xf32>
    %102 = tpu.matmul %9, %99, %cst_40 {dimension_numbers = #tpu.dot_dimension_numbers<[2], [1], [1], [2], [0, 0, 0, 1, 1, 2], [0], [0]>} : vector<2x8x8xbf16>, vector<2x8x128xbf16>, vector<2x8x128xf32> -> vector<2x8x128xf32>
    %cst_41 = arith.constant dense<0.000000e+00> : vector<2x8x128xf32>
    %103 = tpu.matmul %12, %101, %cst_41 {dimension_numbers = #tpu.dot_dimension_numbers<[2], [1], [1], [2], [0, 0, 0, 1, 1, 2], [0], [0]>} : vector<2x8x8xbf16>, vector<2x8x128xbf16>, vector<2x8x128xf32> -> vector<2x8x128xf32>
    "tpu.trace_stop"() : () -> ()
    %104 = arith.subf %102, %103 : vector<2x8x128xf32>
    %105 = vector.shape_cast %104 : vector<2x8x128xf32> to vector<16x128xf32>
    %106 = arith.addf %105, %94 : vector<16x128xf32>
    %cst_42 = arith.constant dense<0.000000e+00> : vector<16xf32>
    %107 = vector.multi_reduction <add>, %106, %cst_42 [1] : vector<16x128xf32> to vector<16xf32>
    %108 = vector.shape_cast %107 : vector<16xf32> to vector<16x1xf32>
    %cst_43 = arith.constant 1.280000e+02 : f32
    %109 = vector.broadcast %cst_43 : f32 to vector<16x1xf32>
    %110 = arith.divf %108, %109 : vector<16x1xf32>
    %111 = arith.mulf %106, %106 : vector<16x128xf32>
    %cst_44 = arith.constant dense<0.000000e+00> : vector<16xf32>
    %112 = vector.multi_reduction <add>, %111, %cst_44 [1] : vector<16x128xf32> to vector<16xf32>
    %113 = vector.shape_cast %112 : vector<16xf32> to vector<16x1xf32>
    %cst_45 = arith.constant 1.280000e+02 : f32
    %114 = vector.broadcast %cst_45 : f32 to vector<16x1xf32>
    %115 = arith.divf %113, %114 : vector<16x1xf32>
    %116 = arith.mulf %110, %110 : vector<16x1xf32>
    %117 = arith.subf %115, %116 : vector<16x1xf32>
    %cst_46 = arith.constant 0.000000e+00 : f32
    %118 = vector.broadcast %cst_46 : f32 to vector<16x1xf32>
    %119 = arith.maximumf %117, %118 : vector<16x1xf32>
    %120 = vector.broadcast %110 : vector<16x1xf32> to vector<16x128xf32>
    %121 = arith.subf %106, %120 : vector<16x128xf32>
    %cst_47 = arith.constant 9.99999974E-6 : f32
    %122 = vector.broadcast %cst_47 : f32 to vector<16x1xf32>
    %123 = arith.addf %119, %122 : vector<16x1xf32>
    %124 = math.rsqrt %123 : vector<16x1xf32>
    %125 = vector.broadcast %124 : vector<16x1xf32> to vector<16x128xf32>
    %126 = arith.mulf %121, %125 : vector<16x128xf32>
    %127 = vector.broadcast %0 : vector<1x128xf32> to vector<16x128xf32>
    %128 = arith.mulf %126, %127 : vector<16x128xf32>
    %129 = vector.broadcast %1 : vector<1x128xf32> to vector<16x128xf32>
    %130 = arith.addf %128, %129 : vector<16x128xf32>
    %131 = arith.truncf %130 : vector<16x128xf32> to vector<16x128xbf16>
    %cst_48 = arith.constant dense<0.000000e+00> : vector<16x256xf32>
    %132 = tpu.matmul %131, %5, %cst_48 {dimension_numbers = #tpu.dot_dimension_numbers<[1], [0], [0], [1], [0, 0, 1, 1], [], []>} : vector<16x128xbf16>, vector<128x256xbf16>, vector<16x256xf32> -> vector<16x256xf32>
    %133 = vector.broadcast %2 : vector<1x256xf32> to vector<16x256xf32>
    %134 = arith.addf %132, %133 : vector<16x256xf32>
    %cst_49 = arith.constant 5.000000e-01 : f32
    %135 = vector.broadcast %cst_49 : f32 to vector<16x256xf32>
    %136 = arith.mulf %135, %134 : vector<16x256xf32>
    %cst_50 = arith.constant 2.000000e+00 : f32
    %137 = math.sqrt %cst_50 : f32
    %138 = vector.broadcast %137 : f32 to vector<16x256xf32>
    %139 = arith.divf %134, %138 : vector<16x256xf32>
    %140 = math.erf %139 : vector<16x256xf32>
    %cst_51 = arith.constant 1.000000e+00 : f32
    %141 = vector.broadcast %cst_51 : f32 to vector<16x256xf32>
    %142 = arith.addf %141, %140 : vector<16x256xf32>
    %143 = arith.mulf %136, %142 : vector<16x256xf32>
    %144 = arith.truncf %143 : vector<16x256xf32> to vector<16x256xbf16>
    %cst_52 = arith.constant dense<0.000000e+00> : vector<16x128xf32>
    %145 = tpu.matmul %144, %6, %cst_52 {dimension_numbers = #tpu.dot_dimension_numbers<[1], [0], [0], [1], [0, 0, 1, 1], [], []>} : vector<16x256xbf16>, vector<256x128xbf16>, vector<16x128xf32> -> vector<16x128xf32>
    %146 = vector.broadcast %3 : vector<1x128xf32> to vector<16x128xf32>
    %147 = arith.addf %145, %146 : vector<16x128xf32>
    %148 = arith.addf %147, %94 : vector<16x128xf32>
    %cst_53 = arith.constant dense<0.000000e+00> : vector<16xf32>
    %149 = vector.multi_reduction <add>, %148, %cst_53 [1] : vector<16x128xf32> to vector<16xf32>
    %150 = vector.shape_cast %149 : vector<16xf32> to vector<16x1xf32>
    %cst_54 = arith.constant 1.280000e+02 : f32
    %151 = vector.broadcast %cst_54 : f32 to vector<16x1xf32>
    %152 = arith.divf %150, %151 : vector<16x1xf32>
    %153 = arith.mulf %148, %148 : vector<16x128xf32>
    %cst_55 = arith.constant dense<0.000000e+00> : vector<16xf32>
    %154 = vector.multi_reduction <add>, %153, %cst_55 [1] : vector<16x128xf32> to vector<16xf32>
    %155 = vector.shape_cast %154 : vector<16xf32> to vector<16x1xf32>
    %cst_56 = arith.constant 1.280000e+02 : f32
    %156 = vector.broadcast %cst_56 : f32 to vector<16x1xf32>
    %157 = arith.divf %155, %156 : vector<16x1xf32>
    %158 = arith.mulf %152, %152 : vector<16x1xf32>
    %159 = arith.subf %157, %158 : vector<16x1xf32>
    %cst_57 = arith.constant 0.000000e+00 : f32
    %160 = vector.broadcast %cst_57 : f32 to vector<16x1xf32>
    %161 = arith.maximumf %159, %160 : vector<16x1xf32>
    %162 = vector.broadcast %152 : vector<16x1xf32> to vector<16x128xf32>
    %163 = arith.subf %148, %162 : vector<16x128xf32>
    %cst_58 = arith.constant 9.99999974E-6 : f32
    %164 = vector.broadcast %cst_58 : f32 to vector<16x1xf32>
    %165 = arith.addf %161, %164 : vector<16x1xf32>
    %166 = math.rsqrt %165 : vector<16x1xf32>
    %167 = vector.broadcast %166 : vector<16x1xf32> to vector<16x128xf32>
    %168 = arith.mulf %163, %167 : vector<16x128xf32>
    %169 = vector.broadcast %0 : vector<1x128xf32> to vector<16x128xf32>
    %170 = arith.mulf %168, %169 : vector<16x128xf32>
    %171 = vector.broadcast %1 : vector<1x128xf32> to vector<16x128xf32>
    %172 = arith.addf %170, %171 : vector<16x128xf32>
    %173 = vector.shape_cast %172 : vector<16x128xf32> to vector<2x8x128xf32>
    %c0_59 = arith.constant 0 : index
    %c0_60 = arith.constant 0 : index
    %c0_61 = arith.constant 0 : index
    %174 = vector.load %arg11[%c0_59, %c0_60, %c0_61] : memref<2x8x128xf32, #tpu.memory_space<vmem>>, vector<2x8x128xf32>
    tpu.vector_store %arg11[%c0_59, %c0_60, %c0_61], %173 {strides = array<i32>} : memref<2x8x128xf32, #tpu.memory_space<vmem>>, vector<2x8x128xf32>,
    return
  }
  func.func @transform_0(%arg0: i32) -> (i32, i32, i32) {
    %c0_i32 = arith.constant 0 : i32
    %c0_i32_0 = arith.constant 0 : i32
    %c0_i32_1 = arith.constant 0 : i32
    return %arg0, %c0_i32, %c0_i32_0 : i32, i32, i32
  }
  func.func @transform_1(%arg0: i32) -> (i32, i32) {
    %c0_i32 = arith.constant 0 : i32
    %c0_i32_0 = arith.constant 0 : i32
    %c0_i32_1 = arith.constant 0 : i32
    return %c0_i32, %c0_i32_0 : i32, i32
  }
  func.func @transform_2(%arg0: i32) -> (i32, i32) {
    %c0_i32 = arith.constant 0 : i32
    %c0_i32_0 = arith.constant 0 : i32
    %c0_i32_1 = arith.constant 0 : i32
    return %c0_i32, %c0_i32_0 : i32, i32
  }
  func.func @transform_3(%arg0: i32) -> (i32, i32) {
    %c0_i32 = arith.constant 0 : i32
    %c0_i32_0 = arith.constant 0 : i32
    %c0_i32_1 = arith.constant 0 : i32
    return %c0_i32, %c0_i32_0 : i32, i32
  }
  func.func @transform_4(%arg0: i32) -> (i32, i32) {
    %c0_i32 = arith.constant 0 : i32
    %c0_i32_0 = arith.constant 0 : i32
    %c0_i32_1 = arith.constant 0 : i32
    return %c0_i32, %c0_i32_0 : i32, i32
  }
  func.func @transform_5(%arg0: i32) -> (i32, i32) {
    %c0_i32 = arith.constant 0 : i32
    %c0_i32_0 = arith.constant 0 : i32
    %c0_i32_1 = arith.constant 0 : i32
    return %c0_i32, %c0_i32_0 : i32, i32
  }
  func.func @transform_6(%arg0: i32) -> (i32, i32) {
    %c0_i32 = arith.constant 0 : i32
    %c0_i32_0 = arith.constant 0 : i32
    %c0_i32_1 = arith.constant 0 : i32
    return %c0_i32, %c0_i32_0 : i32, i32
  }
  func.func @transform_7(%arg0: i32) -> (i32, i32) {
    %c0_i32 = arith.constant 0 : i32
    %c0_i32_0 = arith.constant 0 : i32
    %c0_i32_1 = arith.constant 0 : i32
    return %c0_i32, %c0_i32_0 : i32, i32
  }
  func.func @transform_8(%arg0: i32) -> (i32, i32) {
    %c0_i32 = arith.constant 0 : i32
    %c0_i32_0 = arith.constant 0 : i32
    %c0_i32_1 = arith.constant 0 : i32
    return %c0_i32, %c0_i32_0 : i32, i32
  }
  func.func @transform_9(%arg0: i32) -> (i32, i32) {
    %c0_i32 = arith.constant 0 : i32
    %c0_i32_0 = arith.constant 0 : i32
    %c0_i32_1 = arith.constant 0 : i32
    return %c0_i32, %c0_i32_0 : i32, i32
  }
  func.func @transform_10(%arg0: i32) -> (i32, i32, i32) {
    %c0_i32 = arith.constant 0 : i32
    %c0_i32_0 = arith.constant 0 : i32
    %c0_i32_1 = arith.constant 0 : i32
    return %arg0, %c0_i32, %c0_i32_0 : i32, i32, i32
  }
}

</mosaic_0001>

<llo_original>
// kernel: tpu_custom_call.1
$region0: #{tpu_custom_call.1}
  #allocation0 [shape = 'u32[]', space=smem, size = 0x4, offset = 0x4, fixed_abs, tag = 'smem constant byte address 0x4 - core index']
  #allocation1 [shape = 'u32[72,128]{1,0:T(1,128)}', space=vmem, size = 0x9000, scoped, tag = 'internal scratch']
  %s0 = inlined_call_operand.hbm [shape: f32[4,8,128], index: 0, kind: input, shape index: {}]
  %s1 = inlined_call_operand.hbm [shape: bf16[8,8], index: 1, kind: input, shape index: {}]
  %s2 = inlined_call_operand.hbm [shape: bf16[8,8], index: 2, kind: input, shape index: {}]
  %s3 = inlined_call_operand.hbm [shape: bf16[128,256], index: 3, kind: input, shape index: {}]
  %s4 = inlined_call_operand.vmem [shape: f32[1,128], index: 4, kind: input, shape index: {}]
  %s5 = inlined_call_operand.vmem [shape: f32[1,128], index: 5, kind: input, shape index: {}]
  %s6 = inlined_call_operand.hbm [shape: bf16[128,256], index: 6, kind: input, shape index: {}]
  %s7 = inlined_call_operand.vmem [shape: f32[1,256], index: 7, kind: input, shape index: {}]
  %s8 = inlined_call_operand.hbm [shape: bf16[256,128], index: 8, kind: input, shape index: {}]
  %s9 = inlined_call_operand.vmem [shape: f32[1,128], index: 9, kind: input, shape index: {}]
  %s10 = inlined_call_operand.hbm [shape: f32[4,8,128], index: 10, kind: output, shape index: {}]
  %s11 = sld [smem:[#allocation0]]
  $region97: #{tpu_custom_call.1} parent=0
    _
  %s13 = ssub.s32 1, %s11
  %s14 = scalar_select 0, %s13, %s11
  $region1: #{tpu_custom_call.1} parent=0
    #allocation2 [shape = 'u8[16384]{0}', space=vmem, size = 0x4000, scoped, tag = 'input window, operand 0']
    #allocation3 [shape = 's32[2]{0}', space=sflag, size = 0x8, scoped, tag = 'scoped memory for tpu_custom_call.1']
    #allocation4 [shape = 's32[2]{0}', space=sflag, size = 0x8, scoped, tag = 'scoped memory for tpu_custom_call.1']
    #allocation5 [shape = 'u8[2048]{0}', space=vmem, size = 0x800, scoped, tag = 'input window, operand 1, single buffered']
    #allocation6 [shape = 's32[1]{0}', space=sflag, size = 0x4, scoped, tag = 'scoped memory for tpu_custom_call.1']
    #allocation7 [shape = 'u8[2048]{0}', space=vmem, size = 0x800, scoped, tag = 'input window, operand 2, single buffered']
    #allocation8 [shape = 'u8[65536]{0}', space=vmem, size = 0x10000, scoped, tag = 'input window, operand 3, single buffered']
    #allocation9 [shape = 's32[1]{0}', space=sflag, size = 0x4, scoped, tag = 'scoped memory for tpu_custom_call.1']
    #allocation10 [shape = 'u8[65536]{0}', space=vmem, size = 0x10000, scoped, tag = 'input window, operand 6, single buffered']
    #allocation11 [shape = 'u8[65536]{0}', space=vmem, size = 0x10000, scoped, tag = 'input window, operand 8, single buffered']
    #allocation12 [shape = 's32[1]{0}', space=sflag, size = 0x4, scoped, tag = 'scoped memory for tpu_custom_call.1']
    #allocation13 [shape = 'u8[16384]{0}', space=vmem, size = 0x4000, scoped, tag = 'output window, operand 0']
    %15 = vsyncpa [#allocation3], 0
    %s16 = scalar_lea.sflag [#allocation3], 1
    %17 = vsyncpa %s16, 0
    %18 = vsyncpa [#allocation6], 0
    %19 = vsyncpa [#allocation9], 0
    %20 = vsyncpa [#allocation12], 0
    %21 = vsyncpa [#allocation4], 0
    %s22 = scalar_lea.sflag [#allocation4], 1
    %23 = vsyncpa %s22, 0
    loop: start=0, step=1, limit=4
    $region2: #{tpu_custom_call.1} parent=1 // loop_pre_header
      _
    $region3: #{tpu_custom_call.1} parent=1 // loop_header
      %s25 = sphi 0, %s29
      %p26 = scmp.ge.s32.totalorder %s25, 4
      %s35 = sphi 0, %s37
      %s38 = sphi 0, %s35
      %s39 = sphi 0, %s38
      %s55 = sphi 0, %s39
      %s59 = sphi 0, %s59
      %s61 = sphi 0, %s59
      %s62 = sphi 0, %s61
      %s76 = sphi 0, %s62
      %s80 = sphi 0, %s80
      %s82 = sphi 0, %s80
      %s83 = sphi 0, %s82
      %s97 = sphi 0, %s83
      %s101 = sphi 0, %s101
      %s103 = sphi 0, %s101
      %s104 = sphi 0, %s103
      %s118 = sphi 0, %s104
      %s122 = sphi 0, %s122
      %s124 = sphi 0, %s122
      %s125 = sphi 0, %s124
      %s139 = sphi 0, %s125
      %s143 = sphi 0, %s143
      %s145 = sphi 0, %s143
      %s146 = sphi 0, %s145
      %s160 = sphi 0, %s146
      %s164 = sphi 0, %s164
      %s166 = sphi 0, %s164
      %s167 = sphi 0, %s166
      %s181 = sphi 0, %s167
      %s185 = sphi 0, %s185
      %s187 = sphi 0, %s185
      %s188 = sphi 0, %s187
      %s202 = sphi 0, %s188
      %s206 = sphi 0, %s206
      %s208 = sphi 0, %s206
      %s209 = sphi 0, %s208
      %s223 = sphi 0, %s209
      %s227 = sphi 0, %s227
      %s229 = sphi 0, %s227
      %s230 = sphi 0, %s229
      %s244 = sphi 0, %s230
      %s250 = sphi 0, %s252
      %s253 = sphi 0, %s250
      %s254 = sphi 0, %s253
      %s270 = sphi 0, %s254
    $region4: #{tpu_custom_call.1} parent=1 // loop_header_branch
      %28 = sbr.rel (%p26) target = $region8
    $region5: #{tpu_custom_call.1} parent=1 // loop_body
      %s30 = ssub.s32 %s25, 1
      %s31 = ssub.s32 %s25, 2
      %s32 = sadd.s32 %s25, 1
      %s33 = ssub.s32 %s25, %s32
      %p34 = scmp.eq.s32.totalorder %s33, 0
      %s36 = sadd.s32 %s35, 1
      %s37 = scalar_select %p34, %s35, %s36
      %p40 = pneg %p34
      %p41 = scmp.eq.s32.totalorder %s25, 1
      %p42 = por %p40, %p41
      %p43 = scmp.ne.s32.totalorder %s35, %s38
      %p44 = scmp.eq.s32.totalorder %s25, 0
      %p45 = por %p43, %p44
      %p46 = scmp.ne.s32.totalorder %s35, %s38
      %p47 = scmp.eq.s32.totalorder %s30, 1
      %p48 = por %p46, %p47
      %p49 = scmp.ne.s32.totalorder %s38, %s39
      %p50 = scmp.eq.s32.totalorder %s30, 0
      %p51 = por %p49, %p50
      %p52 = scmp.ne.s32.totalorder %s38, %s39
      %p53 = scmp.eq.s32.totalorder %s31, 1
      %p54 = por %p52, %p53
      %p56 = scmp.ne.s32.totalorder %s39, %s55
      %p57 = scmp.eq.s32.totalorder %s31, 0
      %p58 = por %p56, %p57
      %s60 = sadd.s32 %s59, 1
      %p63 = scmp.eq.s32.totalorder %s25, 1
      %p64 = scmp.ne.s32.totalorder %s59, %s61
      %p65 = scmp.eq.s32.totalorder %s25, 0
      %p66 = por %p64, %p65
      %p67 = scmp.ne.s32.totalorder %s59, %s61
      %p68 = scmp.eq.s32.totalorder %s30, 1
      %p69 = por %p67, %p68
      %p70 = scmp.ne.s32.totalorder %s61, %s62
      %p71 = scmp.eq.s32.totalorder %s30, 0
      %p72 = por %p70, %p71
      %p73 = scmp.ne.s32.totalorder %s61, %s62
      %p74 = scmp.eq.s32.totalorder %s31, 1
      %p75 = por %p73, %p74
      %p77 = scmp.ne.s32.totalorder %s62, %s76
      %p78 = scmp.eq.s32.totalorder %s31, 0
      %p79 = por %p77, %p78
      %s81 = sadd.s32 %s80, 1
      %p84 = scmp.eq.s32.totalorder %s25, 1
      %p85 = scmp.ne.s32.totalorder %s80, %s82
      %p86 = scmp.eq.s32.totalorder %s25, 0
      %p87 = por %p85, %p86
      %p88 = scmp.ne.s32.totalorder %s80, %s82
      %p89 = scmp.eq.s32.totalorder %s30, 1
      %p90 = por %p88, %p89
      %p91 = scmp.ne.s32.totalorder %s82, %s83
      %p92 = scmp.eq.s32.totalorder %s30, 0
      %p93 = por %p91, %p92
      %p94 = scmp.ne.s32.totalorder %s82, %s83
      %p95 = scmp.eq.s32.totalorder %s31, 1
      %p96 = por %p94, %p95
      %p98 = scmp.ne.s32.totalorder %s83, %s97
      %p99 = scmp.eq.s32.totalorder %s31, 0
      %p100 = por %p98, %p99
      %s102 = sadd.s32 %s101, 1
      %p105 = scmp.eq.s32.totalorder %s25, 1
      %p106 = scmp.ne.s32.totalorder %s101, %s103
      %p107 = scmp.eq.s32.totalorder %s25, 0
      %p108 = por %p106, %p107
      %p109 = scmp.ne.s32.totalorder %s101, %s103
      %p110 = scmp.eq.s32.totalorder %s30, 1
      %p111 = por %p109, %p110
      %p112 = scmp.ne.s32.totalorder %s103, %s104
      %p113 = scmp.eq.s32.totalorder %s30, 0
      %p114 = por %p112, %p113
      %p115 = scmp.ne.s32.totalorder %s103, %s104
      %p116 = scmp.eq.s32.totalorder %s31, 1
      %p117 = por %p115, %p116
      %p119 = scmp.ne.s32.totalorder %s104, %s118
      %p120 = scmp.eq.s32.totalorder %s31, 0
      %p121 = por %p119, %p120
      %s123 = sadd.s32 %s122, 1
      %p126 = scmp.eq.s32.totalorder %s25, 1
      %p127 = scmp.ne.s32.totalorder %s122, %s124
      %p128 = scmp.eq.s32.totalorder %s25, 0
      %p129 = por %p127, %p128
      %p130 = scmp.ne.s32.totalorder %s122, %s124
      %p131 = scmp.eq.s32.totalorder %s30, 1
      %p132 = por %p130, %p131
      %p133 = scmp.ne.s32.totalorder %s124, %s125
      %p134 = scmp.eq.s32.totalorder %s30, 0
      %p135 = por %p133, %p134
      %p136 = scmp.ne.s32.totalorder %s124, %s125
      %p137 = scmp.eq.s32.totalorder %s31, 1
      %p138 = por %p136, %p137
      %p140 = scmp.ne.s32.totalorder %s125, %s139
      %p141 = scmp.eq.s32.totalorder %s31, 0
      %p142 = por %p140, %p141
      %s144 = sadd.s32 %s143, 1
      %p147 = scmp.eq.s32.totalorder %s25, 1
      %p148 = scmp.ne.s32.totalorder %s143, %s145
      %p149 = scmp.eq.s32.totalorder %s25, 0
      %p150 = por %p148, %p149
      %p151 = scmp.ne.s32.totalorder %s143, %s145
      %p152 = scmp.eq.s32.totalorder %s30, 1
      %p153 = por %p151, %p152
      %p154 = scmp.ne.s32.totalorder %s145, %s146
      %p155 = scmp.eq.s32.totalorder %s30, 0
      %p156 = por %p154, %p155
      %p157 = scmp.ne.s32.totalorder %s145, %s146
      %p158 = scmp.eq.s32.totalorder %s31, 1
      %p159 = por %p157, %p158
      %p161 = scmp.ne.s32.totalorder %s146, %s160
      %p162 = scmp.eq.s32.totalorder %s31, 0
      %p163 = por %p161, %p162
      %s165 = sadd.s32 %s164, 1
      %p168 = scmp.eq.s32.totalorder %s25, 1
      %p169 = scmp.ne.s32.totalorder %s164, %s166
      %p170 = scmp.eq.s32.totalorder %s25, 0
      %p171 = por %p169, %p170
      %p172 = scmp.ne.s32.totalorder %s164, %s166
      %p173 = scmp.eq.s32.totalorder %s30, 1
      %p174 = por %p172, %p173
      %p175 = scmp.ne.s32.totalorder %s166, %s167
      %p176 = scmp.eq.s32.totalorder %s30, 0
      %p177 = por %p175, %p176
      %p178 = scmp.ne.s32.totalorder %s166, %s167
      %p179 = scmp.eq.s32.totalorder %s31, 1
      %p180 = por %p178, %p179
      %p182 = scmp.ne.s32.totalorder %s167, %s181
      %p183 = scmp.eq.s32.totalorder %s31, 0
      %p184 = por %p182, %p183
      %s186 = sadd.s32 %s185, 1
      %p189 = scmp.eq.s32.totalorder %s25, 1
      %p190 = scmp.ne.s32.totalorder %s185, %s187
      %p191 = scmp.eq.s32.totalorder %s25, 0
      %p192 = por %p190, %p191
      %p193 = scmp.ne.s32.totalorder %s185, %s187
      %p194 = scmp.eq.s32.totalorder %s30, 1
      %p195 = por %p193, %p194
      %p196 = scmp.ne.s32.totalorder %s187, %s188
      %p197 = scmp.eq.s32.totalorder %s30, 0
      %p198 = por %p196, %p197
      %p199 = scmp.ne.s32.totalorder %s187, %s188
      %p200 = scmp.eq.s32.totalorder %s31, 1
      %p201 = por %p199, %p200
      %p203 = scmp.ne.s32.totalorder %s188, %s202
      %p204 = scmp.eq.s32.totalorder %s31, 0
      %p205 = por %p203, %p204
      %s207 = sadd.s32 %s206, 1
      %p210 = scmp.eq.s32.totalorder %s25, 1
      %p211 = scmp.ne.s32.totalorder %s206, %s208
      %p212 = scmp.eq.s32.totalorder %s25, 0
      %p213 = por %p211, %p212
      %p214 = scmp.ne.s32.totalorder %s206, %s208
      %p215 = scmp.eq.s32.totalorder %s30, 1
      %p216 = por %p214, %p215
      %p217 = scmp.ne.s32.totalorder %s208, %s209
      %p218 = scmp.eq.s32.totalorder %s30, 0
      %p219 = por %p217, %p218
      %p220 = scmp.ne.s32.totalorder %s208, %s209
      %p221 = scmp.eq.s32.totalorder %s31, 1
      %p222 = por %p220, %p221
      %p224 = scmp.ne.s32.totalorder %s209, %s223
      %p225 = scmp.eq.s32.totalorder %s31, 0
      %p226 = por %p224, %p225
      %s228 = sadd.s32 %s227, 1
      %p231 = scmp.eq.s32.totalorder %s25, 1
      %p232 = scmp.ne.s32.totalorder %s227, %s229
      %p233 = scmp.eq.s32.totalorder %s25, 0
      %p234 = por %p232, %p233
      %p235 = scmp.ne.s32.totalorder %s227, %s229
      %p236 = scmp.eq.s32.totalorder %s30, 1
      %p237 = por %p235, %p236
      %p238 = scmp.ne.s32.totalorder %s229, %s230
      %p239 = scmp.eq.s32.totalorder %s30, 0
      %p240 = por %p238, %p239
      %p241 = scmp.ne.s32.totalorder %s229, %s230
      %p242 = scmp.eq.s32.totalorder %s31, 1
      %p243 = por %p241, %p242
      %p245 = scmp.ne.s32.totalorder %s230, %s244
      %p246 = scmp.eq.s32.totalorder %s31, 0
      %p247 = por %p245, %p246
      %s248 = ssub.s32 %s25, %s32
      %p249 = scmp.eq.s32.totalorder %s248, 0
      %s251 = sadd.s32 %s250, 1
      %s252 = scalar_select %p249, %s250, %s251
      %p255 = pneg %p249
      %p256 = scmp.eq.s32.totalorder %s25, 1
      %p257 = por %p255, %p256
      %p258 = scmp.ne.s32.totalorder %s250, %s253
      %p259 = scmp.eq.s32.totalorder %s25, 0
      %p260 = por %p258, %p259
      %p261 = scmp.ne.s32.totalorder %s250, %s253
      %p262 = scmp.eq.s32.totalorder %s30, 1
      %p263 = por %p261, %p262
      %p264 = scmp.ne.s32.totalorder %s253, %s254
      %p265 = scmp.eq.s32.totalorder %s30, 0
      %p266 = por %p264, %p265
      %p267 = scmp.ne.s32.totalorder %s253, %s254
      %p268 = scmp.eq.s32.totalorder %s31, 1
      %p269 = por %p267, %p268
      %p271 = scmp.ne.s32.totalorder %s254, %s270
      %p272 = scmp.eq.s32.totalorder %s31, 0
      %p273 = por %p271, %p272
      %p274 = scmp.le.s32.totalorder 1, %s25
      %p275 = scmp.lt.s32.totalorder %s25, 3
      %p276 = pnand %p274, %p275
      %p277 = pneg %p276
      // Predicated region
      $region9: #{tpu_custom_call.1} parent=5 // pred_check
        _
      $region10: #{tpu_custom_call.1} parent=5 // pred_check_branch
        %279 = sbr.rel (%p276) target = $region12
      $region11: #{tpu_custom_call.1} parent=5 // pred_region
        %s280 = ssub.s32 %s25, 1
        // Predicated region
        $region13: #{tpu_custom_call.1} parent=11 // pred_check
          %p281 = pneg %p72
        $region14: #{tpu_custom_call.1} parent=11 // pred_check_branch
          %283 = sbr.rel (%p281) target = $region16
        $region15: #{tpu_custom_call.1} parent=11 // pred_region
          %285 = vsyncadd [#allocation6], 0
          %s287 = sshll.u32 %s1, 4
          %s288 = int_to_ptr.hbm [resolvable:$true] %s287
          %s289 = sshll.u32 [#allocation5], 4
          %s290 = int_to_ptr.vmem [resolvable:$true] %s289
          %292 = dma.hbm_to_vmem [thread:$0]  %s288, 64, %s290, [#allocation6]
        $region16: #{tpu_custom_call.1} parent=11 // pred_fallthru
          _
        // Predicated region
        $region17: #{tpu_custom_call.1} parent=11 // pred_check
          %p293 = pneg %p93
        $region18: #{tpu_custom_call.1} parent=11 // pred_check_branch
          %295 = sbr.rel (%p293) target = $region20
        $region19: #{tpu_custom_call.1} parent=11 // pred_region
          %297 = vsyncadd [#allocation6], 0
          %s299 = sshll.u32 %s2, 4
          %s300 = int_to_ptr.hbm [resolvable:$true] %s299
          %s301 = sshll.u32 [#allocation7], 4
          %s302 = int_to_ptr.vmem [resolvable:$true] %s301
          %304 = dma.hbm_to_vmem [thread:$0]  %s300, 64, %s302, [#allocation6]
        $region20: #{tpu_custom_call.1} parent=11 // pred_fallthru
          _
        // Predicated region
        $region21: #{tpu_custom_call.1} parent=11 // pred_check
          %p305 = pneg %p114
        $region22: #{tpu_custom_call.1} parent=11 // pred_check_branch
          %307 = sbr.rel (%p305) target = $region24
        $region23: #{tpu_custom_call.1} parent=11 // pred_region
          %309 = vsyncadd [#allocation9], 0
          %s310 = sshll.u32 %s3, 4
          %s311 = int_to_ptr.hbm [resolvable:$true] %s310
          %s312 = sshll.u32 [#allocation8], 4
          %s313 = int_to_ptr.vmem [resolvable:$true] %s312
          %318 = dma.hbm_to_vmem [thread:$0]  %s311, 2048, %s313, [#allocation9], 128, 128, 8
        $region24: #{tpu_custom_call.1} parent=11 // pred_fallthru
          _
        // Predicated region
        $region25: #{tpu_custom_call.1} parent=11 // pred_check
          %p319 = pneg %p135
        $region26: #{tpu_custom_call.1} parent=11 // pred_check_branch
          %321 = sbr.rel (%p319) target = $region28
        $region27: #{tpu_custom_call.1} parent=11 // pred_region
          _
        $region28: #{tpu_custom_call.1} parent=11 // pred_fallthru
          _
        // Predicated region
        $region29: #{tpu_custom_call.1} parent=11 // pred_check
          %p322 = pneg %p156
        $region30: #{tpu_custom_call.1} parent=11 // pred_check_branch
          %324 = sbr.rel (%p322) target = $region32
        $region31: #{tpu_custom_call.1} parent=11 // pred_region
          _
        $region32: #{tpu_custom_call.1} parent=11 // pred_fallthru
          _
        // Predicated region
        $region33: #{tpu_custom_call.1} parent=11 // pred_check
          %p325 = pneg %p177
        $region34: #{tpu_custom_call.1} parent=11 // pred_check_branch
          %327 = sbr.rel (%p325) target = $region36
        $region35: #{tpu_custom_call.1} parent=11 // pred_region
          %329 = vsyncadd [#allocation9], 0
          %s330 = sshll.u32 %s6, 4
          %s331 = int_to_ptr.hbm [resolvable:$true] %s330
          %s332 = sshll.u32 [#allocation10], 4
          %s333 = int_to_ptr.vmem [resolvable:$true] %s332
          %338 = dma.hbm_to_vmem [thread:$0]  %s331, 2048, %s333, [#allocation9], 128, 128, 8
        $region36: #{tpu_custom_call.1} parent=11 // pred_fallthru
          _
        // Predicated region
        $region37: #{tpu_custom_call.1} parent=11 // pred_check
          %p339 = pneg %p198
        $region38: #{tpu_custom_call.1} parent=11 // pred_check_branch
          %341 = sbr.rel (%p339) target = $region40
        $region39: #{tpu_custom_call.1} parent=11 // pred_region
          _
        $region40: #{tpu_custom_call.1} parent=11 // pred_fallthru
          _
        // Predicated region
        $region41: #{tpu_custom_call.1} parent=11 // pred_check
          %p342 = pneg %p219
        $region42: #{tpu_custom_call.1} parent=11 // pred_check_branch
          %344 = sbr.rel (%p342) target = $region44
        $region43: #{tpu_custom_call.1} parent=11 // pred_region
          %346 = vsyncadd [#allocation12], 0
          %s347 = sshll.u32 %s8, 4
          %s348 = int_to_ptr.hbm [resolvable:$true] %s347
          %s349 = sshll.u32 [#allocation11], 4
          %s350 = int_to_ptr.vmem [resolvable:$true] %s349
          %355 = dma.hbm_to_vmem [thread:$0]  %s348, 2048, %s350, [#allocation12], 64, 64, 4
        $region44: #{tpu_custom_call.1} parent=11 // pred_fallthru
          _
        // Predicated region
        $region45: #{tpu_custom_call.1} parent=11 // pred_check
          %p356 = pneg %p240
        $region46: #{tpu_custom_call.1} parent=11 // pred_check_branch
          %358 = sbr.rel (%p356) target = $region48
        $region47: #{tpu_custom_call.1} parent=11 // pred_region
          _
        $region48: #{tpu_custom_call.1} parent=11 // pred_fallthru
          _
      $region12: #{tpu_custom_call.1} parent=5 // pred_fallthru
        _
      %p359 = scmp.lt.s32.totalorder %s25, 2
      // Predicated region
      $region49: #{tpu_custom_call.1} parent=5 // pred_check
        %p360 = pneg %p359
      $region50: #{tpu_custom_call.1} parent=5 // pred_check_branch
        %362 = sbr.rel (%p360) target = $region52
      $region51: #{tpu_custom_call.1} parent=5 // pred_region
        // Predicated region
        $region53: #{tpu_custom_call.1} parent=51 // pred_check
          %p363 = pneg %p45
        $region54: #{tpu_custom_call.1} parent=51 // pred_check_branch
          %365 = sbr.rel (%p363) target = $region56
        $region55: #{tpu_custom_call.1} parent=51 // pred_region
          %s366 = sand.u32 %s35, 1
          %s367 = scalar_lea.sflag [#allocation3], %s366
          %s368 = sand.u32 %s35, 1
          %s369 = smul.addr %s368, 16
          %s370 = scalar_lea.vmem [#allocation2], %s369
          %s371 = smul.u32 2, %s25
          %373 = vsyncadd %s367, 0
          %s374 = smul.addr %s371, 8
          %s375 = scalar_lea.hbm %s0, %s374
          %s376 = sshll.u32 %s375, 4
          %s377 = int_to_ptr.hbm [resolvable:$true] %s376
          %s378 = sshll.u32 %s370, 4
          %s379 = int_to_ptr.vmem [resolvable:$true] %s378
          %384 = dma.hbm_to_vmem [thread:$0]  %s377, 256, %s379, %s367, 128, 128, 8
        $region56: #{tpu_custom_call.1} parent=51 // pred_fallthru
          _
      $region52: #{tpu_custom_call.1} parent=5 // pred_fallthru
        _
      %p385 = scmp.le.s32.totalorder 1, %s25
      %p386 = scmp.lt.s32.totalorder %s25, 3
      %p387 = pnand %p385, %p386
      %p388 = pneg %p387
      // Predicated region
      $region57: #{tpu_custom_call.1} parent=5 // pred_check
        _
      $region58: #{tpu_custom_call.1} parent=5 // pred_check_branch
        %390 = sbr.rel (%p387) target = $region60
      $region59: #{tpu_custom_call.1} parent=5 // pred_region
        %s391 = ssub.s32 %s25, 1
        %s392 = sand.u32 %s38, 1
        %s393 = scalar_lea.sflag [#allocation3], %s392
        %s394 = sand.u32 %s38, 1
        %s395 = smul.addr %s394, 16
        %s396 = scalar_lea.vmem [#allocation2], %s395
        // Predicated region
        $region61: #{tpu_custom_call.1} parent=59 // pred_check
          %p397 = pneg %p51
        $region62: #{tpu_custom_call.1} parent=59 // pred_check_branch
          %399 = sbr.rel (%p397) target = $region64
        $region63: #{tpu_custom_call.1} parent=59 // pred_region
          %401 = dma.done %s393, 256
        $region64: #{tpu_custom_call.1} parent=59 // pred_fallthru
          _
        // Predicated region
        $region65: #{tpu_custom_call.1} parent=59 // pred_check
          %p402 = pneg %p72
        $region66: #{tpu_custom_call.1} parent=59 // pred_check_branch
          %404 = sbr.rel (%p402) target = $region68
        $region67: #{tpu_custom_call.1} parent=59 // pred_region
          %406 = dma.done [#allocation6], 64
        $region68: #{tpu_custom_call.1} parent=59 // pred_fallthru
          _
        // Predicated region
        $region69: #{tpu_custom_call.1} parent=59 // pred_check
          %p407 = pneg %p93
        $region70: #{tpu_custom_call.1} parent=59 // pred_check_branch
          %409 = sbr.rel (%p407) target = $region72
        $region71: #{tpu_custom_call.1} parent=59 // pred_region
          %411 = dma.done [#allocation6], 64
        $region72: #{tpu_custom_call.1} parent=59 // pred_fallthru
          _
        // Predicated region
        $region73: #{tpu_custom_call.1} parent=59 // pred_check
          %p412 = pneg %p114
        $region74: #{tpu_custom_call.1} parent=59 // pred_check_branch
          %414 = sbr.rel (%p412) target = $region76
        $region75: #{tpu_custom_call.1} parent=59 // pred_region
          %416 = dma.done [#allocation9], 2048
        $region76: #{tpu_custom_call.1} parent=59 // pred_fallthru
          _
        // Predicated region
        $region77: #{tpu_custom_call.1} parent=59 // pred_check
          %p417 = pneg %p177
        $region78: #{tpu_custom_call.1} parent=59 // pred_check_branch
          %419 = sbr.rel (%p417) target = $region80
        $region79: #{tpu_custom_call.1} parent=59 // pred_region
          %421 = dma.done [#allocation9], 2048
        $region80: #{tpu_custom_call.1} parent=59 // pred_fallthru
          _
        // Predicated region
        $region81: #{tpu_custom_call.1} parent=59 // pred_check
          %p422 = pneg %p219
        $region82: #{tpu_custom_call.1} parent=59 // pred_check_branch
          %424 = sbr.rel (%p422) target = $region84
        $region83: #{tpu_custom_call.1} parent=59 // pred_region
          %426 = dma.done [#allocation12], 2048
        $region84: #{tpu_custom_call.1} parent=59 // pred_fallthru
          _
        %s427 = sand.u32 %s38, 1
        %s428 = scalar_lea.sflag [#allocation3], %s427
        %s429 = sand.u32 %s38, 1
        %s430 = smul.addr %s429, 16
        %s431 = scalar_lea.vmem [#allocation2], %s430
        %p432 = pneg %p51
        %p433 = pneg %p48
        %p434 = pneg %p72
        %p435 = pneg %p69
        %p436 = pneg %p93
        %p437 = pneg %p90
        %p438 = pneg %p114
        %p439 = pneg %p111
        %p440 = pneg %p135
        %p441 = pneg %p132
        %p442 = pneg %p156
        %p443 = pneg %p153
        %p444 = pneg %p177
        %p445 = pneg %p174
        %p446 = pneg %p198
        %p447 = pneg %p195
        %p448 = pneg %p219
        %p449 = pneg %p216
        %p450 = pneg %p240
        %p451 = pneg %p237
        %p452 = pneg %p266
        %p453 = pneg %p263
        %s454 = sand.u32 %s253, 1
        %s455 = scalar_lea.sflag [#allocation4], %s454
        %s456 = sand.u32 %s253, 1
        %s457 = smul.addr %s456, 16
        %s458 = scalar_lea.vmem [#allocation13], %s457
        %s459 = smul.u32 2, %s30
        %s460 = smul.u32 2, %s30
        %v462 = vld [vmem:[%s4] sm:$0x1]
        %v463 = vld [vmem:[%s5] sm:$0x1]
        %v464 = vld [vmem:[%s7] sm:$0x3]
        %v465 = vld [vmem:[%s9] sm:$0x1]
        %v466 = vld [vmem:[#allocation8] sm:$0xff]
        %v467 = vld [vmem:[#allocation8 + $0x8] sm:$0xff]
        %v468 = vld [vmem:[#allocation8 + $0x10] sm:$0xff]
        %v469 = vld [vmem:[#allocation8 + $0x18] sm:$0xff]
        %v470 = vld [vmem:[#allocation8 + $0x20] sm:$0xff]
        %v471 = vld [vmem:[#allocation8 + $0x28] sm:$0xff]
        %v472 = vld [vmem:[#allocation8 + $0x30] sm:$0xff]
        %v473 = vld [vmem:[#allocation8 + $0x38] sm:$0xff]
        %v474 = vld [vmem:[#allocation8 + $0x40] sm:$0xff]
        %v475 = vld [vmem:[#allocation8 + $0x48] sm:$0xff]
        %v476 = vld [vmem:[#allocation8 + $0x50] sm:$0xff]
        %v477 = vld [vmem:[#allocation8 + $0x58] sm:$0xff]
        %v478 = vld [vmem:[#allocation8 + $0x60] sm:$0xff]
        %v479 = vld [vmem:[#allocation8 + $0x68] sm:$0xff]
        %v480 = vld [vmem:[#allocation8 + $0x70] sm:$0xff]
        %v481 = vld [vmem:[#allocation8 + $0x78] sm:$0xff]
        %v482 = vld [vmem:[#allocation10] sm:$0xff]
        %v483 = vld [vmem:[#allocation10 + $0x8] sm:$0xff]
        %v484 = vld [vmem:[#allocation10 + $0x10] sm:$0xff]
        %v485 = vld [vmem:[#allocation10 + $0x18] sm:$0xff]
        %v486 = vld [vmem:[#allocation10 + $0x20] sm:$0xff]
        %v487 = vld [vmem:[#allocation10 + $0x28] sm:$0xff]
        %v488 = vld [vmem:[#allocation10 + $0x30] sm:$0xff]
        %v489 = vld [vmem:[#allocation10 + $0x38] sm:$0xff]
        %v490 = vld [vmem:[#allocation10 + $0x40] sm:$0xff]
        %v491 = vld [vmem:[#allocation10 + $0x48] sm:$0xff]
        %v492 = vld [vmem:[#allocation10 + $0x50] sm:$0xff]
        %v493 = vld [vmem:[#allocation10 + $0x58] sm:$0xff]
        %v494 = vld [vmem:[#allocation10 + $0x60] sm:$0xff]
        %v495 = vld [vmem:[#allocation10 + $0x68] sm:$0xff]
        %v496 = vld [vmem:[#allocation10 + $0x70] sm:$0xff]
        %v497 = vld [vmem:[#allocation10 + $0x78] sm:$0xff]
        %v498 = vld [vmem:[#allocation11] sm:$0xf]
        %v499 = vld [vmem:[#allocation11 + $0x4] sm:$0xf]
        %v500 = vld [vmem:[#allocation11 + $0x8] sm:$0xf]
        %v501 = vld [vmem:[#allocation11 + $0xc] sm:$0xf]
        %v502 = vld [vmem:[#allocation11 + $0x10] sm:$0xf]
        %v503 = vld [vmem:[#allocation11 + $0x14] sm:$0xf]
        %v504 = vld [vmem:[#allocation11 + $0x18] sm:$0xf]
        %v505 = vld [vmem:[#allocation11 + $0x1c] sm:$0xf]
        %v506 = vld [vmem:[#allocation11 + $0x20] sm:$0xf]
        %v507 = vld [vmem:[#allocation11 + $0x24] sm:$0xf]
        %v508 = vld [vmem:[#allocation11 + $0x28] sm:$0xf]
        %v509 = vld [vmem:[#allocation11 + $0x2c] sm:$0xf]
        %v510 = vld [vmem:[#allocation11 + $0x30] sm:$0xf]
        %v511 = vld [vmem:[#allocation11 + $0x34] sm:$0xf]
        %v512 = vld [vmem:[#allocation11 + $0x38] sm:$0xf]
        %v513 = vld [vmem:[#allocation11 + $0x3c] sm:$0xf]
        %v514 = vld [vmem:[#allocation11 + $0x40] sm:$0xf]
        %v515 = vld [vmem:[#allocation11 + $0x44] sm:$0xf]
        %v516 = vld [vmem:[#allocation11 + $0x48] sm:$0xf]
        %v517 = vld [vmem:[#allocation11 + $0x4c] sm:$0xf]
        %v518 = vld [vmem:[#allocation11 + $0x50] sm:$0xf]
        %v519 = vld [vmem:[#allocation11 + $0x54] sm:$0xf]
        %v520 = vld [vmem:[#allocation11 + $0x58] sm:$0xf]
        %v521 = vld [vmem:[#allocation11 + $0x5c] sm:$0xf]
        %v522 = vld [vmem:[#allocation11 + $0x60] sm:$0xf]
        %v523 = vld [vmem:[#allocation11 + $0x64] sm:$0xf]
        %v524 = vld [vmem:[#allocation11 + $0x68] sm:$0xf]
        %v525 = vld [vmem:[#allocation11 + $0x6c] sm:$0xf]
        %v526 = vld [vmem:[#allocation11 + $0x70] sm:$0xf]
        %v527 = vld [vmem:[#allocation11 + $0x74] sm:$0xf]
        %v528 = vld [vmem:[#allocation11 + $0x78] sm:$0xf]
        %v529 = vld [vmem:[#allocation11 + $0x7c] sm:$0xf]
        %v530 = vld [vmem:[#allocation5] sm:$0xf]
        %v531 = vld [vmem:[#allocation7] sm:$0xf]
        %v532 = vld [vmem:[%s396] sm:$0xff]
        %v533 = vld [vmem:[%s396 + $0x8] sm:$0xff]
        %v534 = vpack.c.bf16 %v533, %v532
        %v551 = vunpack.c.l.b16 %v466
        %v552 = vunpack.c.h.b16 %v466
        %v553 = vunpack.c.l.b16 %v467
        %v554 = vunpack.c.h.b16 %v467
        %v555 = vunpack.c.l.b16 %v468
        %v556 = vunpack.c.h.b16 %v468
        %v557 = vunpack.c.l.b16 %v469
        %v558 = vunpack.c.h.b16 %v469
        %v559 = vunpack.c.l.b16 %v470
        %v560 = vunpack.c.h.b16 %v470
        %v561 = vunpack.c.l.b16 %v471
        %v562 = vunpack.c.h.b16 %v471
        %v563 = vunpack.c.l.b16 %v472
        %v564 = vunpack.c.h.b16 %v472
        %v565 = vunpack.c.l.b16 %v473
        %v566 = vunpack.c.h.b16 %v473
        %v567 = vunpack.c.l.b16 %v474
        %v568 = vunpack.c.h.b16 %v474
        %v569 = vunpack.c.l.b16 %v475
        %v570 = vunpack.c.h.b16 %v475
        %v571 = vunpack.c.l.b16 %v476
        %v572 = vunpack.c.h.b16 %v476
        %v573 = vunpack.c.l.b16 %v477
        %v574 = vunpack.c.h.b16 %v477
        %v575 = vunpack.c.l.b16 %v478
        %v576 = vunpack.c.h.b16 %v478
        %v577 = vunpack.c.l.b16 %v479
        %v578 = vunpack.c.h.b16 %v479
        %v579 = vunpack.c.l.b16 %v480
        %v580 = vunpack.c.h.b16 %v480
        %v581 = vunpack.c.l.b16 %v481
        %v582 = vunpack.c.h.b16 %v481
        %v583 = vpack.c.b16 %v553, %v551
        %v584 = vpack.c.b16 %v554, %v552
        %v585 = vpack.c.b16 %v557, %v555
        %v586 = vpack.c.b16 %v558, %v556
        %v587 = vpack.c.b16 %v561, %v559
        %v588 = vpack.c.b16 %v562, %v560
        %v589 = vpack.c.b16 %v565, %v563
        %v590 = vpack.c.b16 %v566, %v564
        %v591 = vpack.c.b16 %v569, %v567
        %v592 = vpack.c.b16 %v570, %v568
        %v593 = vpack.c.b16 %v573, %v571
        %v594 = vpack.c.b16 %v574, %v572
        %v595 = vpack.c.b16 %v577, %v575
        %v596 = vpack.c.b16 %v578, %v576
        %v597 = vpack.c.b16 %v581, %v579
        %v598 = vpack.c.b16 %v582, %v580
        %615 = vmatpush.bf16.msra.mxu0 %v597
        %616 = vmatpush.bf16.msra.mxu0 %v595
        %617 = vmatpush.bf16.msra.mxu0 %v593
        %618 = vmatpush.bf16.msra.mxu0 %v591
        %619 = vmatpush.bf16.msra.mxu0 %v589
        %620 = vmatpush.bf16.msra.mxu0 %v587
        %621 = vmatpush.bf16.msra.mxu0 %v585
        %622 = vmatpush.bf16.msra.mxu0 %v583
        %623 = vmatmul.bf16.gmra.mxu0 %v534
        %v624 = vpop.f32.mrf.mxu0
        %v625 = vadd.f32 0.0, %v624
        %v626 = vpop.f32.mrf.mxu0
        %v627 = vadd.f32 0.0, %v626
        %628 = vdwg.mxu0
        %629 = vmatpush.bf16.msra.mxu0 %v598
        %630 = vmatpush.bf16.msra.mxu0 %v596
        %631 = vmatpush.bf16.msra.mxu0 %v594
        %632 = vmatpush.bf16.msra.mxu0 %v592
        %633 = vmatpush.bf16.msra.mxu0 %v590
        %634 = vmatpush.bf16.msra.mxu0 %v588
        %635 = vmatpush.bf16.msra.mxu0 %v586
        %636 = vmatpush.bf16.msra.mxu0 %v584
        %637 = vmatmul.bf16.gmra.mxu0 %v534
        %v638 = vpop.f32.mrf.mxu0
        %v639 = vadd.f32 0.0, %v638
        %v640 = vpop.f32.mrf.mxu0
        %v641 = vadd.f32 0.0, %v640
        %642 = vdwg.mxu0
        %v643 = vpack.c.bf16 %v625, %v625
        %v644 = vpack.c.bf16 %v627, %v627
        %v645 = vpack.c.bf16 %v639, %v639
        %v646 = vpack.c.bf16 %v641, %v641
        %vm647 = vcmask 64512
        %v649 = vsel %vm647, %v530, 0
        %vm651 = vcmask 1043456
        %v653 = vsel %vm651, %v643, 0
        %655 = vmatpush.bf16.msra.mxu0 0
        %656 = vmatpush.bf16.msra.mxu0 0
        %657 = vmatpush.bf16.msra.mxu0 0
        %658 = vmatpush.bf16.msra.mxu0 0
        %659 = vmatpush.bf16.msra.mxu0 0
        %660 = vmatpush.bf16.msra.mxu0 0
        %661 = vmatpush.bf16.msra.mxu0 0
        %662 = vmatpush.bf16.msra.mxu0 %v653
        %663 = vmatmul.bf16.gmra.mxu0 %v649
        %v664 = vpop.f32.mrf.mxu0
        %v665 = vadd.f32 0.0, %v664
        %v666 = vpop.f32.mrf.mxu0
        %667 = vdwg.mxu0
        %v669 = vsel %vm651, %v644, 0
        %671 = vmatpush.bf16.msra.mxu0 0
        %672 = vmatpush.bf16.msra.mxu0 0
        %673 = vmatpush.bf16.msra.mxu0 0
        %674 = vmatpush.bf16.msra.mxu0 0
        %675 = vmatpush.bf16.msra.mxu0 0
        %676 = vmatpush.bf16.msra.mxu0 0
        %677 = vmatpush.bf16.msra.mxu0 0
        %678 = vmatpush.bf16.msra.mxu0 %v669
        %679 = vmatmul.bf16.gmra.mxu0 %v649
        %v680 = vpop.f32.mrf.mxu0
        %v681 = vadd.f32 0.0, %v680
        %v682 = vpop.f32.mrf.mxu0
        %683 = vdwg.mxu0
        %v685 = vsel %vm647, %v531, 0
        %v688 = vsel %vm651, %v645, 0
        %690 = vmatpush.bf16.msra.mxu0 0
        %691 = vmatpush.bf16.msra.mxu0 0
        %692 = vmatpush.bf16.msra.mxu0 0
        %693 = vmatpush.bf16.msra.mxu0 0
        %694 = vmatpush.bf16.msra.mxu0 0
        %695 = vmatpush.bf16.msra.mxu0 0
        %696 = vmatpush.bf16.msra.mxu0 0
        %697 = vmatpush.bf16.msra.mxu0 %v688
        %698 = vmatmul.bf16.gmra.mxu0 %v685
        %v699 = vpop.f32.mrf.mxu0
        %v700 = vadd.f32 0.0, %v699
        %v701 = vpop.f32.mrf.mxu0
        %702 = vdwg.mxu0
        %v704 = vsel %vm651, %v646, 0
        %706 = vmatpush.bf16.msra.mxu0 0
        %707 = vmatpush.bf16.msra.mxu0 0
        %708 = vmatpush.bf16.msra.mxu0 0
        %709 = vmatpush.bf16.msra.mxu0 0
        %710 = vmatpush.bf16.msra.mxu0 0
        %711 = vmatpush.bf16.msra.mxu0 0
        %712 = vmatpush.bf16.msra.mxu0 0
        %713 = vmatpush.bf16.msra.mxu0 %v704
        %714 = vmatmul.bf16.gmra.mxu0 %v685
        %v715 = vpop.f32.mrf.mxu0
        %v716 = vadd.f32 0.0, %v715
        %v717 = vpop.f32.mrf.mxu0
        %718 = vdwg.mxu0
        %v719 = vsub.f32 %v665, %v700
        %v720 = vsub.f32 %v681, %v716
        %v721 = vadd.f32 %v719, %v532
        %v722 = vadd.f32 %v720, %v533
        %723 = vadd.xlane.f32.xlu0 %v721
        %v724 = vpop.xlane.xlu0 %723
        %725 = vadd.xlane.f32.xlu0 %v722
        %v726 = vpop.xlane.xlu0 %725
        %v727 = vrcp.pop 128.0
        %v728 = vmul.f32 128.0, %v727
        %v729 = vsub.f32 1.0, %v728
        %v730 = vmul.f32 %v727, %v729
        %v731 = vadd.f32 %v727, %v730
        %vm732 = vweird.f32 %v727
        %v733 = vsel %vm732, %v727, %v731
        %v734 = vmul.f32 %v724, %v733
        %v735 = vmul.f32 %v726, %v733
        %v736 = vmul.f32 %v721, %v721
        %v737 = vmul.f32 %v722, %v722
        %738 = vadd.xlane.f32.xlu0 %v736
        %v739 = vpop.xlane.xlu0 %738
        %740 = vadd.xlane.f32.xlu0 %v737
        %v741 = vpop.xlane.xlu0 %740
        %v742 = vmul.f32 %v739, %v733
        %v743 = vmul.f32 %v741, %v733
        %v744 = vmul.f32 %v734, %v734
        %v745 = vmul.f32 %v735, %v735
        %v746 = vsub.f32 %v742, %v744
        %v747 = vsub.f32 %v743, %v745
        %v748 = vmax.f32 %v746, 0.0
        %v749 = vmax.f32 %v747, 0.0
        %v750 = vsub.f32 %v721, %v734
        %v751 = vsub.f32 %v722, %v735
        %v752 = vadd.f32 %v748, 1e-05
        %v753 = vadd.f32 %v749, 1e-05
        %v754 = vrsqrt.pop %v752
        %v755 = vmul.f32 %v754, %v752
        %v756 = vmul.f32 %v755, %v754
        %v757 = vmul.f32 0.5, %v756
        %v758 = vsub.f32 1.5, %v757
        %v759 = vmul.f32 %v754, %v758
        %vm760 = vweird.f32 %v752
        %vm761 = vweird.f32 %v754
        %vm762 = vmor %vm760, %vm761
        %v763 = vsel %vm762, %v754, %v759
        %v764 = vrsqrt.pop %v753
        %v765 = vmul.f32 %v764, %v753
        %v766 = vmul.f32 %v765, %v764
        %v767 = vmul.f32 0.5, %v766
        %v768 = vsub.f32 1.5, %v767
        %v769 = vmul.f32 %v764, %v768
        %vm770 = vweird.f32 %v753
        %vm771 = vweird.f32 %v764
        %vm772 = vmor %vm770, %vm771
        %v773 = vsel %vm772, %v764, %v769
        %v774 = vmul.f32 %v750, %v763
        %v775 = vmul.f32 %v751, %v773
        %v777 = vperm.slane %v462, 0
        %v779 = vmul.f32 %v774, %v777
        %v780 = vmul.f32 %v775, %v777
        %v782 = vperm.slane %v463, 0
        %v784 = vadd.f32 %v779, %v782
        %v785 = vadd.f32 %v780, %v782
        %v786 = vpack.c.bf16 %v785, %v784
        %v788 = vperm.slane %v464, 0
        %v789 = vperm.slane %v464, 1
        %v808 = vunpack.c.l.b16 %v482
        %v809 = vunpack.c.h.b16 %v482
        %v810 = vunpack.c.l.b16 %v483
        %v811 = vunpack.c.h.b16 %v483
        %v812 = vunpack.c.l.b16 %v484
        %v813 = vunpack.c.h.b16 %v484
        %v814 = vunpack.c.l.b16 %v485
        %v815 = vunpack.c.h.b16 %v485
        %v816 = vunpack.c.l.b16 %v486
        %v817 = vunpack.c.h.b16 %v486
        %v818 = vunpack.c.l.b16 %v487
        %v819 = vunpack.c.h.b16 %v487
        %v820 = vunpack.c.l.b16 %v488
        %v821 = vunpack.c.h.b16 %v488
        %v822 = vunpack.c.l.b16 %v489
        %v823 = vunpack.c.h.b16 %v489
        %v824 = vunpack.c.l.b16 %v490
        %v825 = vunpack.c.h.b16 %v490
        %v826 = vunpack.c.l.b16 %v491
        %v827 = vunpack.c.h.b16 %v491
        %v828 = vunpack.c.l.b16 %v492
        %v829 = vunpack.c.h.b16 %v492
        %v830 = vunpack.c.l.b16 %v493
        %v831 = vunpack.c.h.b16 %v493
        %v832 = vunpack.c.l.b16 %v494
        %v833 = vunpack.c.h.b16 %v494
        %v834 = vunpack.c.l.b16 %v495
        %v835 = vunpack.c.h.b16 %v495
        %v836 = vunpack.c.l.b16 %v496
        %v837 = vunpack.c.h.b16 %v496
        %v838 = vunpack.c.l.b16 %v497
        %v839 = vunpack.c.h.b16 %v497
        %v840 = vpack.c.b16 %v810, %v808
        %v841 = vpack.c.b16 %v811, %v809
        %v842 = vpack.c.b16 %v814, %v812
        %v843 = vpack.c.b16 %v815, %v813
        %v844 = vpack.c.b16 %v818, %v816
        %v845 = vpack.c.b16 %v819, %v817
        %v846 = vpack.c.b16 %v822, %v820
        %v847 = vpack.c.b16 %v823, %v821
        %v848 = vpack.c.b16 %v826, %v824
        %v849 = vpack.c.b16 %v827, %v825
        %v850 = vpack.c.b16 %v830, %v828
        %v851 = vpack.c.b16 %v831, %v829
        %v852 = vpack.c.b16 %v834, %v832
        %v853 = vpack.c.b16 %v835, %v833
        %v854 = vpack.c.b16 %v838, %v836
        %v855 = vpack.c.b16 %v839, %v837
        %872 = vmatpush.bf16.msra.mxu0 %v854
        %873 = vmatpush.bf16.msra.mxu0 %v852
        %874 = vmatpush.bf16.msra.mxu0 %v850
        %875 = vmatpush.bf16.msra.mxu0 %v848
        %876 = vmatpush.bf16.msra.mxu0 %v846
        %877 = vmatpush.bf16.msra.mxu0 %v844
        %878 = vmatpush.bf16.msra.mxu0 %v842
        %879 = vmatpush.bf16.msra.mxu0 %v840
        %880 = vmatmul.bf16.gmra.mxu0 %v786
        %v881 = vpop.f32.mrf.mxu0
        %v882 = vadd.f32 %v788, %v881
        %v883 = vpop.f32.mrf.mxu0
        %v884 = vadd.f32 %v788, %v883
        %885 = vdwg.mxu0
        %886 = vmatpush.bf16.msra.mxu0 %v855
        %887 = vmatpush.bf16.msra.mxu0 %v853
        %888 = vmatpush.bf16.msra.mxu0 %v851
        %889 = vmatpush.bf16.msra.mxu0 %v849
        %890 = vmatpush.bf16.msra.mxu0 %v847
        %891 = vmatpush.bf16.msra.mxu0 %v845
        %892 = vmatpush.bf16.msra.mxu0 %v843
        %893 = vmatpush.bf16.msra.mxu0 %v841
        %894 = vmatmul.bf16.gmra.mxu0 %v786
        %v895 = vpop.f32.mrf.mxu0
        %v896 = vadd.f32 %v789, %v895
        %v897 = vpop.f32.mrf.mxu0
        %v898 = vadd.f32 %v789, %v897
        %899 = vdwg.mxu0
        %v900 = vmul.f32 %v882, 0.5
        %v901 = vmul.f32 %v896, 0.5
        %v902 = vmul.f32 %v884, 0.5
        %v903 = vmul.f32 %v898, 0.5
        %v904 = vrcp.pop 1.4142135
        %v905 = vmul.f32 1.4142135, %v904
        %v906 = vsub.f32 1.0, %v905
        %v907 = vmul.f32 %v904, %v906
        %v908 = vadd.f32 %v904, %v907
        %vm909 = vweird.f32 %v904
        %v910 = vsel %vm909, %v904, %v908
        %v911 = vmul.f32 %v882, %v910
        %v912 = vmul.f32 %v896, %v910
        %v913 = vmul.f32 %v884, %v910
        %v914 = vmul.f32 %v898, %v910
        %v915 = vmul.f32 %v911, %v911
        %v916 = vmin.f32 16.0, %v915
        %v917 = vmul.f32 %v916, 2.1237322e-06
        %v918 = vadd.f32 %v917, 0.00028619796
        %v919 = vmul.f32 %v916, %v918
        %v920 = vadd.f32 %v919, 0.0036580483
        %v921 = vmul.f32 %v916, %v920
        %v922 = vadd.f32 %v921, 0.05243302
        %v923 = vmul.f32 %v916, %v922
        %v924 = vadd.f32 %v923, 0.18741608
        %v925 = vmul.f32 %v916, %v924
        %v926 = vadd.f32 %v925, 1.1283791
        %v927 = vmul.f32 %v911, %v926
        %v928 = vmul.f32 %v916, 3.8918573e-05
        %v929 = vadd.f32 %v928, 0.001143296
        %v930 = vmul.f32 %v916, %v929
        %v931 = vadd.f32 %v930, 0.014752088
        %v932 = vmul.f32 %v916, %v931
        %v933 = vadd.f32 %v932, 0.112945676
        %v934 = vmul.f32 %v916, %v933
        %v935 = vadd.f32 %v934, 0.4994258
        %v936 = vmul.f32 %v916, %v935
        %v937 = vadd.f32 %v936, 1.0
        %v938 = vrcp.pop %v937
        %v939 = vmul.f32 %v937, %v938
        %v940 = vsub.f32 1.0, %v939
        %v941 = vmul.f32 %v938, %v940
        %v942 = vadd.f32 %v938, %v941
        %vm943 = vweird.f32 %v937
        %vm944 = vweird.f32 %v938
        %vm945 = vmor %vm943, %vm944
        %v946 = vsel %vm945, %v938, %v942
        %v947 = vand.u32 2147483647, %v937
        %vm948 = vcmp.eq.f32.partialorder %v947, 8.507059e+37
        %v949 = vand.u32 %v937, 2147483648
        %v950 = vor.u32 1.1754944e-38, %v949
        %v951 = vsel %vm948, %v950, %v946
        %v952 = vmul.f32 %v927, %v951
        %v953 = vmin.f32 %v952, 1.0
        %v954 = vmax.f32 %v953, -1.0
        %v955 = vmul.f32 %v912, %v912
        %v956 = vmin.f32 16.0, %v955
        %v957 = vmul.f32 %v956, 2.1237322e-06
        %v958 = vadd.f32 %v957, 0.00028619796
        %v959 = vmul.f32 %v956, %v958
        %v960 = vadd.f32 %v959, 0.0036580483
        %v961 = vmul.f32 %v956, %v960
        %v962 = vadd.f32 %v961, 0.05243302
        %v963 = vmul.f32 %v956, %v962
        %v964 = vadd.f32 %v963, 0.18741608
        %v965 = vmul.f32 %v956, %v964
        %v966 = vadd.f32 %v965, 1.1283791
        %v967 = vmul.f32 %v912, %v966
        %v968 = vmul.f32 %v956, 3.8918573e-05
        %v969 = vadd.f32 %v968, 0.001143296
        %v970 = vmul.f32 %v956, %v969
        %v971 = vadd.f32 %v970, 0.014752088
        %v972 = vmul.f32 %v956, %v971
        %v973 = vadd.f32 %v972, 0.112945676
        %v974 = vmul.f32 %v956, %v973
        %v975 = vadd.f32 %v974, 0.4994258
        %v976 = vmul.f32 %v956, %v975
        %v977 = vadd.f32 %v976, 1.0
        %v978 = vrcp.pop %v977
        %v979 = vmul.f32 %v977, %v978
        %v980 = vsub.f32 1.0, %v979
        %v981 = vmul.f32 %v978, %v980
        %v982 = vadd.f32 %v978, %v981
        %vm983 = vweird.f32 %v977
        %vm984 = vweird.f32 %v978
        %vm985 = vmor %vm983, %vm984
        %v986 = vsel %vm985, %v978, %v982
        %v987 = vand.u32 2147483647, %v977
        %vm988 = vcmp.eq.f32.partialorder %v987, 8.507059e+37
        %v989 = vand.u32 %v977, 2147483648
        %v990 = vor.u32 1.1754944e-38, %v989
        %v991 = vsel %vm988, %v990, %v986
        %v992 = vmul.f32 %v967, %v991
        %v993 = vmin.f32 %v992, 1.0
        %v994 = vmax.f32 %v993, -1.0
        %v995 = vmul.f32 %v913, %v913
        %v996 = vmin.f32 16.0, %v995
        %v997 = vmul.f32 %v996, 2.1237322e-06
        %v998 = vadd.f32 %v997, 0.00028619796
        %v999 = vmul.f32 %v996, %v998
        %v1000 = vadd.f32 %v999, 0.0036580483
        %v1001 = vmul.f32 %v996, %v1000
        %v1002 = vadd.f32 %v1001, 0.05243302
        %v1003 = vmul.f32 %v996, %v1002
        %v1004 = vadd.f32 %v1003, 0.18741608
        %v1005 = vmul.f32 %v996, %v1004
        %v1006 = vadd.f32 %v1005, 1.1283791
        %v1007 = vmul.f32 %v913, %v1006
        %v1008 = vmul.f32 %v996, 3.8918573e-05
        %v1009 = vadd.f32 %v1008, 0.001143296
        %v1010 = vmul.f32 %v996, %v1009
        %v1011 = vadd.f32 %v1010, 0.014752088
        %v1012 = vmul.f32 %v996, %v1011
        %v1013 = vadd.f32 %v1012, 0.112945676
        %v1014 = vmul.f32 %v996, %v1013
        %v1015 = vadd.f32 %v1014, 0.4994258
        %v1016 = vmul.f32 %v996, %v1015
        %v1017 = vadd.f32 %v1016, 1.0
        %v1018 = vrcp.pop %v1017
        %v1019 = vmul.f32 %v1017, %v1018
        %v1020 = vsub.f32 1.0, %v1019
        %v1021 = vmul.f32 %v1018, %v1020
        %v1022 = vadd.f32 %v1018, %v1021
        %vm1023 = vweird.f32 %v1017
        %vm1024 = vweird.f32 %v1018
        %vm1025 = vmor %vm1023, %vm1024
        %v1026 = vsel %vm1025, %v1018, %v1022
        %v1027 = vand.u32 2147483647, %v1017
        %vm1028 = vcmp.eq.f32.partialorder %v1027, 8.507059e+37
        %v1029 = vand.u32 %v1017, 2147483648
        %v1030 = vor.u32 1.1754944e-38, %v1029
        %v1031 = vsel %vm1028, %v1030, %v1026
        %v1032 = vmul.f32 %v1007, %v1031
        %v1033 = vmin.f32 %v1032, 1.0
        %v1034 = vmax.f32 %v1033, -1.0
        %v1035 = vmul.f32 %v914, %v914
        %v1036 = vmin.f32 16.0, %v1035
        %v1037 = vmul.f32 %v1036, 2.1237322e-06
        %v1038 = vadd.f32 %v1037, 0.00028619796
        %v1039 = vmul.f32 %v1036, %v1038
        %v1040 = vadd.f32 %v1039, 0.0036580483
        %v1041 = vmul.f32 %v1036, %v1040
        %v1042 = vadd.f32 %v1041, 0.05243302
        %v1043 = vmul.f32 %v1036, %v1042
        %v1044 = vadd.f32 %v1043, 0.18741608
        %v1045 = vmul.f32 %v1036, %v1044
        %v1046 = vadd.f32 %v1045, 1.1283791
        %v1047 = vmul.f32 %v914, %v1046
        %v1048 = vmul.f32 %v1036, 3.8918573e-05
        %v1049 = vadd.f32 %v1048, 0.001143296
        %v1050 = vmul.f32 %v1036, %v1049
        %v1051 = vadd.f32 %v1050, 0.014752088
        %v1052 = vmul.f32 %v1036, %v1051
        %v1053 = vadd.f32 %v1052, 0.112945676
        %v1054 = vmul.f32 %v1036, %v1053
        %v1055 = vadd.f32 %v1054, 0.4994258
        %v1056 = vmul.f32 %v1036, %v1055
        %v1057 = vadd.f32 %v1056, 1.0
        %v1058 = vrcp.pop %v1057
        %v1059 = vmul.f32 %v1057, %v1058
        %v1060 = vsub.f32 1.0, %v1059
        %v1061 = vmul.f32 %v1058, %v1060
        %v1062 = vadd.f32 %v1058, %v1061
        %vm1063 = vweird.f32 %v1057
        %vm1064 = vweird.f32 %v1058
        %vm1065 = vmor %vm1063, %vm1064
        %v1066 = vsel %vm1065, %v1058, %v1062
        %v1067 = vand.u32 2147483647, %v1057
        %vm1068 = vcmp.eq.f32.partialorder %v1067, 8.507059e+37
        %v1069 = vand.u32 %v1057, 2147483648
        %v1070 = vor.u32 1.1754944e-38, %v1069
        %v1071 = vsel %vm1068, %v1070, %v1066
        %v1072 = vmul.f32 %v1047, %v1071
        %v1073 = vmin.f32 %v1072, 1.0
        %v1074 = vmax.f32 %v1073, -1.0
        %v1075 = vadd.f32 %v954, 1.0
        %v1076 = vadd.f32 %v994, 1.0
        %v1077 = vadd.f32 %v1034, 1.0
        %v1078 = vadd.f32 %v1074, 1.0
        %v1079 = vmul.f32 %v900, %v1075
        %v1080 = vmul.f32 %v901, %v1076
        %v1081 = vmul.f32 %v902, %v1077
        %v1082 = vmul.f32 %v903, %v1078
        %v1083 = vpack.c.bf16 %v1081, %v1079
        %v1084 = vpack.c.bf16 %v1082, %v1080
        %v1086 = vperm.slane %v465, 0
        %v1120 = vunpack.c.l.b16 %v498
        %v1121 = vunpack.c.l.b16 %v499
        %v1122 = vunpack.c.l.b16 %v500
        %v1123 = vunpack.c.l.b16 %v501
        %v1124 = vunpack.c.l.b16 %v502
        %v1125 = vunpack.c.l.b16 %v503
        %v1126 = vunpack.c.l.b16 %v504
        %v1127 = vunpack.c.l.b16 %v505
        %v1128 = vunpack.c.l.b16 %v506
        %v1129 = vunpack.c.l.b16 %v507
        %v1130 = vunpack.c.l.b16 %v508
        %v1131 = vunpack.c.l.b16 %v509
        %v1132 = vunpack.c.l.b16 %v510
        %v1133 = vunpack.c.l.b16 %v511
        %v1134 = vunpack.c.l.b16 %v512
        %v1135 = vunpack.c.l.b16 %v513
        %v1136 = vunpack.c.l.b16 %v514
        %v1137 = vunpack.c.l.b16 %v515
        %v1138 = vunpack.c.l.b16 %v516
        %v1139 = vunpack.c.l.b16 %v517
        %v1140 = vunpack.c.l.b16 %v518
        %v1141 = vunpack.c.l.b16 %v519
        %v1142 = vunpack.c.l.b16 %v520
        %v1143 = vunpack.c.l.b16 %v521
        %v1144 = vunpack.c.l.b16 %v522
        %v1145 = vunpack.c.l.b16 %v523
        %v1146 = vunpack.c.l.b16 %v524
        %v1147 = vunpack.c.l.b16 %v525
        %v1148 = vunpack.c.l.b16 %v526
        %v1149 = vunpack.c.l.b16 %v527
        %v1150 = vunpack.c.l.b16 %v528
        %v1151 = vunpack.c.l.b16 %v529
        %v1152 = vpack.c.b16 %v1121, %v1120
        %v1153 = vpack.c.b16 %v1123, %v1122
        %v1154 = vpack.c.b16 %v1125, %v1124
        %v1155 = vpack.c.b16 %v1127, %v1126
        %v1156 = vpack.c.b16 %v1129, %v1128
        %v1157 = vpack.c.b16 %v1131, %v1130
        %v1158 = vpack.c.b16 %v1133, %v1132
        %v1159 = vpack.c.b16 %v1135, %v1134
        %v1160 = vpack.c.b16 %v1137, %v1136
        %v1161 = vpack.c.b16 %v1139, %v1138
        %v1162 = vpack.c.b16 %v1141, %v1140
        %v1163 = vpack.c.b16 %v1143, %v1142
        %v1164 = vpack.c.b16 %v1145, %v1144
        %v1165 = vpack.c.b16 %v1147, %v1146
        %v1166 = vpack.c.b16 %v1149, %v1148
        %v1167 = vpack.c.b16 %v1151, %v1150
        %1184 = vmatpush.bf16.msra.mxu0 %v1159
        %1185 = vmatpush.bf16.msra.mxu0 %v1158
        %1186 = vmatpush.bf16.msra.mxu0 %v1157
        %1187 = vmatpush.bf16.msra.mxu0 %v1156
        %1188 = vmatpush.bf16.msra.mxu0 %v1155
        %1189 = vmatpush.bf16.msra.mxu0 %v1154
        %1190 = vmatpush.bf16.msra.mxu0 %v1153
        %1191 = vmatpush.bf16.msra.mxu0 %v1152
        %1192 = vmatmul.bf16.gmra.mxu0 %v1083
        %v1193 = vpop.f32.mrf.mxu0
        %v1194 = vadd.f32 %v1086, %v1193
        %v1195 = vpop.f32.mrf.mxu0
        %v1196 = vadd.f32 %v1086, %v1195
        %1197 = vdwg.mxu0
        %1198 = vmatpush.bf16.msra.mxu0 %v1167
        %1199 = vmatpush.bf16.msra.mxu0 %v1166
        %1200 = vmatpush.bf16.msra.mxu0 %v1165
        %1201 = vmatpush.bf16.msra.mxu0 %v1164
        %1202 = vmatpush.bf16.msra.mxu0 %v1163
        %1203 = vmatpush.bf16.msra.mxu0 %v1162
        %1204 = vmatpush.bf16.msra.mxu0 %v1161
        %1205 = vmatpush.bf16.msra.mxu0 %v1160
        %1206 = vmatmul.bf16.gmra.mxu0 %v1084
        %v1207 = vpop.f32.mrf.mxu0
        %v1208 = vadd.f32 %v1194, %v1207
        %v1209 = vpop.f32.mrf.mxu0
        %v1210 = vadd.f32 %v1196, %v1209
        %1211 = vdwg.mxu0
        %v1212 = vadd.f32 %v1208, %v532
        %v1213 = vadd.f32 %v1210, %v533
        %1214 = vadd.xlane.f32.xlu0 %v1212
        %v1215 = vpop.xlane.xlu0 %1214
        %1216 = vadd.xlane.f32.xlu0 %v1213
        %v1217 = vpop.xlane.xlu0 %1216
        %v1218 = vmul.f32 %v1215, %v733
        %v1219 = vmul.f32 %v1217, %v733
        %v1220 = vmul.f32 %v1212, %v1212
        %v1221 = vmul.f32 %v1213, %v1213
        %1222 = vadd.xlane.f32.xlu0 %v1220
        %v1223 = vpop.xlane.xlu0 %1222
        %1224 = vadd.xlane.f32.xlu0 %v1221
        %v1225 = vpop.xlane.xlu0 %1224
        %v1226 = vmul.f32 %v1223, %v733
        %v1227 = vmul.f32 %v1225, %v733
        %v1228 = vmul.f32 %v1218, %v1218
        %v1229 = vmul.f32 %v1219, %v1219
        %v1230 = vsub.f32 %v1226, %v1228
        %v1231 = vsub.f32 %v1227, %v1229
        %v1232 = vmax.f32 %v1230, 0.0
        %v1233 = vmax.f32 %v1231, 0.0
        %v1234 = vsub.f32 %v1212, %v1218
        %v1235 = vsub.f32 %v1213, %v1219
        %v1236 = vadd.f32 %v1232, 1e-05
        %v1237 = vadd.f32 %v1233, 1e-05
        %v1238 = vrsqrt.pop %v1236
        %v1239 = vmul.f32 %v1238, %v1236
        %v1240 = vmul.f32 %v1239, %v1238
        %v1241 = vmul.f32 0.5, %v1240
        %v1242 = vsub.f32 1.5, %v1241
        %v1243 = vmul.f32 %v1238, %v1242
        %vm1244 = vweird.f32 %v1236
        %vm1245 = vweird.f32 %v1238
        %vm1246 = vmor %vm1244, %vm1245
        %v1247 = vsel %vm1246, %v1238, %v1243
        %v1248 = vrsqrt.pop %v1237
        %v1249 = vmul.f32 %v1248, %v1237
        %v1250 = vmul.f32 %v1249, %v1248
        %v1251 = vmul.f32 0.5, %v1250
        %v1252 = vsub.f32 1.5, %v1251
        %v1253 = vmul.f32 %v1248, %v1252
        %vm1254 = vweird.f32 %v1237
        %vm1255 = vweird.f32 %v1248
        %vm1256 = vmor %vm1254, %vm1255
        %v1257 = vsel %vm1256, %v1248, %v1253
        %v1258 = vmul.f32 %v1234, %v1247
        %v1259 = vmul.f32 %v1235, %v1257
        %v1260 = vmul.f32 %v1258, %v777
        %v1261 = vmul.f32 %v1259, %v777
        %v1262 = vadd.f32 %v1260, %v782
        %v1263 = vadd.f32 %v1261, %v782
        %v1264 = vpack.c.bf16 %v1263, %v1262
        %1265 = vmatpush.bf16.msra.mxu0 %v597
        %1266 = vmatpush.bf16.msra.mxu0 %v595
        %1267 = vmatpush.bf16.msra.mxu0 %v593
        %1268 = vmatpush.bf16.msra.mxu0 %v591
        %1269 = vmatpush.bf16.msra.mxu0 %v589
        %1270 = vmatpush.bf16.msra.mxu0 %v587
        %1271 = vmatpush.bf16.msra.mxu0 %v585
        %1272 = vmatpush.bf16.msra.mxu0 %v583
        %1273 = vmatmul.bf16.gmra.mxu0 %v1264
        %v1274 = vpop.f32.mrf.mxu0
        %v1275 = vadd.f32 0.0, %v1274
        %v1276 = vpop.f32.mrf.mxu0
        %v1277 = vadd.f32 0.0, %v1276
        %1278 = vdwg.mxu0
        %1279 = vmatpush.bf16.msra.mxu0 %v598
        %1280 = vmatpush.bf16.msra.mxu0 %v596
        %1281 = vmatpush.bf16.msra.mxu0 %v594
        %1282 = vmatpush.bf16.msra.mxu0 %v592
        %1283 = vmatpush.bf16.msra.mxu0 %v590
        %1284 = vmatpush.bf16.msra.mxu0 %v588
        %1285 = vmatpush.bf16.msra.mxu0 %v586
        %1286 = vmatpush.bf16.msra.mxu0 %v584
        %1287 = vmatmul.bf16.gmra.mxu0 %v1264
        %v1288 = vpop.f32.mrf.mxu0
        %v1289 = vadd.f32 0.0, %v1288
        %v1290 = vpop.f32.mrf.mxu0
        %v1291 = vadd.f32 0.0, %v1290
        %1292 = vdwg.mxu0
        %v1293 = vpack.c.bf16 %v1275, %v1275
        %v1294 = vpack.c.bf16 %v1277, %v1277
        %v1295 = vpack.c.bf16 %v1289, %v1289
        %v1296 = vpack.c.bf16 %v1291, %v1291
        %v1298 = vsel %vm651, %v1293, 0
        %1300 = vmatpush.bf16.msra.mxu0 0
        %1301 = vmatpush.bf16.msra.mxu0 0
        %1302 = vmatpush.bf16.msra.mxu0 0
        %1303 = vmatpush.bf16.msra.mxu0 0
        %1304 = vmatpush.bf16.msra.mxu0 0
        %1305 = vmatpush.bf16.msra.mxu0 0
        %1306 = vmatpush.bf16.msra.mxu0 0
        %1307 = vmatpush.bf16.msra.mxu0 %v1298
        %1308 = vmatmul.bf16.gmra.mxu0 %v649
        %v1309 = vpop.f32.mrf.mxu0
        %v1310 = vadd.f32 0.0, %v1309
        %v1311 = vpop.f32.mrf.mxu0
        %1312 = vdwg.mxu0
        %v1314 = vsel %vm651, %v1294, 0
        %1316 = vmatpush.bf16.msra.mxu0 0
        %1317 = vmatpush.bf16.msra.mxu0 0
        %1318 = vmatpush.bf16.msra.mxu0 0
        %1319 = vmatpush.bf16.msra.mxu0 0
        %1320 = vmatpush.bf16.msra.mxu0 0
        %1321 = vmatpush.bf16.msra.mxu0 0
        %1322 = vmatpush.bf16.msra.mxu0 0
        %1323 = vmatpush.bf16.msra.mxu0 %v1314
        %1324 = vmatmul.bf16.gmra.mxu0 %v649
        %v1325 = vpop.f32.mrf.mxu0
        %v1326 = vadd.f32 0.0, %v1325
        %v1327 = vpop.f32.mrf.mxu0
        %1328 = vdwg.mxu0
        %v1330 = vsel %vm651, %v1295, 0
        %1332 = vmatpush.bf16.msra.mxu0 0
        %1333 = vmatpush.bf16.msra.mxu0 0
        %1334 = vmatpush.bf16.msra.mxu0 0
        %1335 = vmatpush.bf16.msra.mxu0 0
        %1336 = vmatpush.bf16.msra.mxu0 0
        %1337 = vmatpush.bf16.msra.mxu0 0
        %1338 = vmatpush.bf16.msra.mxu0 0
        %1339 = vmatpush.bf16.msra.mxu0 %v1330
        %1340 = vmatmul.bf16.gmra.mxu0 %v685
        %v1341 = vpop.f32.mrf.mxu0
        %v1342 = vadd.f32 0.0, %v1341
        %v1343 = vpop.f32.mrf.mxu0
        %1344 = vdwg.mxu0
        %v1346 = vsel %vm651, %v1296, 0
        %1348 = vmatpush.bf16.msra.mxu0 0
        %1349 = vmatpush.bf16.msra.mxu0 0
        %1350 = vmatpush.bf16.msra.mxu0 0
        %1351 = vmatpush.bf16.msra.mxu0 0
        %1352 = vmatpush.bf16.msra.mxu0 0
        %1353 = vmatpush.bf16.msra.mxu0 0
        %1354 = vmatpush.bf16.msra.mxu0 0
        %1355 = vmatpush.bf16.msra.mxu0 %v1346
        %1356 = vmatmul.bf16.gmra.mxu0 %v685
        %v1357 = vpop.f32.mrf.mxu0
        %v1358 = vadd.f32 0.0, %v1357
        %v1359 = vpop.f32.mrf.mxu0
        %1360 = vdwg.mxu0
        %v1361 = vsub.f32 %v1310, %v1342
        %v1362 = vsub.f32 %v1326, %v1358
        %v1363 = vadd.f32 %v1361, %v1262
        %v1364 = vadd.f32 %v1362, %v1263
        %1365 = vadd.xlane.f32.xlu0 %v1363
        %v1366 = vpop.xlane.xlu0 %1365
        %1367 = vadd.xlane.f32.xlu0 %v1364
        %v1368 = vpop.xlane.xlu0 %1367
        %v1369 = vmul.f32 %v1366, %v733
        %v1370 = vmul.f32 %v1368, %v733
        %v1371 = vmul.f32 %v1363, %v1363
        %v1372 = vmul.f32 %v1364, %v1364
        %1373 = vadd.xlane.f32.xlu0 %v1371
        %v1374 = vpop.xlane.xlu0 %1373
        %1375 = vadd.xlane.f32.xlu0 %v1372
        %v1376 = vpop.xlane.xlu0 %1375
        %v1377 = vmul.f32 %v1374, %v733
        %v1378 = vmul.f32 %v1376, %v733
        %v1379 = vmul.f32 %v1369, %v1369
        %v1380 = vmul.f32 %v1370, %v1370
        %v1381 = vsub.f32 %v1377, %v1379
        %v1382 = vsub.f32 %v1378, %v1380
        %v1383 = vmax.f32 %v1381, 0.0
        %v1384 = vmax.f32 %v1382, 0.0
        %v1385 = vsub.f32 %v1363, %v1369
        %v1386 = vsub.f32 %v1364, %v1370
        %v1387 = vadd.f32 %v1383, 1e-05
        %v1388 = vadd.f32 %v1384, 1e-05
        %v1389 = vrsqrt.pop %v1387
        %v1390 = vmul.f32 %v1389, %v1387
        %v1391 = vmul.f32 %v1390, %v1389
        %v1392 = vmul.f32 0.5, %v1391
        %v1393 = vsub.f32 1.5, %v1392
        %v1394 = vmul.f32 %v1389, %v1393
        %vm1395 = vweird.f32 %v1387
        %vm1396 = vweird.f32 %v1389
        %vm1397 = vmor %vm1395, %vm1396
        %v1398 = vsel %vm1397, %v1389, %v1394
        %v1399 = vrsqrt.pop %v1388
        %v1400 = vmul.f32 %v1399, %v1388
        %v1401 = vmul.f32 %v1400, %v1399
        %v1402 = vmul.f32 0.5, %v1401
        %v1403 = vsub.f32 1.5, %v1402
        %v1404 = vmul.f32 %v1399, %v1403
        %vm1405 = vweird.f32 %v1388
        %vm1406 = vweird.f32 %v1399
        %vm1407 = vmor %vm1405, %vm1406
        %v1408 = vsel %vm1407, %v1399, %v1404
        %v1409 = vmul.f32 %v1385, %v1398
        %v1410 = vmul.f32 %v1386, %v1408
        %v1411 = vmul.f32 %v1409, %v777
        %v1412 = vmul.f32 %v1410, %v777
        %v1413 = vadd.f32 %v1411, %v782
        %v1414 = vadd.f32 %v1412, %v782
        %v1415 = vpack.c.bf16 %v1414, %v1413
        %1416 = vmatpush.bf16.msra.mxu0 %v854
        %1417 = vmatpush.bf16.msra.mxu0 %v852
        %1418 = vmatpush.bf16.msra.mxu0 %v850
        %1419 = vmatpush.bf16.msra.mxu0 %v848
        %1420 = vmatpush.bf16.msra.mxu0 %v846
        %1421 = vmatpush.bf16.msra.mxu0 %v844
        %1422 = vmatpush.bf16.msra.mxu0 %v842
        %1423 = vmatpush.bf16.msra.mxu0 %v840
        %1424 = vmatmul.bf16.gmra.mxu0 %v1415
        %v1425 = vpop.f32.mrf.mxu0
        %v1426 = vadd.f32 %v788, %v1425
        %v1427 = vpop.f32.mrf.mxu0
        %v1428 = vadd.f32 %v788, %v1427
        %1429 = vdwg.mxu0
        %1430 = vmatpush.bf16.msra.mxu0 %v855
        %1431 = vmatpush.bf16.msra.mxu0 %v853
        %1432 = vmatpush.bf16.msra.mxu0 %v851
        %1433 = vmatpush.bf16.msra.mxu0 %v849
        %1434 = vmatpush.bf16.msra.mxu0 %v847
        %1435 = vmatpush.bf16.msra.mxu0 %v845
        %1436 = vmatpush.bf16.msra.mxu0 %v843
        %1437 = vmatpush.bf16.msra.mxu0 %v841
        %1438 = vmatmul.bf16.gmra.mxu0 %v1415
        %v1439 = vpop.f32.mrf.mxu0
        %v1440 = vadd.f32 %v789, %v1439
        %v1441 = vpop.f32.mrf.mxu0
        %v1442 = vadd.f32 %v789, %v1441
        %1443 = vdwg.mxu0
        %v1444 = vmul.f32 %v1426, 0.5
        %v1445 = vmul.f32 %v1440, 0.5
        %v1446 = vmul.f32 %v1428, 0.5
        %v1447 = vmul.f32 %v1442, 0.5
        %v1448 = vmul.f32 %v1426, %v910
        %v1449 = vmul.f32 %v1440, %v910
        %v1450 = vmul.f32 %v1428, %v910
        %v1451 = vmul.f32 %v1442, %v910
        %v1452 = vmul.f32 %v1448, %v1448
        %v1453 = vmin.f32 16.0, %v1452
        %v1454 = vmul.f32 %v1453, 2.1237322e-06
        %v1455 = vadd.f32 %v1454, 0.00028619796
        %v1456 = vmul.f32 %v1453, %v1455
        %v1457 = vadd.f32 %v1456, 0.0036580483
        %v1458 = vmul.f32 %v1453, %v1457
        %v1459 = vadd.f32 %v1458, 0.05243302
        %v1460 = vmul.f32 %v1453, %v1459
        %v1461 = vadd.f32 %v1460, 0.18741608
        %v1462 = vmul.f32 %v1453, %v1461
        %v1463 = vadd.f32 %v1462, 1.1283791
        %v1464 = vmul.f32 %v1448, %v1463
        %v1465 = vmul.f32 %v1453, 3.8918573e-05
        %v1466 = vadd.f32 %v1465, 0.001143296
        %v1467 = vmul.f32 %v1453, %v1466
        %v1468 = vadd.f32 %v1467, 0.014752088
        %v1469 = vmul.f32 %v1453, %v1468
        %v1470 = vadd.f32 %v1469, 0.112945676
        %v1471 = vmul.f32 %v1453, %v1470
        %v1472 = vadd.f32 %v1471, 0.4994258
        %v1473 = vmul.f32 %v1453, %v1472
        %v1474 = vadd.f32 %v1473, 1.0
        %v1475 = vrcp.pop %v1474
        %v1476 = vmul.f32 %v1474, %v1475
        %v1477 = vsub.f32 1.0, %v1476
        %v1478 = vmul.f32 %v1475, %v1477
        %v1479 = vadd.f32 %v1475, %v1478
        %vm1480 = vweird.f32 %v1474
        %vm1481 = vweird.f32 %v1475
        %vm1482 = vmor %vm1480, %vm1481
        %v1483 = vsel %vm1482, %v1475, %v1479
        %v1484 = vand.u32 2147483647, %v1474
        %vm1485 = vcmp.eq.f32.partialorder %v1484, 8.507059e+37
        %v1486 = vand.u32 %v1474, 2147483648
        %v1487 = vor.u32 1.1754944e-38, %v1486
        %v1488 = vsel %vm1485, %v1487, %v1483
        %v1489 = vmul.f32 %v1464, %v1488
        %v1490 = vmin.f32 %v1489, 1.0
        %v1491 = vmax.f32 %v1490, -1.0
        %v1492 = vmul.f32 %v1449, %v1449
        %v1493 = vmin.f32 16.0, %v1492
        %v1494 = vmul.f32 %v1493, 2.1237322e-06
        %v1495 = vadd.f32 %v1494, 0.00028619796
        %v1496 = vmul.f32 %v1493, %v1495
        %v1497 = vadd.f32 %v1496, 0.0036580483
        %v1498 = vmul.f32 %v1493, %v1497
        %v1499 = vadd.f32 %v1498, 0.05243302
        %v1500 = vmul.f32 %v1493, %v1499
        %v1501 = vadd.f32 %v1500, 0.18741608
        %v1502 = vmul.f32 %v1493, %v1501
        %v1503 = vadd.f32 %v1502, 1.1283791
        %v1504 = vmul.f32 %v1449, %v1503
        %v1505 = vmul.f32 %v1493, 3.8918573e-05
        %v1506 = vadd.f32 %v1505, 0.001143296
        %v1507 = vmul.f32 %v1493, %v1506
        %v1508 = vadd.f32 %v1507, 0.014752088
        %v1509 = vmul.f32 %v1493, %v1508
        %v1510 = vadd.f32 %v1509, 0.112945676
        %v1511 = vmul.f32 %v1493, %v1510
        %v1512 = vadd.f32 %v1511, 0.4994258
        %v1513 = vmul.f32 %v1493, %v1512
        %v1514 = vadd.f32 %v1513, 1.0
        %v1515 = vrcp.pop %v1514
        %v1516 = vmul.f32 %v1514, %v1515
        %v1517 = vsub.f32 1.0, %v1516
        %v1518 = vmul.f32 %v1515, %v1517
        %v1519 = vadd.f32 %v1515, %v1518
        %vm1520 = vweird.f32 %v1514
        %vm1521 = vweird.f32 %v1515
        %vm1522 = vmor %vm1520, %vm1521
        %v1523 = vsel %vm1522, %v1515, %v1519
        %v1524 = vand.u32 2147483647, %v1514
        %vm1525 = vcmp.eq.f32.partialorder %v1524, 8.507059e+37
        %v1526 = vand.u32 %v1514, 2147483648
        %v1527 = vor.u32 1.1754944e-38, %v1526
        %v1528 = vsel %vm1525, %v1527, %v1523
        %v1529 = vmul.f32 %v1504, %v1528
        %v1530 = vmin.f32 %v1529, 1.0
        %v1531 = vmax.f32 %v1530, -1.0
        %v1532 = vmul.f32 %v1450, %v1450
        %v1533 = vmin.f32 16.0, %v1532
        %v1534 = vmul.f32 %v1533, 2.1237322e-06
        %v1535 = vadd.f32 %v1534, 0.00028619796
        %v1536 = vmul.f32 %v1533, %v1535
        %v1537 = vadd.f32 %v1536, 0.0036580483
        %v1538 = vmul.f32 %v1533, %v1537
        %v1539 = vadd.f32 %v1538, 0.05243302
        %v1540 = vmul.f32 %v1533, %v1539
        %v1541 = vadd.f32 %v1540, 0.18741608
        %v1542 = vmul.f32 %v1533, %v1541
        %v1543 = vadd.f32 %v1542, 1.1283791
        %v1544 = vmul.f32 %v1450, %v1543
        %v1545 = vmul.f32 %v1533, 3.8918573e-05
        %v1546 = vadd.f32 %v1545, 0.001143296
        %v1547 = vmul.f32 %v1533, %v1546
        %v1548 = vadd.f32 %v1547, 0.014752088
        %v1549 = vmul.f32 %v1533, %v1548
        %v1550 = vadd.f32 %v1549, 0.112945676
        %v1551 = vmul.f32 %v1533, %v1550
        %v1552 = vadd.f32 %v1551, 0.4994258
        %v1553 = vmul.f32 %v1533, %v1552
        %v1554 = vadd.f32 %v1553, 1.0
        %v1555 = vrcp.pop %v1554
        %v1556 = vmul.f32 %v1554, %v1555
        %v1557 = vsub.f32 1.0, %v1556
        %v1558 = vmul.f32 %v1555, %v1557
        %v1559 = vadd.f32 %v1555, %v1558
        %vm1560 = vweird.f32 %v1554
        %vm1561 = vweird.f32 %v1555
        %vm1562 = vmor %vm1560, %vm1561
        %v1563 = vsel %vm1562, %v1555, %v1559
        %v1564 = vand.u32 2147483647, %v1554
        %vm1565 = vcmp.eq.f32.partialorder %v1564, 8.507059e+37
        %v1566 = vand.u32 %v1554, 2147483648
        %v1567 = vor.u32 1.1754944e-38, %v1566
        %v1568 = vsel %vm1565, %v1567, %v1563
        %v1569 = vmul.f32 %v1544, %v1568
        %v1570 = vmin.f32 %v1569, 1.0
        %v1571 = vmax.f32 %v1570, -1.0
        %v1572 = vmul.f32 %v1451, %v1451
        %v1573 = vmin.f32 16.0, %v1572
        %v1574 = vmul.f32 %v1573, 2.1237322e-06
        %v1575 = vadd.f32 %v1574, 0.00028619796
        %v1576 = vmul.f32 %v1573, %v1575
        %v1577 = vadd.f32 %v1576, 0.0036580483
        %v1578 = vmul.f32 %v1573, %v1577
        %v1579 = vadd.f32 %v1578, 0.05243302
        %v1580 = vmul.f32 %v1573, %v1579
        %v1581 = vadd.f32 %v1580, 0.18741608
        %v1582 = vmul.f32 %v1573, %v1581
        %v1583 = vadd.f32 %v1582, 1.1283791
        %v1584 = vmul.f32 %v1451, %v1583
        %v1585 = vmul.f32 %v1573, 3.8918573e-05
        %v1586 = vadd.f32 %v1585, 0.001143296
        %v1587 = vmul.f32 %v1573, %v1586
        %v1588 = vadd.f32 %v1587, 0.014752088
        %v1589 = vmul.f32 %v1573, %v1588
        %v1590 = vadd.f32 %v1589, 0.112945676
        %v1591 = vmul.f32 %v1573, %v1590
        %v1592 = vadd.f32 %v1591, 0.4994258
        %v1593 = vmul.f32 %v1573, %v1592
        %v1594 = vadd.f32 %v1593, 1.0
        %v1595 = vrcp.pop %v1594
        %v1596 = vmul.f32 %v1594, %v1595
        %v1597 = vsub.f32 1.0, %v1596
        %v1598 = vmul.f32 %v1595, %v1597
        %v1599 = vadd.f32 %v1595, %v1598
        %vm1600 = vweird.f32 %v1594
        %vm1601 = vweird.f32 %v1595
        %vm1602 = vmor %vm1600, %vm1601
        %v1603 = vsel %vm1602, %v1595, %v1599
        %v1604 = vand.u32 2147483647, %v1594
        %vm1605 = vcmp.eq.f32.partialorder %v1604, 8.507059e+37
        %v1606 = vand.u32 %v1594, 2147483648
        %v1607 = vor.u32 1.1754944e-38, %v1606
        %v1608 = vsel %vm1605, %v1607, %v1603
        %v1609 = vmul.f32 %v1584, %v1608
        %v1610 = vmin.f32 %v1609, 1.0
        %v1611 = vmax.f32 %v1610, -1.0
        %v1612 = vadd.f32 %v1491, 1.0
        %v1613 = vadd.f32 %v1531, 1.0
        %v1614 = vadd.f32 %v1571, 1.0
        %v1615 = vadd.f32 %v1611, 1.0
        %v1616 = vmul.f32 %v1444, %v1612
        %v1617 = vmul.f32 %v1445, %v1613
        %v1618 = vmul.f32 %v1446, %v1614
        %v1619 = vmul.f32 %v1447, %v1615
        %v1620 = vpack.c.bf16 %v1618, %v1616
        %v1621 = vpack.c.bf16 %v1619, %v1617
        %1622 = vmatpush.bf16.msra.mxu0 %v1159
        %1623 = vmatpush.bf16.msra.mxu0 %v1158
        %1624 = vmatpush.bf16.msra.mxu0 %v1157
        %1625 = vmatpush.bf16.msra.mxu0 %v1156
        %1626 = vmatpush.bf16.msra.mxu0 %v1155
        %1627 = vmatpush.bf16.msra.mxu0 %v1154
        %1628 = vmatpush.bf16.msra.mxu0 %v1153
        %1629 = vmatpush.bf16.msra.mxu0 %v1152
        %1630 = vmatmul.bf16.gmra.mxu0 %v1620
        %v1631 = vpop.f32.mrf.mxu0
        %v1632 = vadd.f32 %v1086, %v1631
        %v1633 = vpop.f32.mrf.mxu0
        %v1634 = vadd.f32 %v1086, %v1633
        %1635 = vdwg.mxu0
        %1636 = vmatpush.bf16.msra.mxu0 %v1167
        %1637 = vmatpush.bf16.msra.mxu0 %v1166
        %1638 = vmatpush.bf16.msra.mxu0 %v1165
        %1639 = vmatpush.bf16.msra.mxu0 %v1164
        %1640 = vmatpush.bf16.msra.mxu0 %v1163
        %1641 = vmatpush.bf16.msra.mxu0 %v1162
        %1642 = vmatpush.bf16.msra.mxu0 %v1161
        %1643 = vmatpush.bf16.msra.mxu0 %v1160
        %1644 = vmatmul.bf16.gmra.mxu0 %v1621
        %v1645 = vpop.f32.mrf.mxu0
        %v1646 = vadd.f32 %v1632, %v1645
        %v1647 = vpop.f32.mrf.mxu0
        %v1648 = vadd.f32 %v1634, %v1647
        %1649 = vdwg.mxu0
        %v1650 = vadd.f32 %v1646, %v1262
        %v1651 = vadd.f32 %v1648, %v1263
        %1652 = vadd.xlane.f32.xlu0 %v1650
        %v1653 = vpop.xlane.xlu0 %1652
        %1654 = vadd.xlane.f32.xlu0 %v1651
        %v1655 = vpop.xlane.xlu0 %1654
        %v1656 = vmul.f32 %v1653, %v733
        %v1657 = vmul.f32 %v1655, %v733
        %v1658 = vmul.f32 %v1650, %v1650
        %v1659 = vmul.f32 %v1651, %v1651
        %1660 = vadd.xlane.f32.xlu0 %v1658
        %v1661 = vpop.xlane.xlu0 %1660
        %1662 = vadd.xlane.f32.xlu0 %v1659
        %v1663 = vpop.xlane.xlu0 %1662
        %v1664 = vmul.f32 %v1661, %v733
        %v1665 = vmul.f32 %v1663, %v733
        %v1666 = vmul.f32 %v1656, %v1656
        %v1667 = vmul.f32 %v1657, %v1657
        %v1668 = vsub.f32 %v1664, %v1666
        %v1669 = vsub.f32 %v1665, %v1667
        %v1670 = vmax.f32 %v1668, 0.0
        %v1671 = vmax.f32 %v1669, 0.0
        %v1672 = vsub.f32 %v1650, %v1656
        %v1673 = vsub.f32 %v1651, %v1657
        %v1674 = vadd.f32 %v1670, 1e-05
        %v1675 = vadd.f32 %v1671, 1e-05
        %v1676 = vrsqrt.pop %v1674
        %v1677 = vmul.f32 %v1676, %v1674
        %v1678 = vmul.f32 %v1677, %v1676
        %v1679 = vmul.f32 0.5, %v1678
        %v1680 = vsub.f32 1.5, %v1679
        %v1681 = vmul.f32 %v1676, %v1680
        %vm1682 = vweird.f32 %v1674
        %vm1683 = vweird.f32 %v1676
        %vm1684 = vmor %vm1682, %vm1683
        %v1685 = vsel %vm1684, %v1676, %v1681
        %v1686 = vrsqrt.pop %v1675
        %v1687 = vmul.f32 %v1686, %v1675
        %v1688 = vmul.f32 %v1687, %v1686
        %v1689 = vmul.f32 0.5, %v1688
        %v1690 = vsub.f32 1.5, %v1689
        %v1691 = vmul.f32 %v1686, %v1690
        %vm1692 = vweird.f32 %v1675
        %vm1693 = vweird.f32 %v1686
        %vm1694 = vmor %vm1692, %vm1693
        %v1695 = vsel %vm1694, %v1686, %v1691
        %v1696 = vmul.f32 %v1672, %v1685
        %v1697 = vmul.f32 %v1673, %v1695
        %v1698 = vmul.f32 %v1696, %v777
        %v1699 = vmul.f32 %v1697, %v777
        %v1700 = vadd.f32 %v1698, %v782
        %v1701 = vadd.f32 %v1699, %v782
        %1702 = vst [vmem:[%s458] sm:$0xff] %v1700
        %1703 = vst [vmem:[%s458 + $0x8] sm:$0xff] %v1701
        %s1704 = sand.u32 %s253, 1
        %s1705 = scalar_lea.sflag [#allocation4], %s1704
        %s1706 = sand.u32 %s253, 1
        %s1707 = smul.addr %s1706, 16
        %s1708 = scalar_lea.vmem [#allocation13], %s1707
        // Predicated region
        $region85: #{tpu_custom_call.1} parent=59 // pred_check
          %p1709 = pneg %p263
        $region86: #{tpu_custom_call.1} parent=59 // pred_check_branch
          %1711 = sbr.rel (%p1709) target = $region88
        $region87: #{tpu_custom_call.1} parent=59 // pred_region
          %s1712 = smul.u32 2, %s30
          %1714 = vsyncadd %s1705, 0
          %s1715 = smul.addr %s1712, 8
          %s1716 = scalar_lea.hbm %s10, %s1715
          %s1717 = sshll.u32 %s1708, 4
          %s1718 = int_to_ptr.vmem [resolvable:$true] %s1717
          %s1719 = sshll.u32 %s1716, 4
          %s1720 = int_to_ptr.hbm [resolvable:$true] %s1719
          %1725 = dma.vmem_to_hbm [thread:$0]  %s1718, 256, %s1720, %s1705, 128, 128, 8
        $region88: #{tpu_custom_call.1} parent=59 // pred_fallthru
          _
      $region60: #{tpu_custom_call.1} parent=5 // pred_fallthru
        _
      %p1726 = scmp.le.s32.totalorder 2, %s25
      // Predicated region
      $region89: #{tpu_custom_call.1} parent=5 // pred_check
        %p1727 = pneg %p1726
      $region90: #{tpu_custom_call.1} parent=5 // pred_check_branch
        %1729 = sbr.rel (%p1727) target = $region92
      $region91: #{tpu_custom_call.1} parent=5 // pred_region
        %s1730 = ssub.s32 %s25, 2
        // Predicated region
        $region93: #{tpu_custom_call.1} parent=91 // pred_check
          %p1731 = pneg %p269
        $region94: #{tpu_custom_call.1} parent=91 // pred_check_branch
          %1733 = sbr.rel (%p1731) target = $region96
        $region95: #{tpu_custom_call.1} parent=91 // pred_region
          %s1734 = sand.u32 %s254, 1
          %s1735 = scalar_lea.sflag [#allocation4], %s1734
          %s1736 = sand.u32 %s254, 1
          %s1737 = smul.addr %s1736, 16
          %s1738 = scalar_lea.vmem [#allocation13], %s1737
          %1740 = dma.done %s1735, 256
        $region96: #{tpu_custom_call.1} parent=91 // pred_fallthru
          _
      $region92: #{tpu_custom_call.1} parent=5 // pred_fallthru
        _
    $region6: #{tpu_custom_call.1} parent=1 // loop_footer
      %s29 = sadd.s32 1, %s25
    $region7: #{tpu_custom_call.1} parent=1 // loop_footer_branch
      %24 = sbr.rel target = $region3
    $region8: #{tpu_custom_call.1} parent=1 // loop_exit
      _
    %1741 = vsyncpa [#allocation3], 1
    %s1742 = scalar_lea.sflag [#allocation3], 1
    %1743 = vsyncpa %s1742, 1
    %1744 = vsyncpa [#allocation6], 1
    %1745 = vsyncpa [#allocation9], 1
    %1746 = vsyncpa [#allocation12], 1
    %1747 = vsyncpa [#allocation4], 1
    %s1748 = scalar_lea.sflag [#allocation4], 1
    %1749 = vsyncpa %s1748, 1

// kernel: tpu_custom_call.1
$region0: #{tpu_custom_call.1}
  #allocation0 [shape = 'u32[]', space=smem, size = 0x4, offset = 0x4, fixed_abs, tag = 'smem constant byte address 0x4 - core index']
  #allocation1 [shape = 'u32[72,128]{1,0:T(1,128)}', space=vmem, size = 0x9000, scoped, tag = 'internal scratch']
  %s0 = inlined_call_operand.hbm [shape: f32[4,8,128], index: 0, kind: input, shape index: {}]
  %s1 = inlined_call_operand.hbm [shape: bf16[8,8], index: 1, kind: input, shape index: {}]
  %s2 = inlined_call_operand.hbm [shape: bf16[8,8], index: 2, kind: input, shape index: {}]
  %s3 = inlined_call_operand.hbm [shape: bf16[128,256], index: 3, kind: input, shape index: {}]
  %s4 = inlined_call_operand.vmem [shape: f32[1,128], index: 4, kind: input, shape index: {}]
  %s5 = inlined_call_operand.vmem [shape: f32[1,128], index: 5, kind: input, shape index: {}]
  %s6 = inlined_call_operand.hbm [shape: bf16[128,256], index: 6, kind: input, shape index: {}]
  %s7 = inlined_call_operand.vmem [shape: f32[1,256], index: 7, kind: input, shape index: {}]
  %s8 = inlined_call_operand.hbm [shape: bf16[256,128], index: 8, kind: input, shape index: {}]
  %s9 = inlined_call_operand.vmem [shape: f32[1,128], index: 9, kind: input, shape index: {}]
  %s10 = inlined_call_operand.hbm [shape: f32[4,8,128], index: 10, kind: output, shape index: {}]
  %s11 = sld [smem:[#allocation0]]
  $region97: #{tpu_custom_call.1} parent=0
    _
  %s13 = ssub.s32 1, %s11
  %s14 = scalar_select 0, %s13, %s11
  $region1: #{tpu_custom_call.1} parent=0
    #allocation2 [shape = 'u8[16384]{0}', space=vmem, size = 0x4000, scoped, tag = 'input window, operand 0']
    #allocation3 [shape = 's32[2]{0}', space=sflag, size = 0x8, scoped, tag = 'scoped memory for tpu_custom_call.1']
    #allocation4 [shape = 's32[2]{0}', space=sflag, size = 0x8, scoped, tag = 'scoped memory for tpu_custom_call.1']
    #allocation5 [shape = 'u8[2048]{0}', space=vmem, size = 0x800, scoped, tag = 'input window, operand 1, single buffered']
    #allocation6 [shape = 's32[1]{0}', space=sflag, size = 0x4, scoped, tag = 'scoped memory for tpu_custom_call.1']
    #allocation7 [shape = 'u8[2048]{0}', space=vmem, size = 0x800, scoped, tag = 'input window, operand 2, single buffered']
    #allocation8 [shape = 'u8[65536]{0}', space=vmem, size = 0x10000, scoped, tag = 'input window, operand 3, single buffered']
    #allocation9 [shape = 's32[1]{0}', space=sflag, size = 0x4, scoped, tag = 'scoped memory for tpu_custom_call.1']
    #allocation10 [shape = 'u8[65536]{0}', space=vmem, size = 0x10000, scoped, tag = 'input window, operand 6, single buffered']
    #allocation11 [shape = 'u8[65536]{0}', space=vmem, size = 0x10000, scoped, tag = 'input window, operand 8, single buffered']
    #allocation12 [shape = 's32[1]{0}', space=sflag, size = 0x4, scoped, tag = 'scoped memory for tpu_custom_call.1']
    #allocation13 [shape = 'u8[16384]{0}', space=vmem, size = 0x4000, scoped, tag = 'output window, operand 0']
    %15 = vsyncpa [#allocation3], 0
    %s16 = scalar_lea.sflag [#allocation3], 1
    %17 = vsyncpa %s16, 0
    %18 = vsyncpa [#allocation6], 0
    %19 = vsyncpa [#allocation9], 0
    %20 = vsyncpa [#allocation12], 0
    %21 = vsyncpa [#allocation4], 0
    %s22 = scalar_lea.sflag [#allocation4], 1
    %23 = vsyncpa %s22, 0
    loop: start=0, step=1, limit=4
    $region2: #{tpu_custom_call.1} parent=1 // loop_pre_header
      _
    $region3: #{tpu_custom_call.1} parent=1 // loop_header
      %s25 = sphi 0, %s29
      %p26 = scmp.ge.s32.totalorder %s25, 4
      %s35 = sphi 0, %s37
      %s38 = sphi 0, %s35
      %s39 = sphi 0, %s38
      %s55 = sphi 0, %s39
      %s59 = sphi 0, %s59
      %s61 = sphi 0, %s59
      %s62 = sphi 0, %s61
      %s76 = sphi 0, %s62
      %s80 = sphi 0, %s80
      %s82 = sphi 0, %s80
      %s83 = sphi 0, %s82
      %s97 = sphi 0, %s83
      %s101 = sphi 0, %s101
      %s103 = sphi 0, %s101
      %s104 = sphi 0, %s103
      %s118 = sphi 0, %s104
      %s122 = sphi 0, %s122
      %s124 = sphi 0, %s122
      %s125 = sphi 0, %s124
      %s139 = sphi 0, %s125
      %s143 = sphi 0, %s143
      %s145 = sphi 0, %s143
      %s146 = sphi 0, %s145
      %s160 = sphi 0, %s146
      %s164 = sphi 0, %s164
      %s166 = sphi 0, %s164
      %s167 = sphi 0, %s166
      %s181 = sphi 0, %s167
      %s185 = sphi 0, %s185
      %s187 = sphi 0, %s185
      %s188 = sphi 0, %s187
      %s202 = sphi 0, %s188
      %s206 = sphi 0, %s206
      %s208 = sphi 0, %s206
      %s209 = sphi 0, %s208
      %s223 = sphi 0, %s209
      %s227 = sphi 0, %s227
      %s229 = sphi 0, %s227
      %s230 = sphi 0, %s229
      %s244 = sphi 0, %s230
      %s250 = sphi 0, %s252
      %s253 = sphi 0, %s250
      %s254 = sphi 0, %s253
      %s270 = sphi 0, %s254
    $region4: #{tpu_custom_call.1} parent=1 // loop_header_branch
      %28 = sbr.rel (%p26) target = $region8
    $region5: #{tpu_custom_call.1} parent=1 // loop_body
      %s30 = ssub.s32 %s25, 1
      %s31 = ssub.s32 %s25, 2
      %s32 = sadd.s32 %s25, 1
      %s33 = ssub.s32 %s25, %s32
      %p34 = scmp.eq.s32.totalorder %s33, 0
      %s36 = sadd.s32 %s35, 1
      %s37 = scalar_select %p34, %s35, %s36
      %p40 = pneg %p34
      %p41 = scmp.eq.s32.totalorder %s25, 1
      %p42 = por %p40, %p41
      %p43 = scmp.ne.s32.totalorder %s35, %s38
      %p44 = scmp.eq.s32.totalorder %s25, 0
      %p45 = por %p43, %p44
      %p46 = scmp.ne.s32.totalorder %s35, %s38
      %p47 = scmp.eq.s32.totalorder %s30, 1
      %p48 = por %p46, %p47
      %p49 = scmp.ne.s32.totalorder %s38, %s39
      %p50 = scmp.eq.s32.totalorder %s30, 0
      %p51 = por %p49, %p50
      %p52 = scmp.ne.s32.totalorder %s38, %s39
      %p53 = scmp.eq.s32.totalorder %s31, 1
      %p54 = por %p52, %p53
      %p56 = scmp.ne.s32.totalorder %s39, %s55
      %p57 = scmp.eq.s32.totalorder %s31, 0
      %p58 = por %p56, %p57
      %s60 = sadd.s32 %s59, 1
      %p63 = scmp.eq.s32.totalorder %s25, 1
      %p64 = scmp.ne.s32.totalorder %s59, %s61
      %p65 = scmp.eq.s32.totalorder %s25, 0
      %p66 = por %p64, %p65
      %p67 = scmp.ne.s32.totalorder %s59, %s61
      %p68 = scmp.eq.s32.totalorder %s30, 1
      %p69 = por %p67, %p68
      %p70 = scmp.ne.s32.totalorder %s61, %s62
      %p71 = scmp.eq.s32.totalorder %s30, 0
      %p72 = por %p70, %p71
      %p73 = scmp.ne.s32.totalorder %s61, %s62
      %p74 = scmp.eq.s32.totalorder %s31, 1
      %p75 = por %p73, %p74
      %p77 = scmp.ne.s32.totalorder %s62, %s76
      %p78 = scmp.eq.s32.totalorder %s31, 0
      %p79 = por %p77, %p78
      %s81 = sadd.s32 %s80, 1
      %p84 = scmp.eq.s32.totalorder %s25, 1
      %p85 = scmp.ne.s32.totalorder %s80, %s82
      %p86 = scmp.eq.s32.totalorder %s25, 0
      %p87 = por %p85, %p86
      %p88 = scmp.ne.s32.totalorder %s80, %s82
      %p89 = scmp.eq.s32.totalorder %s30, 1
      %p90 = por %p88, %p89
      %p91 = scmp.ne.s32.totalorder %s82, %s83
      %p92 = scmp.eq.s32.totalorder %s30, 0
      %p93 = por %p91, %p92
      %p94 = scmp.ne.s32.totalorder %s82, %s83
      %p95 = scmp.eq.s32.totalorder %s31, 1
      %p96 = por %p94, %p95
      %p98 = scmp.ne.s32.totalorder %s83, %s97
      %p99 = scmp.eq.s32.totalorder %s31, 0
      %p100 = por %p98, %p99
      %s102 = sadd.s32 %s101, 1
      %p105 = scmp.eq.s32.totalorder %s25, 1
      %p106 = scmp.ne.s32.totalorder %s101, %s103
      %p107 = scmp.eq.s32.totalorder %s25, 0
      %p108 = por %p106, %p107
      %p109 = scmp.ne.s32.totalorder %s101, %s103
      %p110 = scmp.eq.s32.totalorder %s30, 1
      %p111 = por %p109, %p110
      %p112 = scmp.ne.s32.totalorder %s103, %s104
      %p113 = scmp.eq.s32.totalorder %s30, 0
      %p114 = por %p112, %p113
      %p115 = scmp.ne.s32.totalorder %s103, %s104
      %p116 = scmp.eq.s32.totalorder %s31, 1
      %p117 = por %p115, %p116
      %p119 = scmp.ne.s32.totalorder %s104, %s118
      %p120 = scmp.eq.s32.totalorder %s31, 0
      %p121 = por %p119, %p120
      %s123 = sadd.s32 %s122, 1
      %p126 = scmp.eq.s32.totalorder %s25, 1
      %p127 = scmp.ne.s32.totalorder %s122, %s124
      %p128 = scmp.eq.s32.totalorder %s25, 0
      %p129 = por %p127, %p128
      %p130 = scmp.ne.s32.totalorder %s122, %s124
      %p131 = scmp.eq.s32.totalorder %s30, 1
      %p132 = por %p130, %p131
      %p133 = scmp.ne.s32.totalorder %s124, %s125
      %p134 = scmp.eq.s32.totalorder %s30, 0
      %p135 = por %p133, %p134
      %p136 = scmp.ne.s32.totalorder %s124, %s125
      %p137 = scmp.eq.s32.totalorder %s31, 1
      %p138 = por %p136, %p137
      %p140 = scmp.ne.s32.totalorder %s125, %s139
      %p141 = scmp.eq.s32.totalorder %s31, 0
      %p142 = por %p140, %p141
      %s144 = sadd.s32 %s143, 1
      %p147 = scmp.eq.s32.totalorder %s25, 1
      %p148 = scmp.ne.s32.totalorder %s143, %s145
      %p149 = scmp.eq.s32.totalorder %s25, 0
      %p150 = por %p148, %p149
      %p151 = scmp.ne.s32.totalorder %s143, %s145
      %p152 = scmp.eq.s32.totalorder %s30, 1
      %p153 = por %p151, %p152
      %p154 = scmp.ne.s32.totalorder %s145, %s146
      %p155 = scmp.eq.s32.totalorder %s30, 0
      %p156 = por %p154, %p155
      %p157 = scmp.ne.s32.totalorder %s145, %s146
      %p158 = scmp.eq.s32.totalorder %s31, 1
      %p159 = por %p157, %p158
      %p161 = scmp.ne.s32.totalorder %s146, %s160
      %p162 = scmp.eq.s32.totalorder %s31, 0
      %p163 = por %p161, %p162
      %s165 = sadd.s32 %s164, 1
      %p168 = scmp.eq.s32.totalorder %s25, 1
      %p169 = scmp.ne.s32.totalorder %s164, %s166
      %p170 = scmp.eq.s32.totalorder %s25, 0
      %p171 = por %p169, %p170
      %p172 = scmp.ne.s32.totalorder %s164, %s166
      %p173 = scmp.eq.s32.totalorder %s30, 1
      %p174 = por %p172, %p173
      %p175 = scmp.ne.s32.totalorder %s166, %s167
      %p176 = scmp.eq.s32.totalorder %s30, 0
      %p177 = por %p175, %p176
      %p178 = scmp.ne.s32.totalorder %s166, %s167
      %p179 = scmp.eq.s32.totalorder %s31, 1
      %p180 = por %p178, %p179
      %p182 = scmp.ne.s32.totalorder %s167, %s181
      %p183 = scmp.eq.s32.totalorder %s31, 0
      %p184 = por %p182, %p183
      %s186 = sadd.s32 %s185, 1
      %p189 = scmp.eq.s32.totalorder %s25, 1
      %p190 = scmp.ne.s32.totalorder %s185, %s187
      %p191 = scmp.eq.s32.totalorder %s25, 0
      %p192 = por %p190, %p191
      %p193 = scmp.ne.s32.totalorder %s185, %s187
      %p194 = scmp.eq.s32.totalorder %s30, 1
      %p195 = por %p193, %p194
      %p196 = scmp.ne.s32.totalorder %s187, %s188
      %p197 = scmp.eq.s32.totalorder %s30, 0
      %p198 = por %p196, %p197
      %p199 = scmp.ne.s32.totalorder %s187, %s188
      %p200 = scmp.eq.s32.totalorder %s31, 1
      %p201 = por %p199, %p200
      %p203 = scmp.ne.s32.totalorder %s188, %s202
      %p204 = scmp.eq.s32.totalorder %s31, 0
      %p205 = por %p203, %p204
      %s207 = sadd.s32 %s206, 1
      %p210 = scmp.eq.s32.totalorder %s25, 1
      %p211 = scmp.ne.s32.totalorder %s206, %s208
      %p212 = scmp.eq.s32.totalorder %s25, 0
      %p213 = por %p211, %p212
      %p214 = scmp.ne.s32.totalorder %s206, %s208
      %p215 = scmp.eq.s32.totalorder %s30, 1
      %p216 = por %p214, %p215
      %p217 = scmp.ne.s32.totalorder %s208, %s209
      %p218 = scmp.eq.s32.totalorder %s30, 0
      %p219 = por %p217, %p218
      %p220 = scmp.ne.s32.totalorder %s208, %s209
      %p221 = scmp.eq.s32.totalorder %s31, 1
      %p222 = por %p220, %p221
      %p224 = scmp.ne.s32.totalorder %s209, %s223
      %p225 = scmp.eq.s32.totalorder %s31, 0
      %p226 = por %p224, %p225
      %s228 = sadd.s32 %s227, 1
      %p231 = scmp.eq.s32.totalorder %s25, 1
      %p232 = scmp.ne.s32.totalorder %s227, %s229
      %p233 = scmp.eq.s32.totalorder %s25, 0
      %p234 = por %p232, %p233
      %p235 = scmp.ne.s32.totalorder %s227, %s229
      %p236 = scmp.eq.s32.totalorder %s30, 1
      %p237 = por %p235, %p236
      %p238 = scmp.ne.s32.totalorder %s229, %s230
      %p239 = scmp.eq.s32.totalorder %s30, 0
      %p240 = por %p238, %p239
      %p241 = scmp.ne.s32.totalorder %s229, %s230
      %p242 = scmp.eq.s32.totalorder %s31, 1
      %p243 = por %p241, %p242
      %p245 = scmp.ne.s32.totalorder %s230, %s244
      %p246 = scmp.eq.s32.totalorder %s31, 0
      %p247 = por %p245, %p246
      %s248 = ssub.s32 %s25, %s32
      %p249 = scmp.eq.s32.totalorder %s248, 0
      %s251 = sadd.s32 %s250, 1
      %s252 = scalar_select %p249, %s250, %s251
      %p255 = pneg %p249
      %p256 = scmp.eq.s32.totalorder %s25, 1
      %p257 = por %p255, %p256
      %p258 = scmp.ne.s32.totalorder %s250, %s253
      %p259 = scmp.eq.s32.totalorder %s25, 0
      %p260 = por %p258, %p259
      %p261 = scmp.ne.s32.totalorder %s250, %s253
      %p262 = scmp.eq.s32.totalorder %s30, 1
      %p263 = por %p261, %p262
      %p264 = scmp.ne.s32.totalorder %s253, %s254
      %p265 = scmp.eq.s32.totalorder %s30, 0
      %p266 = por %p264, %p265
      %p267 = scmp.ne.s32.totalorder %s253, %s254
      %p268 = scmp.eq.s32.totalorder %s31, 1
      %p269 = por %p267, %p268
      %p271 = scmp.ne.s32.totalorder %s254, %s270
      %p272 = scmp.eq.s32.totalorder %s31, 0
      %p273 = por %p271, %p272
      %p274 = scmp.le.s32.totalorder 1, %s25
      %p275 = scmp.lt.s32.totalorder %s25, 3
      %p276 = pnand %p274, %p275
      %p277 = pneg %p276
      // Predicated region
      $region9: #{tpu_custom_call.1} parent=5 // pred_check
        _
      $region10: #{tpu_custom_call.1} parent=5 // pred_check_branch
        %279 = sbr.rel (%p276) target = $region12
      $region11: #{tpu_custom_call.1} parent=5 // pred_region
        %s280 = ssub.s32 %s25, 1
        // Predicated region
        $region13: #{tpu_custom_call.1} parent=11 // pred_check
          %p281 = pneg %p72
        $region14: #{tpu_custom_call.1} parent=11 // pred_check_branch
          %283 = sbr.rel (%p281) target = $region16
        $region15: #{tpu_custom_call.1} parent=11 // pred_region
          %285 = vsyncadd [#allocation6], 0
          %s287 = sshll.u32 %s1, 4
          %s288 = int_to_ptr.hbm [resolvable:$true] %s287
          %s289 = sshll.u32 [#allocation5], 4
          %s290 = int_to_ptr.vmem [resolvable:$true] %s289
          %292 = dma.hbm_to_vmem [thread:$0]  %s288, 64, %s290, [#allocation6]
        $region16: #{tpu_custom_call.1} parent=11 // pred_fallthru
          _
        // Predicated region
        $region17: #{tpu_custom_call.1} parent=11 // pred_check
          %p293 = pneg %p93
        $region18: #{tpu_custom_call.1} parent=11 // pred_check_branch
          %295 = sbr.rel (%p293) target = $region20
        $region19: #{tpu_custom_call.1} parent=11 // pred_region
          %297 = vsyncadd [#allocation6], 0
          %s299 = sshll.u32 %s2, 4
          %s300 = int_to_ptr.hbm [resolvable:$true] %s299
          %s301 = sshll.u32 [#allocation7], 4
          %s302 = int_to_ptr.vmem [resolvable:$true] %s301
          %304 = dma.hbm_to_vmem [thread:$0]  %s300, 64, %s302, [#allocation6]
        $region20: #{tpu_custom_call.1} parent=11 // pred_fallthru
          _
        // Predicated region
        $region21: #{tpu_custom_call.1} parent=11 // pred_check
          %p305 = pneg %p114
        $region22: #{tpu_custom_call.1} parent=11 // pred_check_branch
          %307 = sbr.rel (%p305) target = $region24
        $region23: #{tpu_custom_call.1} parent=11 // pred_region
          %309 = vsyncadd [#allocation9], 0
          %s310 = sshll.u32 %s3, 4
          %s311 = int_to_ptr.hbm [resolvable:$true] %s310
          %s312 = sshll.u32 [#allocation8], 4
          %s313 = int_to_ptr.vmem [resolvable:$true] %s312
          %318 = dma.hbm_to_vmem [thread:$0]  %s311, 2048, %s313, [#allocation9], 128, 128, 8
        $region24: #{tpu_custom_call.1} parent=11 // pred_fallthru
          _
        // Predicated region
        $region25: #{tpu_custom_call.1} parent=11 // pred_check
          %p319 = pneg %p135
        $region26: #{tpu_custom_call.1} parent=11 // pred_check_branch
          %321 = sbr.rel (%p319) target = $region28
        $region27: #{tpu_custom_call.1} parent=11 // pred_region
          _
        $region28: #{tpu_custom_call.1} parent=11 // pred_fallthru
          _
        // Predicated region
        $region29: #{tpu_custom_call.1} parent=11 // pred_check
          %p322 = pneg %p156
        $region30: #{tpu_custom_call.1} parent=11 // pred_check_branch
          %324 = sbr.rel (%p322) target = $region32
        $region31: #{tpu_custom_call.1} parent=11 // pred_region
          _
        $region32: #{tpu_custom_call.1} parent=11 // pred_fallthru
          _
        // Predicated region
        $region33: #{tpu_custom_call.1} parent=11 // pred_check
          %p325 = pneg %p177
        $region34: #{tpu_custom_call.1} parent=11 // pred_check_branch
          %327 = sbr.rel (%p325) target = $region36
        $region35: #{tpu_custom_call.1} parent=11 // pred_region
          %329 = vsyncadd [#allocation9], 0
          %s330 = sshll.u32 %s6, 4
          %s331 = int_to_ptr.hbm [resolvable:$true] %s330
          %s332 = sshll.u32 [#allocation10], 4
          %s333 = int_to_ptr.vmem [resolvable:$true] %s332
          %338 = dma.hbm_to_vmem [thread:$0]  %s331, 2048, %s333, [#allocation9], 128, 128, 8
        $region36: #{tpu_custom_call.1} parent=11 // pred_fallthru
          _
        // Predicated region
        $region37: #{tpu_custom_call.1} parent=11 // pred_check
          %p339 = pneg %p198
        $region38: #{tpu_custom_call.1} parent=11 // pred_check_branch
          %341 = sbr.rel (%p339) target = $region40
        $region39: #{tpu_custom_call.1} parent=11 // pred_region
          _
        $region40: #{tpu_custom_call.1} parent=11 // pred_fallthru
          _
        // Predicated region
        $region41: #{tpu_custom_call.1} parent=11 // pred_check
          %p342 = pneg %p219
        $region42: #{tpu_custom_call.1} parent=11 // pred_check_branch
          %344 = sbr.rel (%p342) target = $region44
        $region43: #{tpu_custom_call.1} parent=11 // pred_region
          %346 = vsyncadd [#allocation12], 0
          %s347 = sshll.u32 %s8, 4
          %s348 = int_to_ptr.hbm [resolvable:$true] %s347
          %s349 = sshll.u32 [#allocation11], 4
          %s350 = int_to_ptr.vmem [resolvable:$true] %s349
          %355 = dma.hbm_to_vmem [thread:$0]  %s348, 2048, %s350, [#allocation12], 64, 64, 4
        $region44: #{tpu_custom_call.1} parent=11 // pred_fallthru
          _
        // Predicated region
        $region45: #{tpu_custom_call.1} parent=11 // pred_check
          %p356 = pneg %p240
        $region46: #{tpu_custom_call.1} parent=11 // pred_check_branch
          %358 = sbr.rel (%p356) target = $region48
        $region47: #{tpu_custom_call.1} parent=11 // pred_region
          _
        $region48: #{tpu_custom_call.1} parent=11 // pred_fallthru
          _
      $region12: #{tpu_custom_call.1} parent=5 // pred_fallthru
        _
      %p359 = scmp.lt.s32.totalorder %s25, 2
      // Predicated region
      $region49: #{tpu_custom_call.1} parent=5 // pred_check
        %p360 = pneg %p359
      $region50: #{tpu_custom_call.1} parent=5 // pred_check_branch
        %362 = sbr.rel (%p360) target = $region52
      $region51: #{tpu_custom_call.1} parent=5 // pred_region
        // Predicated region
        $region53: #{tpu_custom_call.1} parent=51 // pred_check
          %p363 = pneg %p45
        $region54: #{tpu_custom_call.1} parent=51 // pred_check_branch
          %365 = sbr.rel (%p363) target = $region56
        $region55: #{tpu_custom_call.1} parent=51 // pred_region
          %s366 = sand.u32 %s35, 1
          %s367 = scalar_lea.sflag [#allocation3], %s366
          %s368 = sand.u32 %s35, 1
          %s369 = smul.addr %s368, 16
          %s370 = scalar_lea.vmem [#allocation2], %s369
          %s371 = smul.u32 2, %s25
          %373 = vsyncadd %s367, 0
          %s374 = smul.addr %s371, 8
          %s375 = scalar_lea.hbm %s0, %s374
          %s376 = sshll.u32 %s375, 4
          %s377 = int_to_ptr.hbm [resolvable:$true] %s376
          %s378 = sshll.u32 %s370, 4
          %s379 = int_to_ptr.vmem [resolvable:$true] %s378
          %384 = dma.hbm_to_vmem [thread:$0]  %s377, 256, %s379, %s367, 128, 128, 8
        $region56: #{tpu_custom_call.1} parent=51 // pred_fallthru
          _
      $region52: #{tpu_custom_call.1} parent=5 // pred_fallthru
        _
      %p385 = scmp.le.s32.totalorder 1, %s25
      %p386 = scmp.lt.s32.totalorder %s25, 3
      %p387 = pnand %p385, %p386
      %p388 = pneg %p387
      // Predicated region
      $region57: #{tpu_custom_call.1} parent=5 // pred_check
        _
      $region58: #{tpu_custom_call.1} parent=5 // pred_check_branch
        %390 = sbr.rel (%p387) target = $region60
      $region59: #{tpu_custom_call.1} parent=5 // pred_region
        %s391 = ssub.s32 %s25, 1
        %s392 = sand.u32 %s38, 1
        %s393 = scalar_lea.sflag [#allocation3], %s392
        %s394 = sand.u32 %s38, 1
        %s395 = smul.addr %s394, 16
        %s396 = scalar_lea.vmem [#allocation2], %s395
        // Predicated region
        $region61: #{tpu_custom_call.1} parent=59 // pred_check
          %p397 = pneg %p51
        $region62: #{tpu_custom_call.1} parent=59 // pred_check_branch
          %399 = sbr.rel (%p397) target = $region64
        $region63: #{tpu_custom_call.1} parent=59 // pred_region
          %401 = dma.done %s393, 256
        $region64: #{tpu_custom_call.1} parent=59 // pred_fallthru
          _
        // Predicated region
        $region65: #{tpu_custom_call.1} parent=59 // pred_check
          %p402 = pneg %p72
        $region66: #{tpu_custom_call.1} parent=59 // pred_check_branch
          %404 = sbr.rel (%p402) target = $region68
        $region67: #{tpu_custom_call.1} parent=59 // pred_region
          %406 = dma.done [#allocation6], 64
        $region68: #{tpu_custom_call.1} parent=59 // pred_fallthru
          _
        // Predicated region
        $region69: #{tpu_custom_call.1} parent=59 // pred_check
          %p407 = pneg %p93
        $region70: #{tpu_custom_call.1} parent=59 // pred_check_branch
          %409 = sbr.rel (%p407) target = $region72
        $region71: #{tpu_custom_call.1} parent=59 // pred_region
          %411 = dma.done [#allocation6], 64
        $region72: #{tpu_custom_call.1} parent=59 // pred_fallthru
          _
        // Predicated region
        $region73: #{tpu_custom_call.1} parent=59 // pred_check
          %p412 = pneg %p114
        $region74: #{tpu_custom_call.1} parent=59 // pred_check_branch
          %414 = sbr.rel (%p412) target = $region76
        $region75: #{tpu_custom_call.1} parent=59 // pred_region
          %416 = dma.done [#allocation9], 2048
        $region76: #{tpu_custom_call.1} parent=59 // pred_fallthru
          _
        // Predicated region
        $region77: #{tpu_custom_call.1} parent=59 // pred_check
          %p417 = pneg %p177
        $region78: #{tpu_custom_call.1} parent=59 // pred_check_branch
          %419 = sbr.rel (%p417) target = $region80
        $region79: #{tpu_custom_call.1} parent=59 // pred_region
          %421 = dma.done [#allocation9], 2048
        $region80: #{tpu_custom_call.1} parent=59 // pred_fallthru
          _
        // Predicated region
        $region81: #{tpu_custom_call.1} parent=59 // pred_check
          %p422 = pneg %p219
        $region82: #{tpu_custom_call.1} parent=59 // pred_check_branch
          %424 = sbr.rel (%p422) target = $region84
        $region83: #{tpu_custom_call.1} parent=59 // pred_region
          %426 = dma.done [#allocation12], 2048
        $region84: #{tpu_custom_call.1} parent=59 // pred_fallthru
          _
        %s427 = sand.u32 %s38, 1
        %s428 = scalar_lea.sflag [#allocation3], %s427
        %s429 = sand.u32 %s38, 1
        %s430 = smul.addr %s429, 16
        %s431 = scalar_lea.vmem [#allocation2], %s430
        %p432 = pneg %p51
        %p433 = pneg %p48
        %p434 = pneg %p72
        %p435 = pneg %p69
        %p436 = pneg %p93
        %p437 = pneg %p90
        %p438 = pneg %p114
        %p439 = pneg %p111
        %p440 = pneg %p135
        %p441 = pneg %p132
        %p442 = pneg %p156
        %p443 = pneg %p153
        %p444 = pneg %p177
        %p445 = pneg %p174
        %p446 = pneg %p198
        %p447 = pneg %p195
        %p448 = pneg %p219
        %p449 = pneg %p216
        %p450 = pneg %p240
        %p451 = pneg %p237
        %p452 = pneg %p266
        %p453 = pneg %p263
        %s454 = sand.u32 %s253, 1
        %s455 = scalar_lea.sflag [#allocation4], %s454
        %s456 = sand.u32 %s253, 1
        %s457 = smul.addr %s456, 16
        %s458 = scalar_lea.vmem [#allocation13], %s457
        %s459 = smul.u32 2, %s30
        %s460 = smul.u32 2, %s30
        %v462 = vld [vmem:[%s4] sm:$0x1]
        %v463 = vld [vmem:[%s5] sm:$0x1]
        %v464 = vld [vmem:[%s7] sm:$0x3]
        %v465 = vld [vmem:[%s9] sm:$0x1]
        %v466 = vld [vmem:[#allocation8] sm:$0xff]
        %v467 = vld [vmem:[#allocation8 + $0x8] sm:$0xff]
        %v468 = vld [vmem:[#allocation8 + $0x10] sm:$0xff]
        %v469 = vld [vmem:[#allocation8 + $0x18] sm:$0xff]
        %v470 = vld [vmem:[#allocation8 + $0x20] sm:$0xff]
        %v471 = vld [vmem:[#allocation8 + $0x28] sm:$0xff]
        %v472 = vld [vmem:[#allocation8 + $0x30] sm:$0xff]
        %v473 = vld [vmem:[#allocation8 + $0x38] sm:$0xff]
        %v474 = vld [vmem:[#allocation8 + $0x40] sm:$0xff]
        %v475 = vld [vmem:[#allocation8 + $0x48] sm:$0xff]
        %v476 = vld [vmem:[#allocation8 + $0x50] sm:$0xff]
        %v477 = vld [vmem:[#allocation8 + $0x58] sm:$0xff]
        %v478 = vld [vmem:[#allocation8 + $0x60] sm:$0xff]
        %v479 = vld [vmem:[#allocation8 + $0x68] sm:$0xff]
        %v480 = vld [vmem:[#allocation8 + $0x70] sm:$0xff]
        %v481 = vld [vmem:[#allocation8 + $0x78] sm:$0xff]
        %v482 = vld [vmem:[#allocation10] sm:$0xff]
        %v483 = vld [vmem:[#allocation10 + $0x8] sm:$0xff]
        %v484 = vld [vmem:[#allocation10 + $0x10] sm:$0xff]
        %v485 = vld [vmem:[#allocation10 + $0x18] sm:$0xff]
        %v486 = vld [vmem:[#allocation10 + $0x20] sm:$0xff]
        %v487 = vld [vmem:[#allocation10 + $0x28] sm:$0xff]
        %v488 = vld [vmem:[#allocation10 + $0x30] sm:$0xff]
        %v489 = vld [vmem:[#allocation10 + $0x38] sm:$0xff]
        %v490 = vld [vmem:[#allocation10 + $0x40] sm:$0xff]
        %v491 = vld [vmem:[#allocation10 + $0x48] sm:$0xff]
        %v492 = vld [vmem:[#allocation10 + $0x50] sm:$0xff]
        %v493 = vld [vmem:[#allocation10 + $0x58] sm:$0xff]
        %v494 = vld [vmem:[#allocation10 + $0x60] sm:$0xff]
        %v495 = vld [vmem:[#allocation10 + $0x68] sm:$0xff]
        %v496 = vld [vmem:[#allocation10 + $0x70] sm:$0xff]
        %v497 = vld [vmem:[#allocation10 + $0x78] sm:$0xff]
        %v498 = vld [vmem:[#allocation11] sm:$0xf]
        %v499 = vld [vmem:[#allocation11 + $0x4] sm:$0xf]
        %v500 = vld [vmem:[#allocation11 + $0x8] sm:$0xf]
        %v501 = vld [vmem:[#allocation11 + $0xc] sm:$0xf]
        %v502 = vld [vmem:[#allocation11 + $0x10] sm:$0xf]
        %v503 = vld [vmem:[#allocation11 + $0x14] sm:$0xf]
        %v504 = vld [vmem:[#allocation11 + $0x18] sm:$0xf]
        %v505 = vld [vmem:[#allocation11 + $0x1c] sm:$0xf]
        %v506 = vld [vmem:[#allocation11 + $0x20] sm:$0xf]
        %v507 = vld [vmem:[#allocation11 + $0x24] sm:$0xf]
        %v508 = vld [vmem:[#allocation11 + $0x28] sm:$0xf]
        %v509 = vld [vmem:[#allocation11 + $0x2c] sm:$0xf]
        %v510 = vld [vmem:[#allocation11 + $0x30] sm:$0xf]
        %v511 = vld [vmem:[#allocation11 + $0x34] sm:$0xf]
        %v512 = vld [vmem:[#allocation11 + $0x38] sm:$0xf]
        %v513 = vld [vmem:[#allocation11 + $0x3c] sm:$0xf]
        %v514 = vld [vmem:[#allocation11 + $0x40] sm:$0xf]
        %v515 = vld [vmem:[#allocation11 + $0x44] sm:$0xf]
        %v516 = vld [vmem:[#allocation11 + $0x48] sm:$0xf]
        %v517 = vld [vmem:[#allocation11 + $0x4c] sm:$0xf]
        %v518 = vld [vmem:[#allocation11 + $0x50] sm:$0xf]
        %v519 = vld [vmem:[#allocation11 + $0x54] sm:$0xf]
        %v520 = vld [vmem:[#allocation11 + $0x58] sm:$0xf]
        %v521 = vld [vmem:[#allocation11 + $0x5c] sm:$0xf]
        %v522 = vld [vmem:[#allocation11 + $0x60] sm:$0xf]
        %v523 = vld [vmem:[#allocation11 + $0x64] sm:$0xf]
        %v524 = vld [vmem:[#allocation11 + $0x68] sm:$0xf]
        %v525 = vld [vmem:[#allocation11 + $0x6c] sm:$0xf]
        %v526 = vld [vmem:[#allocation11 + $0x70] sm:$0xf]
        %v527 = vld [vmem:[#allocation11 + $0x74] sm:$0xf]
        %v528 = vld [vmem:[#allocation11 + $0x78] sm:$0xf]
        %v529 = vld [vmem:[#allocation11 + $0x7c] sm:$0xf]
        %v530 = vld [vmem:[#allocation5] sm:$0xf]
        %v531 = vld [vmem:[#allocation7] sm:$0xf]
        %v532 = vld [vmem:[%s396] sm:$0xff]
        %v533 = vld [vmem:[%s396 + $0x8] sm:$0xff]
        %v534 = vpack.c.bf16 %v533, %v532
        %v551 = vunpack.c.l.b16 %v466
        %v552 = vunpack.c.h.b16 %v466
        %v553 = vunpack.c.l.b16 %v467
        %v554 = vunpack.c.h.b16 %v467
        %v555 = vunpack.c.l.b16 %v468
        %v556 = vunpack.c.h.b16 %v468
        %v557 = vunpack.c.l.b16 %v469
        %v558 = vunpack.c.h.b16 %v469
        %v559 = vunpack.c.l.b16 %v470
        %v560 = vunpack.c.h.b16 %v470
        %v561 = vunpack.c.l.b16 %v471
        %v562 = vunpack.c.h.b16 %v471
        %v563 = vunpack.c.l.b16 %v472
        %v564 = vunpack.c.h.b16 %v472
        %v565 = vunpack.c.l.b16 %v473
        %v566 = vunpack.c.h.b16 %v473
        %v567 = vunpack.c.l.b16 %v474
        %v568 = vunpack.c.h.b16 %v474
        %v569 = vunpack.c.l.b16 %v475
        %v570 = vunpack.c.h.b16 %v475
        %v571 = vunpack.c.l.b16 %v476
        %v572 = vunpack.c.h.b16 %v476
        %v573 = vunpack.c.l.b16 %v477
        %v574 = vunpack.c.h.b16 %v477
        %v575 = vunpack.c.l.b16 %v478
        %v576 = vunpack.c.h.b16 %v478
        %v577 = vunpack.c.l.b16 %v479
        %v578 = vunpack.c.h.b16 %v479
        %v579 = vunpack.c.l.b16 %v480
        %v580 = vunpack.c.h.b16 %v480
        %v581 = vunpack.c.l.b16 %v481
        %v582 = vunpack.c.h.b16 %v481
        %v583 = vpack.c.b16 %v553, %v551
        %v584 = vpack.c.b16 %v554, %v552
        %v585 = vpack.c.b16 %v557, %v555
        %v586 = vpack.c.b16 %v558, %v556
        %v587 = vpack.c.b16 %v561, %v559
        %v588 = vpack.c.b16 %v562, %v560
        %v589 = vpack.c.b16 %v565, %v563
        %v590 = vpack.c.b16 %v566, %v564
        %v591 = vpack.c.b16 %v569, %v567
        %v592 = vpack.c.b16 %v570, %v568
        %v593 = vpack.c.b16 %v573, %v571
        %v594 = vpack.c.b16 %v574, %v572
        %v595 = vpack.c.b16 %v577, %v575
        %v596 = vpack.c.b16 %v578, %v576
        %v597 = vpack.c.b16 %v581, %v579
        %v598 = vpack.c.b16 %v582, %v580
        %615 = vmatpush.bf16.msra.mxu0 %v597
        %616 = vmatpush.bf16.msra.mxu0 %v595
        %617 = vmatpush.bf16.msra.mxu0 %v593
        %618 = vmatpush.bf16.msra.mxu0 %v591
        %619 = vmatpush.bf16.msra.mxu0 %v589
        %620 = vmatpush.bf16.msra.mxu0 %v587
        %621 = vmatpush.bf16.msra.mxu0 %v585
        %622 = vmatpush.bf16.msra.mxu0 %v583
        %623 = vmatmul.bf16.gmra.mxu0 %v534
        %v624 = vpop.f32.mrf.mxu0
        %v625 = vadd.f32 0.0, %v624
        %v626 = vpop.f32.mrf.mxu0
        %v627 = vadd.f32 0.0, %v626
        %628 = vdwg.mxu0
        %629 = vmatpush.bf16.msra.mxu0 %v598
        %630 = vmatpush.bf16.msra.mxu0 %v596
        %631 = vmatpush.bf16.msra.mxu0 %v594
        %632 = vmatpush.bf16.msra.mxu0 %v592
        %633 = vmatpush.bf16.msra.mxu0 %v590
        %634 = vmatpush.bf16.msra.mxu0 %v588
        %635 = vmatpush.bf16.msra.mxu0 %v586
        %636 = vmatpush.bf16.msra.mxu0 %v584
        %637 = vmatmul.bf16.gmra.mxu0 %v534
        %v638 = vpop.f32.mrf.mxu0
        %v639 = vadd.f32 0.0, %v638
        %v640 = vpop.f32.mrf.mxu0
        %v641 = vadd.f32 0.0, %v640
        %642 = vdwg.mxu0
        %v643 = vpack.c.bf16 %v625, %v625
        %v644 = vpack.c.bf16 %v627, %v627
        %v645 = vpack.c.bf16 %v639, %v639
        %v646 = vpack.c.bf16 %v641, %v641
        %vm647 = vcmask 64512
        %v649 = vsel %vm647, %v530, 0
        %vm651 = vcmask 1043456
        %v653 = vsel %vm651, %v643, 0
        %655 = vmatpush.bf16.msra.mxu0 0
        %656 = vmatpush.bf16.msra.mxu0 0
        %657 = vmatpush.bf16.msra.mxu0 0
        %658 = vmatpush.bf16.msra.mxu0 0
        %659 = vmatpush.bf16.msra.mxu0 0
        %660 = vmatpush.bf16.msra.mxu0 0
        %661 = vmatpush.bf16.msra.mxu0 0
        %662 = vmatpush.bf16.msra.mxu0 %v653
        %663 = vmatmul.bf16.gmra.mxu0 %v649
        %v664 = vpop.f32.mrf.mxu0
        %v665 = vadd.f32 0.0, %v664
        %v666 = vpop.f32.mrf.mxu0
        %667 = vdwg.mxu0
        %v669 = vsel %vm651, %v644, 0
        %671 = vmatpush.bf16.msra.mxu0 0
        %672 = vmatpush.bf16.msra.mxu0 0
        %673 = vmatpush.bf16.msra.mxu0 0
        %674 = vmatpush.bf16.msra.mxu0 0
        %675 = vmatpush.bf16.msra.mxu0 0
        %676 = vmatpush.bf16.msra.mxu0 0
        %677 = vmatpush.bf16.msra.mxu0 0
        %678 = vmatpush.bf16.msra.mxu0 %v669
        %679 = vmatmul.bf16.gmra.mxu0 %v649
        %v680 = vpop.f32.mrf.mxu0
        %v681 = vadd.f32 0.0, %v680
        %v682 = vpop.f32.mrf.mxu0
        %683 = vdwg.mxu0
        %v685 = vsel %vm647, %v531, 0
        %v688 = vsel %vm651, %v645, 0
        %690 = vmatpush.bf16.msra.mxu0 0
        %691 = vmatpush.bf16.msra.mxu0 0
        %692 = vmatpush.bf16.msra.mxu0 0
        %693 = vmatpush.bf16.msra.mxu0 0
        %694 = vmatpush.bf16.msra.mxu0 0
        %695 = vmatpush.bf16.msra.mxu0 0
        %696 = vmatpush.bf16.msra.mxu0 0
        %697 = vmatpush.bf16.msra.mxu0 %v688
        %698 = vmatmul.bf16.gmra.mxu0 %v685
        %v699 = vpop.f32.mrf.mxu0
        %v700 = vadd.f32 0.0, %v699
        %v701 = vpop.f32.mrf.mxu0
        %702 = vdwg.mxu0
        %v704 = vsel %vm651, %v646, 0
        %706 = vmatpush.bf16.msra.mxu0 0
        %707 = vmatpush.bf16.msra.mxu0 0
        %708 = vmatpush.bf16.msra.mxu0 0
        %709 = vmatpush.bf16.msra.mxu0 0
        %710 = vmatpush.bf16.msra.mxu0 0
        %711 = vmatpush.bf16.msra.mxu0 0
        %712 = vmatpush.bf16.msra.mxu0 0
        %713 = vmatpush.bf16.msra.mxu0 %v704
        %714 = vmatmul.bf16.gmra.mxu0 %v685
        %v715 = vpop.f32.mrf.mxu0
        %v716 = vadd.f32 0.0, %v715
        %v717 = vpop.f32.mrf.mxu0
        %718 = vdwg.mxu0
        %v719 = vsub.f32 %v665, %v700
        %v720 = vsub.f32 %v681, %v716
        %v721 = vadd.f32 %v719, %v532
        %v722 = vadd.f32 %v720, %v533
        %723 = vadd.xlane.f32.xlu0 %v721
        %v724 = vpop.xlane.xlu0 %723
        %725 = vadd.xlane.f32.xlu0 %v722
        %v726 = vpop.xlane.xlu0 %725
        %v727 = vrcp.pop 128.0
        %v728 = vmul.f32 128.0, %v727
        %v729 = vsub.f32 1.0, %v728
        %v730 = vmul.f32 %v727, %v729
        %v731 = vadd.f32 %v727, %v730
        %vm732 = vweird.f32 %v727
        %v733 = vsel %vm732, %v727, %v731
        %v734 = vmul.f32 %v724, %v733
        %v735 = vmul.f32 %v726, %v733
        %v736 = vmul.f32 %v721, %v721
        %v737 = vmul.f32 %v722, %v722
        %738 = vadd.xlane.f32.xlu0 %v736
        %v739 = vpop.xlane.xlu0 %738
        %740 = vadd.xlane.f32.xlu0 %v737
        %v741 = vpop.xlane.xlu0 %740
        %v742 = vmul.f32 %v739, %v733
        %v743 = vmul.f32 %v741, %v733
        %v744 = vmul.f32 %v734, %v734
        %v745 = vmul.f32 %v735, %v735
        %v746 = vsub.f32 %v742, %v744
        %v747 = vsub.f32 %v743, %v745
        %v748 = vmax.f32 %v746, 0.0
        %v749 = vmax.f32 %v747, 0.0
        %v750 = vsub.f32 %v721, %v734
        %v751 = vsub.f32 %v722, %v735
        %v752 = vadd.f32 %v748, 1e-05
        %v753 = vadd.f32 %v749, 1e-05
        %v754 = vrsqrt.pop %v752
        %v755 = vmul.f32 %v754, %v752
        %v756 = vmul.f32 %v755, %v754
        %v757 = vmul.f32 0.5, %v756
        %v758 = vsub.f32 1.5, %v757
        %v759 = vmul.f32 %v754, %v758
        %vm760 = vweird.f32 %v752
        %vm761 = vweird.f32 %v754
        %vm762 = vmor %vm760, %vm761
        %v763 = vsel %vm762, %v754, %v759
        %v764 = vrsqrt.pop %v753
        %v765 = vmul.f32 %v764, %v753
        %v766 = vmul.f32 %v765, %v764
        %v767 = vmul.f32 0.5, %v766
        %v768 = vsub.f32 1.5, %v767
        %v769 = vmul.f32 %v764, %v768
        %vm770 = vweird.f32 %v753
        %vm771 = vweird.f32 %v764
        %vm772 = vmor %vm770, %vm771
        %v773 = vsel %vm772, %v764, %v769
        %v774 = vmul.f32 %v750, %v763
        %v775 = vmul.f32 %v751, %v773
        %v777 = vperm.slane %v462, 0
        %v779 = vmul.f32 %v774, %v777
        %v780 = vmul.f32 %v775, %v777
        %v782 = vperm.slane %v463, 0
        %v784 = vadd.f32 %v779, %v782
        %v785 = vadd.f32 %v780, %v782
        %v786 = vpack.c.bf16 %v785, %v784
        %v788 = vperm.slane %v464, 0
        %v789 = vperm.slane %v464, 1
        %v808 = vunpack.c.l.b16 %v482
        %v809 = vunpack.c.h.b16 %v482
        %v810 = vunpack.c.l.b16 %v483
        %v811 = vunpack.c.h.b16 %v483
        %v812 = vunpack.c.l.b16 %v484
        %v813 = vunpack.c.h.b16 %v484
        %v814 = vunpack.c.l.b16 %v485
        %v815 = vunpack.c.h.b16 %v485
        %v816 = vunpack.c.l.b16 %v486
        %v817 = vunpack.c.h.b16 %v486
        %v818 = vunpack.c.l.b16 %v487
        %v819 = vunpack.c.h.b16 %v487
        %v820 = vunpack.c.l.b16 %v488
        %v821 = vunpack.c.h.b16 %v488
        %v822 = vunpack.c.l.b16 %v489
        %v823 = vunpack.c.h.b16 %v489
        %v824 = vunpack.c.l.b16 %v490
        %v825 = vunpack.c.h.b16 %v490
        %v826 = vunpack.c.l.b16 %v491
        %v827 = vunpack.c.h.b16 %v491
        %v828 = vunpack.c.l.b16 %v492
        %v829 = vunpack.c.h.b16 %v492
        %v830 = vunpack.c.l.b16 %v493
        %v831 = vunpack.c.h.b16 %v493
        %v832 = vunpack.c.l.b16 %v494
        %v833 = vunpack.c.h.b16 %v494
        %v834 = vunpack.c.l.b16 %v495
        %v835 = vunpack.c.h.b16 %v495
        %v836 = vunpack.c.l.b16 %v496
        %v837 = vunpack.c.h.b16 %v496
        %v838 = vunpack.c.l.b16 %v497
        %v839 = vunpack.c.h.b16 %v497
        %v840 = vpack.c.b16 %v810, %v808
        %v841 = vpack.c.b16 %v811, %v809
        %v842 = vpack.c.b16 %v814, %v812
        %v843 = vpack.c.b16 %v815, %v813
        %v844 = vpack.c.b16 %v818, %v816
        %v845 = vpack.c.b16 %v819, %v817
        %v846 = vpack.c.b16 %v822, %v820
        %v847 = vpack.c.b16 %v823, %v821
        %v848 = vpack.c.b16 %v826, %v824
        %v849 = vpack.c.b16 %v827, %v825
        %v850 = vpack.c.b16 %v830, %v828
        %v851 = vpack.c.b16 %v831, %v829
        %v852 = vpack.c.b16 %v834, %v832
        %v853 = vpack.c.b16 %v835, %v833
        %v854 = vpack.c.b16 %v838, %v836
        %v855 = vpack.c.b16 %v839, %v837
        %872 = vmatpush.bf16.msra.mxu0 %v854
        %873 = vmatpush.bf16.msra.mxu0 %v852
        %874 = vmatpush.bf16.msra.mxu0 %v850
        %875 = vmatpush.bf16.msra.mxu0 %v848
        %876 = vmatpush.bf16.msra.mxu0 %v846
        %877 = vmatpush.bf16.msra.mxu0 %v844
        %878 = vmatpush.bf16.msra.mxu0 %v842
        %879 = vmatpush.bf16.msra.mxu0 %v840
        %880 = vmatmul.bf16.gmra.mxu0 %v786
        %v881 = vpop.f32.mrf.mxu0
        %v882 = vadd.f32 %v788, %v881
        %v883 = vpop.f32.mrf.mxu0
        %v884 = vadd.f32 %v788, %v883
        %885 = vdwg.mxu0
        %886 = vmatpush.bf16.msra.mxu0 %v855
        %887 = vmatpush.bf16.msra.mxu0 %v853
        %888 = vmatpush.bf16.msra.mxu0 %v851
        %889 = vmatpush.bf16.msra.mxu0 %v849
        %890 = vmatpush.bf16.msra.mxu0 %v847
        %891 = vmatpush.bf16.msra.mxu0 %v845
        %892 = vmatpush.bf16.msra.mxu0 %v843
        %893 = vmatpush.bf16.msra.mxu0 %v841
        %894 = vmatmul.bf16.gmra.mxu0 %v786
        %v895 = vpop.f32.mrf.mxu0
        %v896 = vadd.f32 %v789, %v895
        %v897 = vpop.f32.mrf.mxu0
        %v898 = vadd.f32 %v789, %v897
        %899 = vdwg.mxu0
        %v900 = vmul.f32 %v882, 0.5
        %v901 = vmul.f32 %v896, 0.5
        %v902 = vmul.f32 %v884, 0.5
        %v903 = vmul.f32 %v898, 0.5
        %v904 = vrcp.pop 1.4142135
        %v905 = vmul.f32 1.4142135, %v904
        %v906 = vsub.f32 1.0, %v905
        %v907 = vmul.f32 %v904, %v906
        %v908 = vadd.f32 %v904, %v907
        %vm909 = vweird.f32 %v904
        %v910 = vsel %vm909, %v904, %v908
        %v911 = vmul.f32 %v882, %v910
        %v912 = vmul.f32 %v896, %v910
        %v913 = vmul.f32 %v884, %v910
        %v914 = vmul.f32 %v898, %v910
        %v915 = vmul.f32 %v911, %v911
        %v916 = vmin.f32 16.0, %v915
        %v917 = vmul.f32 %v916, 2.1237322e-06
        %v918 = vadd.f32 %v917, 0.00028619796
        %v919 = vmul.f32 %v916, %v918
        %v920 = vadd.f32 %v919, 0.0036580483
        %v921 = vmul.f32 %v916, %v920
        %v922 = vadd.f32 %v921, 0.05243302
        %v923 = vmul.f32 %v916, %v922
        %v924 = vadd.f32 %v923, 0.18741608
        %v925 = vmul.f32 %v916, %v924
        %v926 = vadd.f32 %v925, 1.1283791
        %v927 = vmul.f32 %v911, %v926
        %v928 = vmul.f32 %v916, 3.8918573e-05
        %v929 = vadd.f32 %v928, 0.001143296
        %v930 = vmul.f32 %v916, %v929
        %v931 = vadd.f32 %v930, 0.014752088
        %v932 = vmul.f32 %v916, %v931
        %v933 = vadd.f32 %v932, 0.112945676
        %v934 = vmul.f32 %v916, %v933
        %v935 = vadd.f32 %v934, 0.4994258
        %v936 = vmul.f32 %v916, %v935
        %v937 = vadd.f32 %v936, 1.0
        %v938 = vrcp.pop %v937
        %v939 = vmul.f32 %v937, %v938
        %v940 = vsub.f32 1.0, %v939
        %v941 = vmul.f32 %v938, %v940
        %v942 = vadd.f32 %v938, %v941
        %vm943 = vweird.f32 %v937
        %vm944 = vweird.f32 %v938
        %vm945 = vmor %vm943, %vm944
        %v946 = vsel %vm945, %v938, %v942
        %v947 = vand.u32 2147483647, %v937
        %vm948 = vcmp.eq.f32.partialorder %v947, 8.507059e+37
        %v949 = vand.u32 %v937, 2147483648
        %v950 = vor.u32 1.1754944e-38, %v949
        %v951 = vsel %vm948, %v950, %v946
        %v952 = vmul.f32 %v927, %v951
        %v953 = vmin.f32 %v952, 1.0
        %v954 = vmax.f32 %v953, -1.0
        %v955 = vmul.f32 %v912, %v912
        %v956 = vmin.f32 16.0, %v955
        %v957 = vmul.f32 %v956, 2.1237322e-06
        %v958 = vadd.f32 %v957, 0.00028619796
        %v959 = vmul.f32 %v956, %v958
        %v960 = vadd.f32 %v959, 0.0036580483
        %v961 = vmul.f32 %v956, %v960
        %v962 = vadd.f32 %v961, 0.05243302
        %v963 = vmul.f32 %v956, %v962
        %v964 = vadd.f32 %v963, 0.18741608
        %v965 = vmul.f32 %v956, %v964
        %v966 = vadd.f32 %v965, 1.1283791
        %v967 = vmul.f32 %v912, %v966
        %v968 = vmul.f32 %v956, 3.8918573e-05
        %v969 = vadd.f32 %v968, 0.001143296
        %v970 = vmul.f32 %v956, %v969
        %v971 = vadd.f32 %v970, 0.014752088
        %v972 = vmul.f32 %v956, %v971
        %v973 = vadd.f32 %v972, 0.112945676
        %v974 = vmul.f32 %v956, %v973
        %v975 = vadd.f32 %v974, 0.4994258
        %v976 = vmul.f32 %v956, %v975
        %v977 = vadd.f32 %v976, 1.0
        %v978 = vrcp.pop %v977
        %v979 = vmul.f32 %v977, %v978
        %v980 = vsub.f32 1.0, %v979
        %v981 = vmul.f32 %v978, %v980
        %v982 = vadd.f32 %v978, %v981
        %vm983 = vweird.f32 %v977
        %vm984 = vweird.f32 %v978
        %vm985 = vmor %vm983, %vm984
        %v986 = vsel %vm985, %v978, %v982
        %v987 = vand.u32 2147483647, %v977
        %vm988 = vcmp.eq.f32.partialorder %v987, 8.507059e+37
        %v989 = vand.u32 %v977, 2147483648
        %v990 = vor.u32 1.1754944e-38, %v989
        %v991 = vsel %vm988, %v990, %v986
        %v992 = vmul.f32 %v967, %v991
        %v993 = vmin.f32 %v992, 1.0
        %v994 = vmax.f32 %v993, -1.0
        %v995 = vmul.f32 %v913, %v913
        %v996 = vmin.f32 16.0, %v995
        %v997 = vmul.f32 %v996, 2.1237322e-06
        %v998 = vadd.f32 %v997, 0.00028619796
        %v999 = vmul.f32 %v996, %v998
        %v1000 = vadd.f32 %v999, 0.0036580483
        %v1001 = vmul.f32 %v996, %v1000
        %v1002 = vadd.f32 %v1001, 0.05243302
        %v1003 = vmul.f32 %v996, %v1002
        %v1004 = vadd.f32 %v1003, 0.18741608
        %v1005 = vmul.f32 %v996, %v1004
        %v1006 = vadd.f32 %v1005, 1.1283791
        %v1007 = vmul.f32 %v913, %v1006
        %v1008 = vmul.f32 %v996, 3.8918573e-05
        %v1009 = vadd.f32 %v1008, 0.001143296
        %v1010 = vmul.f32 %v996, %v1009
        %v1011 = vadd.f32 %v1010, 0.014752088
        %v1012 = vmul.f32 %v996, %v1011
        %v1013 = vadd.f32 %v1012, 0.112945676
        %v1014 = vmul.f32 %v996, %v1013
        %v1015 = vadd.f32 %v1014, 0.4994258
        %v1016 = vmul.f32 %v996, %v1015
        %v1017 = vadd.f32 %v1016, 1.0
        %v1018 = vrcp.pop %v1017
        %v1019 = vmul.f32 %v1017, %v1018
        %v1020 = vsub.f32 1.0, %v1019
        %v1021 = vmul.f32 %v1018, %v1020
        %v1022 = vadd.f32 %v1018, %v1021
        %vm1023 = vweird.f32 %v1017
        %vm1024 = vweird.f32 %v1018
        %vm1025 = vmor %vm1023, %vm1024
        %v1026 = vsel %vm1025, %v1018, %v1022
        %v1027 = vand.u32 2147483647, %v1017
        %vm1028 = vcmp.eq.f32.partialorder %v1027, 8.507059e+37
        %v1029 = vand.u32 %v1017, 2147483648
        %v1030 = vor.u32 1.1754944e-38, %v1029
        %v1031 = vsel %vm1028, %v1030, %v1026
        %v1032 = vmul.f32 %v1007, %v1031
        %v1033 = vmin.f32 %v1032, 1.0
        %v1034 = vmax.f32 %v1033, -1.0
        %v1035 = vmul.f32 %v914, %v914
        %v1036 = vmin.f32 16.0, %v1035
        %v1037 = vmul.f32 %v1036, 2.1237322e-06
        %v1038 = vadd.f32 %v1037, 0.00028619796
        %v1039 = vmul.f32 %v1036, %v1038
        %v1040 = vadd.f32 %v1039, 0.0036580483
        %v1041 = vmul.f32 %v1036, %v1040
        %v1042 = vadd.f32 %v1041, 0.05243302
        %v1043 = vmul.f32 %v1036, %v1042
        %v1044 = vadd.f32 %v1043, 0.18741608
        %v1045 = vmul.f32 %v1036, %v1044
        %v1046 = vadd.f32 %v1045, 1.1283791
        %v1047 = vmul.f32 %v914, %v1046
        %v1048 = vmul.f32 %v1036, 3.8918573e-05
        %v1049 = vadd.f32 %v1048, 0.001143296
        %v1050 = vmul.f32 %v1036, %v1049
        %v1051 = vadd.f32 %v1050, 0.014752088
        %v1052 = vmul.f32 %v1036, %v1051
        %v1053 = vadd.f32 %v1052, 0.112945676
        %v1054 = vmul.f32 %v1036, %v1053
        %v1055 = vadd.f32 %v1054, 0.4994258
        %v1056 = vmul.f32 %v1036, %v1055
        %v1057 = vadd.f32 %v1056, 1.0
        %v1058 = vrcp.pop %v1057
        %v1059 = vmul.f32 %v1057, %v1058
        %v1060 = vsub.f32 1.0, %v1059
        %v1061 = vmul.f32 %v1058, %v1060
        %v1062 = vadd.f32 %v1058, %v1061
        %vm1063 = vweird.f32 %v1057
        %vm1064 = vweird.f32 %v1058
        %vm1065 = vmor %vm1063, %vm1064
        %v1066 = vsel %vm1065, %v1058, %v1062
        %v1067 = vand.u32 2147483647, %v1057
        %vm1068 = vcmp.eq.f32.partialorder %v1067, 8.507059e+37
        %v1069 = vand.u32 %v1057, 2147483648
        %v1070 = vor.u32 1.1754944e-38, %v1069
        %v1071 = vsel %vm1068, %v1070, %v1066
        %v1072 = vmul.f32 %v1047, %v1071
        %v1073 = vmin.f32 %v1072, 1.0
        %v1074 = vmax.f32 %v1073, -1.0
        %v1075 = vadd.f32 %v954, 1.0
        %v1076 = vadd.f32 %v994, 1.0
        %v1077 = vadd.f32 %v1034, 1.0
        %v1078 = vadd.f32 %v1074, 1.0
        %v1079 = vmul.f32 %v900, %v1075
        %v1080 = vmul.f32 %v901, %v1076
        %v1081 = vmul.f32 %v902, %v1077
        %v1082 = vmul.f32 %v903, %v1078
        %v1083 = vpack.c.bf16 %v1081, %v1079
        %v1084 = vpack.c.bf16 %v1082, %v1080
        %v1086 = vperm.slane %v465, 0
        %v1120 = vunpack.c.l.b16 %v498
        %v1121 = vunpack.c.l.b16 %v499
        %v1122 = vunpack.c.l.b16 %v500
        %v1123 = vunpack.c.l.b16 %v501
        %v1124 = vunpack.c.l.b16 %v502
        %v1125 = vunpack.c.l.b16 %v503
        %v1126 = vunpack.c.l.b16 %v504
        %v1127 = vunpack.c.l.b16 %v505
        %v1128 = vunpack.c.l.b16 %v506
        %v1129 = vunpack.c.l.b16 %v507
        %v1130 = vunpack.c.l.b16 %v508
        %v1131 = vunpack.c.l.b16 %v509
        %v1132 = vunpack.c.l.b16 %v510
        %v1133 = vunpack.c.l.b16 %v511
        %v1134 = vunpack.c.l.b16 %v512
        %v1135 = vunpack.c.l.b16 %v513
        %v1136 = vunpack.c.l.b16 %v514
        %v1137 = vunpack.c.l.b16 %v515
        %v1138 = vunpack.c.l.b16 %v516
        %v1139 = vunpack.c.l.b16 %v517
        %v1140 = vunpack.c.l.b16 %v518
        %v1141 = vunpack.c.l.b16 %v519
        %v1142 = vunpack.c.l.b16 %v520
        %v1143 = vunpack.c.l.b16 %v521
        %v1144 = vunpack.c.l.b16 %v522
        %v1145 = vunpack.c.l.b16 %v523
        %v1146 = vunpack.c.l.b16 %v524
        %v1147 = vunpack.c.l.b16 %v525
        %v1148 = vunpack.c.l.b16 %v526
        %v1149 = vunpack.c.l.b16 %v527
        %v1150 = vunpack.c.l.b16 %v528
        %v1151 = vunpack.c.l.b16 %v529
        %v1152 = vpack.c.b16 %v1121, %v1120
        %v1153 = vpack.c.b16 %v1123, %v1122
        %v1154 = vpack.c.b16 %v1125, %v1124
        %v1155 = vpack.c.b16 %v1127, %v1126
        %v1156 = vpack.c.b16 %v1129, %v1128
        %v1157 = vpack.c.b16 %v1131, %v1130
        %v1158 = vpack.c.b16 %v1133, %v1132
        %v1159 = vpack.c.b16 %v1135, %v1134
        %v1160 = vpack.c.b16 %v1137, %v1136
        %v1161 = vpack.c.b16 %v1139, %v1138
        %v1162 = vpack.c.b16 %v1141, %v1140
        %v1163 = vpack.c.b16 %v1143, %v1142
        %v1164 = vpack.c.b16 %v1145, %v1144
        %v1165 = vpack.c.b16 %v1147, %v1146
        %v1166 = vpack.c.b16 %v1149, %v1148
        %v1167 = vpack.c.b16 %v1151, %v1150
        %1184 = vmatpush.bf16.msra.mxu0 %v1159
        %1185 = vmatpush.bf16.msra.mxu0 %v1158
        %1186 = vmatpush.bf16.msra.mxu0 %v1157
        %1187 = vmatpush.bf16.msra.mxu0 %v1156
        %1188 = vmatpush.bf16.msra.mxu0 %v1155
        %1189 = vmatpush.bf16.msra.mxu0 %v1154
        %1190 = vmatpush.bf16.msra.mxu0 %v1153
        %1191 = vmatpush.bf16.msra.mxu0 %v1152
        %1192 = vmatmul.bf16.gmra.mxu0 %v1083
        %v1193 = vpop.f32.mrf.mxu0
        %v1194 = vadd.f32 %v1086, %v1193
        %v1195 = vpop.f32.mrf.mxu0
        %v1196 = vadd.f32 %v1086, %v1195
        %1197 = vdwg.mxu0
        %1198 = vmatpush.bf16.msra.mxu0 %v1167
        %1199 = vmatpush.bf16.msra.mxu0 %v1166
        %1200 = vmatpush.bf16.msra.mxu0 %v1165
        %1201 = vmatpush.bf16.msra.mxu0 %v1164
        %1202 = vmatpush.bf16.msra.mxu0 %v1163
        %1203 = vmatpush.bf16.msra.mxu0 %v1162
        %1204 = vmatpush.bf16.msra.mxu0 %v1161
        %1205 = vmatpush.bf16.msra.mxu0 %v1160
        %1206 = vmatmul.bf16.gmra.mxu0 %v1084
        %v1207 = vpop.f32.mrf.mxu0
        %v1208 = vadd.f32 %v1194, %v1207
        %v1209 = vpop.f32.mrf.mxu0
        %v1210 = vadd.f32 %v1196, %v1209
        %1211 = vdwg.mxu0
        %v1212 = vadd.f32 %v1208, %v532
        %v1213 = vadd.f32 %v1210, %v533
        %1214 = vadd.xlane.f32.xlu0 %v1212
        %v1215 = vpop.xlane.xlu0 %1214
        %1216 = vadd.xlane.f32.xlu0 %v1213
        %v1217 = vpop.xlane.xlu0 %1216
        %v1218 = vmul.f32 %v1215, %v733
        %v1219 = vmul.f32 %v1217, %v733
        %v1220 = vmul.f32 %v1212, %v1212
        %v1221 = vmul.f32 %v1213, %v1213
        %1222 = vadd.xlane.f32.xlu0 %v1220
        %v1223 = vpop.xlane.xlu0 %1222
        %1224 = vadd.xlane.f32.xlu0 %v1221
        %v1225 = vpop.xlane.xlu0 %1224
        %v1226 = vmul.f32 %v1223, %v733
        %v1227 = vmul.f32 %v1225, %v733
        %v1228 = vmul.f32 %v1218, %v1218
        %v1229 = vmul.f32 %v1219, %v1219
        %v1230 = vsub.f32 %v1226, %v1228
        %v1231 = vsub.f32 %v1227, %v1229
        %v1232 = vmax.f32 %v1230, 0.0
        %v1233 = vmax.f32 %v1231, 0.0
        %v1234 = vsub.f32 %v1212, %v1218
        %v1235 = vsub.f32 %v1213, %v1219
        %v1236 = vadd.f32 %v1232, 1e-05
        %v1237 = vadd.f32 %v1233, 1e-05
        %v1238 = vrsqrt.pop %v1236
        %v1239 = vmul.f32 %v1238, %v1236
        %v1240 = vmul.f32 %v1239, %v1238
        %v1241 = vmul.f32 0.5, %v1240
        %v1242 = vsub.f32 1.5, %v1241
        %v1243 = vmul.f32 %v1238, %v1242
        %vm1244 = vweird.f32 %v1236
        %vm1245 = vweird.f32 %v1238
        %vm1246 = vmor %vm1244, %vm1245
        %v1247 = vsel %vm1246, %v1238, %v1243
        %v1248 = vrsqrt.pop %v1237
        %v1249 = vmul.f32 %v1248, %v1237
        %v1250 = vmul.f32 %v1249, %v1248
        %v1251 = vmul.f32 0.5, %v1250
        %v1252 = vsub.f32 1.5, %v1251
        %v1253 = vmul.f32 %v1248, %v1252
        %vm1254 = vweird.f32 %v1237
        %vm1255 = vweird.f32 %v1248
        %vm1256 = vmor %vm1254, %vm1255
        %v1257 = vsel %vm1256, %v1248, %v1253
        %v1258 = vmul.f32 %v1234, %v1247
        %v1259 = vmul.f32 %v1235, %v1257
        %v1260 = vmul.f32 %v1258, %v777
        %v1261 = vmul.f32 %v1259, %v777
        %v1262 = vadd.f32 %v1260, %v782
        %v1263 = vadd.f32 %v1261, %v782
        %v1264 = vpack.c.bf16 %v1263, %v1262
        %1265 = vmatpush.bf16.msra.mxu0 %v597
        %1266 = vmatpush.bf16.msra.mxu0 %v595
        %1267 = vmatpush.bf16.msra.mxu0 %v593
        %1268 = vmatpush.bf16.msra.mxu0 %v591
        %1269 = vmatpush.bf16.msra.mxu0 %v589
        %1270 = vmatpush.bf16.msra.mxu0 %v587
        %1271 = vmatpush.bf16.msra.mxu0 %v585
        %1272 = vmatpush.bf16.msra.mxu0 %v583
        %1273 = vmatmul.bf16.gmra.mxu0 %v1264
        %v1274 = vpop.f32.mrf.mxu0
        %v1275 = vadd.f32 0.0, %v1274
        %v1276 = vpop.f32.mrf.mxu0
        %v1277 = vadd.f32 0.0, %v1276
        %1278 = vdwg.mxu0
        %1279 = vmatpush.bf16.msra.mxu0 %v598
        %1280 = vmatpush.bf16.msra.mxu0 %v596
        %1281 = vmatpush.bf16.msra.mxu0 %v594
        %1282 = vmatpush.bf16.msra.mxu0 %v592
        %1283 = vmatpush.bf16.msra.mxu0 %v590
        %1284 = vmatpush.bf16.msra.mxu0 %v588
        %1285 = vmatpush.bf16.msra.mxu0 %v586
        %1286 = vmatpush.bf16.msra.mxu0 %v584
        %1287 = vmatmul.bf16.gmra.mxu0 %v1264
        %v1288 = vpop.f32.mrf.mxu0
        %v1289 = vadd.f32 0.0, %v1288
        %v1290 = vpop.f32.mrf.mxu0
        %v1291 = vadd.f32 0.0, %v1290
        %1292 = vdwg.mxu0
        %v1293 = vpack.c.bf16 %v1275, %v1275
        %v1294 = vpack.c.bf16 %v1277, %v1277
        %v1295 = vpack.c.bf16 %v1289, %v1289
        %v1296 = vpack.c.bf16 %v1291, %v1291
        %v1298 = vsel %vm651, %v1293, 0
        %1300 = vmatpush.bf16.msra.mxu0 0
        %1301 = vmatpush.bf16.msra.mxu0 0
        %1302 = vmatpush.bf16.msra.mxu0 0
        %1303 = vmatpush.bf16.msra.mxu0 0
        %1304 = vmatpush.bf16.msra.mxu0 0
        %1305 = vmatpush.bf16.msra.mxu0 0
        %1306 = vmatpush.bf16.msra.mxu0 0
        %1307 = vmatpush.bf16.msra.mxu0 %v1298
        %1308 = vmatmul.bf16.gmra.mxu0 %v649
        %v1309 = vpop.f32.mrf.mxu0
        %v1310 = vadd.f32 0.0, %v1309
        %v1311 = vpop.f32.mrf.mxu0
        %1312 = vdwg.mxu0
        %v1314 = vsel %vm651, %v1294, 0
        %1316 = vmatpush.bf16.msra.mxu0 0
        %1317 = vmatpush.bf16.msra.mxu0 0
        %1318 = vmatpush.bf16.msra.mxu0 0
        %1319 = vmatpush.bf16.msra.mxu0 0
        %1320 = vmatpush.bf16.msra.mxu0 0
        %1321 = vmatpush.bf16.msra.mxu0 0
        %1322 = vmatpush.bf16.msra.mxu0 0
        %1323 = vmatpush.bf16.msra.mxu0 %v1314
        %1324 = vmatmul.bf16.gmra.mxu0 %v649
        %v1325 = vpop.f32.mrf.mxu0
        %v1326 = vadd.f32 0.0, %v1325
        %v1327 = vpop.f32.mrf.mxu0
        %1328 = vdwg.mxu0
        %v1330 = vsel %vm651, %v1295, 0
        %1332 = vmatpush.bf16.msra.mxu0 0
        %1333 = vmatpush.bf16.msra.mxu0 0
        %1334 = vmatpush.bf16.msra.mxu0 0
        %1335 = vmatpush.bf16.msra.mxu0 0
        %1336 = vmatpush.bf16.msra.mxu0 0
        %1337 = vmatpush.bf16.msra.mxu0 0
        %1338 = vmatpush.bf16.msra.mxu0 0
        %1339 = vmatpush.bf16.msra.mxu0 %v1330
        %1340 = vmatmul.bf16.gmra.mxu0 %v685
        %v1341 = vpop.f32.mrf.mxu0
        %v1342 = vadd.f32 0.0, %v1341
        %v1343 = vpop.f32.mrf.mxu0
        %1344 = vdwg.mxu0
        %v1346 = vsel %vm651, %v1296, 0
        %1348 = vmatpush.bf16.msra.mxu0 0
        %1349 = vmatpush.bf16.msra.mxu0 0
        %1350 = vmatpush.bf16.msra.mxu0 0
        %1351 = vmatpush.bf16.msra.mxu0 0
        %1352 = vmatpush.bf16.msra.mxu0 0
        %1353 = vmatpush.bf16.msra.mxu0 0
        %1354 = vmatpush.bf16.msra.mxu0 0
        %1355 = vmatpush.bf16.msra.mxu0 %v1346
        %1356 = vmatmul.bf16.gmra.mxu0 %v685
        %v1357 = vpop.f32.mrf.mxu0
        %v1358 = vadd.f32 0.0, %v1357
        %v1359 = vpop.f32.mrf.mxu0
        %1360 = vdwg.mxu0
        %v1361 = vsub.f32 %v1310, %v1342
        %v1362 = vsub.f32 %v1326, %v1358
        %v1363 = vadd.f32 %v1361, %v1262
        %v1364 = vadd.f32 %v1362, %v1263
        %1365 = vadd.xlane.f32.xlu0 %v1363
        %v1366 = vpop.xlane.xlu0 %1365
        %1367 = vadd.xlane.f32.xlu0 %v1364
        %v1368 = vpop.xlane.xlu0 %1367
        %v1369 = vmul.f32 %v1366, %v733
        %v1370 = vmul.f32 %v1368, %v733
        %v1371 = vmul.f32 %v1363, %v1363
        %v1372 = vmul.f32 %v1364, %v1364
        %1373 = vadd.xlane.f32.xlu0 %v1371
        %v1374 = vpop.xlane.xlu0 %1373
        %1375 = vadd.xlane.f32.xlu0 %v1372
        %v1376 = vpop.xlane.xlu0 %1375
        %v1377 = vmul.f32 %v1374, %v733
        %v1378 = vmul.f32 %v1376, %v733
        %v1379 = vmul.f32 %v1369, %v1369
        %v1380 = vmul.f32 %v1370, %v1370
        %v1381 = vsub.f32 %v1377, %v1379
        %v1382 = vsub.f32 %v1378, %v1380
        %v1383 = vmax.f32 %v1381, 0.0
        %v1384 = vmax.f32 %v1382, 0.0
        %v1385 = vsub.f32 %v1363, %v1369
        %v1386 = vsub.f32 %v1364, %v1370
        %v1387 = vadd.f32 %v1383, 1e-05
        %v1388 = vadd.f32 %v1384, 1e-05
        %v1389 = vrsqrt.pop %v1387
        %v1390 = vmul.f32 %v1389, %v1387
        %v1391 = vmul.f32 %v1390, %v1389
        %v1392 = vmul.f32 0.5, %v1391
        %v1393 = vsub.f32 1.5, %v1392
        %v1394 = vmul.f32 %v1389, %v1393
        %vm1395 = vweird.f32 %v1387
        %vm1396 = vweird.f32 %v1389
        %vm1397 = vmor %vm1395, %vm1396
        %v1398 = vsel %vm1397, %v1389, %v1394
        %v1399 = vrsqrt.pop %v1388
        %v1400 = vmul.f32 %v1399, %v1388
        %v1401 = vmul.f32 %v1400, %v1399
        %v1402 = vmul.f32 0.5, %v1401
        %v1403 = vsub.f32 1.5, %v1402
        %v1404 = vmul.f32 %v1399, %v1403
        %vm1405 = vweird.f32 %v1388
        %vm1406 = vweird.f32 %v1399
        %vm1407 = vmor %vm1405, %vm1406
        %v1408 = vsel %vm1407, %v1399, %v1404
        %v1409 = vmul.f32 %v1385, %v1398
        %v1410 = vmul.f32 %v1386, %v1408
        %v1411 = vmul.f32 %v1409, %v777
        %v1412 = vmul.f32 %v1410, %v777
        %v1413 = vadd.f32 %v1411, %v782
        %v1414 = vadd.f32 %v1412, %v782
        %v1415 = vpack.c.bf16 %v1414, %v1413
        %1416 = vmatpush.bf16.msra.mxu0 %v854
        %1417 = vmatpush.bf16.msra.mxu0 %v852
        %1418 = vmatpush.bf16.msra.mxu0 %v850
        %1419 = vmatpush.bf16.msra.mxu0 %v848
        %1420 = vmatpush.bf16.msra.mxu0 %v846
        %1421 = vmatpush.bf16.msra.mxu0 %v844
        %1422 = vmatpush.bf16.msra.mxu0 %v842
        %1423 = vmatpush.bf16.msra.mxu0 %v840
        %1424 = vmatmul.bf16.gmra.mxu0 %v1415
        %v1425 = vpop.f32.mrf.mxu0
        %v1426 = vadd.f32 %v788, %v1425
        %v1427 = vpop.f32.mrf.mxu0
        %v1428 = vadd.f32 %v788, %v1427
        %1429 = vdwg.mxu0
        %1430 = vmatpush.bf16.msra.mxu0 %v855
        %1431 = vmatpush.bf16.msra.mxu0 %v853
        %1432 = vmatpush.bf16.msra.mxu0 %v851
        %1433 = vmatpush.bf16.msra.mxu0 %v849
        %1434 = vmatpush.bf16.msra.mxu0 %v847
        %1435 = vmatpush.bf16.msra.mxu0 %v845
        %1436 = vmatpush.bf16.msra.mxu0 %v843
        %1437 = vmatpush.bf16.msra.mxu0 %v841
        %1438 = vmatmul.bf16.gmra.mxu0 %v1415
        %v1439 = vpop.f32.mrf.mxu0
        %v1440 = vadd.f32 %v789, %v1439
        %v1441 = vpop.f32.mrf.mxu0
        %v1442 = vadd.f32 %v789, %v1441
        %1443 = vdwg.mxu0
        %v1444 = vmul.f32 %v1426, 0.5
        %v1445 = vmul.f32 %v1440, 0.5
        %v1446 = vmul.f32 %v1428, 0.5
        %v1447 = vmul.f32 %v1442, 0.5
        %v1448 = vmul.f32 %v1426, %v910
        %v1449 = vmul.f32 %v1440, %v910
        %v1450 = vmul.f32 %v1428, %v910
        %v1451 = vmul.f32 %v1442, %v910
        %v1452 = vmul.f32 %v1448, %v1448
        %v1453 = vmin.f32 16.0, %v1452
        %v1454 = vmul.f32 %v1453, 2.1237322e-06
        %v1455 = vadd.f32 %v1454, 0.00028619796
        %v1456 = vmul.f32 %v1453, %v1455
        %v1457 = vadd.f32 %v1456, 0.0036580483
        %v1458 = vmul.f32 %v1453, %v1457
        %v1459 = vadd.f32 %v1458, 0.05243302
        %v1460 = vmul.f32 %v1453, %v1459
        %v1461 = vadd.f32 %v1460, 0.18741608
        %v1462 = vmul.f32 %v1453, %v1461
        %v1463 = vadd.f32 %v1462, 1.1283791
        %v1464 = vmul.f32 %v1448, %v1463
        %v1465 = vmul.f32 %v1453, 3.8918573e-05
        %v1466 = vadd.f32 %v1465, 0.001143296
        %v1467 = vmul.f32 %v1453, %v1466
        %v1468 = vadd.f32 %v1467, 0.014752088
        %v1469 = vmul.f32 %v1453, %v1468
        %v1470 = vadd.f32 %v1469, 0.112945676
        %v1471 = vmul.f32 %v1453, %v1470
        %v1472 = vadd.f32 %v1471, 0.4994258
        %v1473 = vmul.f32 %v1453, %v1472
        %v1474 = vadd.f32 %v1473, 1.0
        %v1475 = vrcp.pop %v1474
        %v1476 = vmul.f32 %v1474, %v1475
        %v1477 = vsub.f32 1.0, %v1476
        %v1478 = vmul.f32 %v1475, %v1477
        %v1479 = vadd.f32 %v1475, %v1478
        %vm1480 = vweird.f32 %v1474
        %vm1481 = vweird.f32 %v1475
        %vm1482 = vmor %vm1480, %vm1481
        %v1483 = vsel %vm1482, %v1475, %v1479
        %v1484 = vand.u32 2147483647, %v1474
        %vm1485 = vcmp.eq.f32.partialorder %v1484, 8.507059e+37
        %v1486 = vand.u32 %v1474, 2147483648
        %v1487 = vor.u32 1.1754944e-38, %v1486
        %v1488 = vsel %vm1485, %v1487, %v1483
        %v1489 = vmul.f32 %v1464, %v1488
        %v1490 = vmin.f32 %v1489, 1.0
        %v1491 = vmax.f32 %v1490, -1.0
        %v1492 = vmul.f32 %v1449, %v1449
        %v1493 = vmin.f32 16.0, %v1492
        %v1494 = vmul.f32 %v1493, 2.1237322e-06
        %v1495 = vadd.f32 %v1494, 0.00028619796
        %v1496 = vmul.f32 %v1493, %v1495
        %v1497 = vadd.f32 %v1496, 0.0036580483
        %v1498 = vmul.f32 %v1493, %v1497
        %v1499 = vadd.f32 %v1498, 0.05243302
        %v1500 = vmul.f32 %v1493, %v1499
        %v1501 = vadd.f32 %v1500, 0.18741608
        %v1502 = vmul.f32 %v1493, %v1501
        %v1503 = vadd.f32 %v1502, 1.1283791
        %v1504 = vmul.f32 %v1449, %v1503
        %v1505 = vmul.f32 %v1493, 3.8918573e-05
        %v1506 = vadd.f32 %v1505, 0.001143296
        %v1507 = vmul.f32 %v1493, %v1506
        %v1508 = vadd.f32 %v1507, 0.014752088
        %v1509 = vmul.f32 %v1493, %v1508
        %v1510 = vadd.f32 %v1509, 0.112945676
        %v1511 = vmul.f32 %v1493, %v1510
        %v1512 = vadd.f32 %v1511, 0.4994258
        %v1513 = vmul.f32 %v1493, %v1512
        %v1514 = vadd.f32 %v1513, 1.0
        %v1515 = vrcp.pop %v1514
        %v1516 = vmul.f32 %v1514, %v1515
        %v1517 = vsub.f32 1.0, %v1516
        %v1518 = vmul.f32 %v1515, %v1517
        %v1519 = vadd.f32 %v1515, %v1518
        %vm1520 = vweird.f32 %v1514
        %vm1521 = vweird.f32 %v1515
        %vm1522 = vmor %vm1520, %vm1521
        %v1523 = vsel %vm1522, %v1515, %v1519
        %v1524 = vand.u32 2147483647, %v1514
        %vm1525 = vcmp.eq.f32.partialorder %v1524, 8.507059e+37
        %v1526 = vand.u32 %v1514, 2147483648
        %v1527 = vor.u32 1.1754944e-38, %v1526
        %v1528 = vsel %vm1525, %v1527, %v1523
        %v1529 = vmul.f32 %v1504, %v1528
        %v1530 = vmin.f32 %v1529, 1.0
        %v1531 = vmax.f32 %v1530, -1.0
        %v1532 = vmul.f32 %v1450, %v1450
        %v1533 = vmin.f32 16.0, %v1532
        %v1534 = vmul.f32 %v1533, 2.1237322e-06
        %v1535 = vadd.f32 %v1534, 0.00028619796
        %v1536 = vmul.f32 %v1533, %v1535
        %v1537 = vadd.f32 %v1536, 0.0036580483
        %v1538 = vmul.f32 %v1533, %v1537
        %v1539 = vadd.f32 %v1538, 0.05243302
        %v1540 = vmul.f32 %v1533, %v1539
        %v1541 = vadd.f32 %v1540, 0.18741608
        %v1542 = vmul.f32 %v1533, %v1541
        %v1543 = vadd.f32 %v1542, 1.1283791
        %v1544 = vmul.f32 %v1450, %v1543
        %v1545 = vmul.f32 %v1533, 3.8918573e-05
        %v1546 = vadd.f32 %v1545, 0.001143296
        %v1547 = vmul.f32 %v1533, %v1546
        %v1548 = vadd.f32 %v1547, 0.014752088
        %v1549 = vmul.f32 %v1533, %v1548
        %v1550 = vadd.f32 %v1549, 0.112945676
        %v1551 = vmul.f32 %v1533, %v1550
        %v1552 = vadd.f32 %v1551, 0.4994258
        %v1553 = vmul.f32 %v1533, %v1552
        %v1554 = vadd.f32 %v1553, 1.0
        %v1555 = vrcp.pop %v1554
        %v1556 = vmul.f32 %v1554, %v1555
        %v1557 = vsub.f32 1.0, %v1556
        %v1558 = vmul.f32 %v1555, %v1557
        %v1559 = vadd.f32 %v1555, %v1558
        %vm1560 = vweird.f32 %v1554
        %vm1561 = vweird.f32 %v1555
        %vm1562 = vmor %vm1560, %vm1561
        %v1563 = vsel %vm1562, %v1555, %v1559
        %v1564 = vand.u32 2147483647, %v1554
        %vm1565 = vcmp.eq.f32.partialorder %v1564, 8.507059e+37
        %v1566 = vand.u32 %v1554, 2147483648
        %v1567 = vor.u32 1.1754944e-38, %v1566
        %v1568 = vsel %vm1565, %v1567, %v1563
        %v1569 = vmul.f32 %v1544, %v1568
        %v1570 = vmin.f32 %v1569, 1.0
        %v1571 = vmax.f32 %v1570, -1.0
        %v1572 = vmul.f32 %v1451, %v1451
        %v1573 = vmin.f32 16.0, %v1572
        %v1574 = vmul.f32 %v1573, 2.1237322e-06
        %v1575 = vadd.f32 %v1574, 0.00028619796
        %v1576 = vmul.f32 %v1573, %v1575
        %v1577 = vadd.f32 %v1576, 0.0036580483
        %v1578 = vmul.f32 %v1573, %v1577
        %v1579 = vadd.f32 %v1578, 0.05243302
        %v1580 = vmul.f32 %v1573, %v1579
        %v1581 = vadd.f32 %v1580, 0.18741608
        %v1582 = vmul.f32 %v1573, %v1581
        %v1583 = vadd.f32 %v1582, 1.1283791
        %v1584 = vmul.f32 %v1451, %v1583
        %v1585 = vmul.f32 %v1573, 3.8918573e-05
        %v1586 = vadd.f32 %v1585, 0.001143296
        %v1587 = vmul.f32 %v1573, %v1586
        %v1588 = vadd.f32 %v1587, 0.014752088
        %v1589 = vmul.f32 %v1573, %v1588
        %v1590 = vadd.f32 %v1589, 0.112945676
        %v1591 = vmul.f32 %v1573, %v1590
        %v1592 = vadd.f32 %v1591, 0.4994258
        %v1593 = vmul.f32 %v1573, %v1592
        %v1594 = vadd.f32 %v1593, 1.0
        %v1595 = vrcp.pop %v1594
        %v1596 = vmul.f32 %v1594, %v1595
        %v1597 = vsub.f32 1.0, %v1596
        %v1598 = vmul.f32 %v1595, %v1597
        %v1599 = vadd.f32 %v1595, %v1598
        %vm1600 = vweird.f32 %v1594
        %vm1601 = vweird.f32 %v1595
        %vm1602 = vmor %vm1600, %vm1601
        %v1603 = vsel %vm1602, %v1595, %v1599
        %v1604 = vand.u32 2147483647, %v1594
        %vm1605 = vcmp.eq.f32.partialorder %v1604, 8.507059e+37
        %v1606 = vand.u32 %v1594, 2147483648
        %v1607 = vor.u32 1.1754944e-38, %v1606
        %v1608 = vsel %vm1605, %v1607, %v1603
        %v1609 = vmul.f32 %v1584, %v1608
        %v1610 = vmin.f32 %v1609, 1.0
        %v1611 = vmax.f32 %v1610, -1.0
        %v1612 = vadd.f32 %v1491, 1.0
        %v1613 = vadd.f32 %v1531, 1.0
        %v1614 = vadd.f32 %v1571, 1.0
        %v1615 = vadd.f32 %v1611, 1.0
        %v1616 = vmul.f32 %v1444, %v1612
        %v1617 = vmul.f32 %v1445, %v1613
        %v1618 = vmul.f32 %v1446, %v1614
        %v1619 = vmul.f32 %v1447, %v1615
        %v1620 = vpack.c.bf16 %v1618, %v1616
        %v1621 = vpack.c.bf16 %v1619, %v1617
        %1622 = vmatpush.bf16.msra.mxu0 %v1159
        %1623 = vmatpush.bf16.msra.mxu0 %v1158
        %1624 = vmatpush.bf16.msra.mxu0 %v1157
        %1625 = vmatpush.bf16.msra.mxu0 %v1156
        %1626 = vmatpush.bf16.msra.mxu0 %v1155
        %1627 = vmatpush.bf16.msra.mxu0 %v1154
        %1628 = vmatpush.bf16.msra.mxu0 %v1153
        %1629 = vmatpush.bf16.msra.mxu0 %v1152
        %1630 = vmatmul.bf16.gmra.mxu0 %v1620
        %v1631 = vpop.f32.mrf.mxu0
        %v1632 = vadd.f32 %v1086, %v1631
        %v1633 = vpop.f32.mrf.mxu0
        %v1634 = vadd.f32 %v1086, %v1633
        %1635 = vdwg.mxu0
        %1636 = vmatpush.bf16.msra.mxu0 %v1167
        %1637 = vmatpush.bf16.msra.mxu0 %v1166
        %1638 = vmatpush.bf16.msra.mxu0 %v1165
        %1639 = vmatpush.bf16.msra.mxu0 %v1164
        %1640 = vmatpush.bf16.msra.mxu0 %v1163
        %1641 = vmatpush.bf16.msra.mxu0 %v1162
        %1642 = vmatpush.bf16.msra.mxu0 %v1161
        %1643 = vmatpush.bf16.msra.mxu0 %v1160
        %1644 = vmatmul.bf16.gmra.mxu0 %v1621
        %v1645 = vpop.f32.mrf.mxu0
        %v1646 = vadd.f32 %v1632, %v1645
        %v1647 = vpop.f32.mrf.mxu0
        %v1648 = vadd.f32 %v1634, %v1647
        %1649 = vdwg.mxu0
        %v1650 = vadd.f32 %v1646, %v1262
        %v1651 = vadd.f32 %v1648, %v1263
        %1652 = vadd.xlane.f32.xlu0 %v1650
        %v1653 = vpop.xlane.xlu0 %1652
        %1654 = vadd.xlane.f32.xlu0 %v1651
        %v1655 = vpop.xlane.xlu0 %1654
        %v1656 = vmul.f32 %v1653, %v733
        %v1657 = vmul.f32 %v1655, %v733
        %v1658 = vmul.f32 %v1650, %v1650
        %v1659 = vmul.f32 %v1651, %v1651
        %1660 = vadd.xlane.f32.xlu0 %v1658
        %v1661 = vpop.xlane.xlu0 %1660
        %1662 = vadd.xlane.f32.xlu0 %v1659
        %v1663 = vpop.xlane.xlu0 %1662
        %v1664 = vmul.f32 %v1661, %v733
        %v1665 = vmul.f32 %v1663, %v733
        %v1666 = vmul.f32 %v1656, %v1656
        %v1667 = vmul.f32 %v1657, %v1657
        %v1668 = vsub.f32 %v1664, %v1666
        %v1669 = vsub.f32 %v1665, %v1667
        %v1670 = vmax.f32 %v1668, 0.0
        %v1671 = vmax.f32 %v1669, 0.0
        %v1672 = vsub.f32 %v1650, %v1656
        %v1673 = vsub.f32 %v1651, %v1657
        %v1674 = vadd.f32 %v1670, 1e-05
        %v1675 = vadd.f32 %v1671, 1e-05
        %v1676 = vrsqrt.pop %v1674
        %v1677 = vmul.f32 %v1676, %v1674
        %v1678 = vmul.f32 %v1677, %v1676
        %v1679 = vmul.f32 0.5, %v1678
        %v1680 = vsub.f32 1.5, %v1679
        %v1681 = vmul.f32 %v1676, %v1680
        %vm1682 = vweird.f32 %v1674
        %vm1683 = vweird.f32 %v1676
        %vm1684 = vmor %vm1682, %vm1683
        %v1685 = vsel %vm1684, %v1676, %v1681
        %v1686 = vrsqrt.pop %v1675
        %v1687 = vmul.f32 %v1686, %v1675
        %v1688 = vmul.f32 %v1687, %v1686
        %v1689 = vmul.f32 0.5, %v1688
        %v1690 = vsub.f32 1.5, %v1689
        %v1691 = vmul.f32 %v1686, %v1690
        %vm1692 = vweird.f32 %v1675
        %vm1693 = vweird.f32 %v1686
        %vm1694 = vmor %vm1692, %vm1693
        %v1695 = vsel %vm1694, %v1686, %v1691
        %v1696 = vmul.f32 %v1672, %v1685
        %v1697 = vmul.f32 %v1673, %v1695
        %v1698 = vmul.f32 %v1696, %v777
        %v1699 = vmul.f32 %v1697, %v777
        %v1700 = vadd.f32 %v1698, %v782
        %v1701 = vadd.f32 %v1699, %v782
        %1702 = vst [vmem:[%s458] sm:$0xff] %v1700
        %1703 = vst [vmem:[%s458 + $0x8] sm:$0xff] %v1701
        %s1704 = sand.u32 %s253, 1
        %s1705 = scalar_lea.sflag [#allocation4], %s1704
        %s1706 = sand.u32 %s253, 1
        %s1707 = smul.addr %s1706, 16
        %s1708 = scalar_lea.vmem [#allocation13], %s1707
        // Predicated region
        $region85: #{tpu_custom_call.1} parent=59 // pred_check
          %p1709 = pneg %p263
        $region86: #{tpu_custom_call.1} parent=59 // pred_check_branch
          %1711 = sbr.rel (%p1709) target = $region88
        $region87: #{tpu_custom_call.1} parent=59 // pred_region
          %s1712 = smul.u32 2, %s30
          %1714 = vsyncadd %s1705, 0
          %s1715 = smul.addr %s1712, 8
          %s1716 = scalar_lea.hbm %s10, %s1715
          %s1717 = sshll.u32 %s1708, 4
          %s1718 = int_to_ptr.vmem [resolvable:$true] %s1717
          %s1719 = sshll.u32 %s1716, 4
          %s1720 = int_to_ptr.hbm [resolvable:$true] %s1719
          %1725 = dma.vmem_to_hbm [thread:$0]  %s1718, 256, %s1720, %s1705, 128, 128, 8
        $region88: #{tpu_custom_call.1} parent=59 // pred_fallthru
          _
      $region60: #{tpu_custom_call.1} parent=5 // pred_fallthru
        _
      %p1726 = scmp.le.s32.totalorder 2, %s25
      // Predicated region
      $region89: #{tpu_custom_call.1} parent=5 // pred_check
        %p1727 = pneg %p1726
      $region90: #{tpu_custom_call.1} parent=5 // pred_check_branch
        %1729 = sbr.rel (%p1727) target = $region92
      $region91: #{tpu_custom_call.1} parent=5 // pred_region
        %s1730 = ssub.s32 %s25, 2
        // Predicated region
        $region93: #{tpu_custom_call.1} parent=91 // pred_check
          %p1731 = pneg %p269
        $region94: #{tpu_custom_call.1} parent=91 // pred_check_branch
          %1733 = sbr.rel (%p1731) target = $region96
        $region95: #{tpu_custom_call.1} parent=91 // pred_region
          %s1734 = sand.u32 %s254, 1
          %s1735 = scalar_lea.sflag [#allocation4], %s1734
          %s1736 = sand.u32 %s254, 1
          %s1737 = smul.addr %s1736, 16
          %s1738 = scalar_lea.vmem [#allocation13], %s1737
          %1740 = dma.done %s1735, 256
        $region96: #{tpu_custom_call.1} parent=91 // pred_fallthru
          _
      $region92: #{tpu_custom_call.1} parent=5 // pred_fallthru
        _
    $region6: #{tpu_custom_call.1} parent=1 // loop_footer
      %s29 = sadd.s32 1, %s25
    $region7: #{tpu_custom_call.1} parent=1 // loop_footer_branch
      %24 = sbr.rel target = $region3
    $region8: #{tpu_custom_call.1} parent=1 // loop_exit
      _
    %1741 = vsyncpa [#allocation3], 1
    %s1742 = scalar_lea.sflag [#allocation3], 1
    %1743 = vsyncpa %s1742, 1
    %1744 = vsyncpa [#allocation6], 1
    %1745 = vsyncpa [#allocation9], 1
    %1746 = vsyncpa [#allocation12], 1
    %1747 = vsyncpa [#allocation4], 1
    %s1748 = scalar_lea.sflag [#allocation4], 1
    %1749 = vsyncpa %s1748, 1

</llo_original>
